<compile_context>
chip_gen: v7x
topology: tpu7x:2x2x1
jax: 0.10.0
libtpu: 0.0.40
codegen_flags: <defaults>
</compile_context>

<pallas_src>
import functools

import numpy as np
import jax
import jax.numpy as jnp
from jax.experimental import pallas as pl
from jax.experimental.pallas import tpu as pltpu

PAD = 2            # fixed border width: covers pad=1/dil=1 and pad=2/dil=2
EPS = 1e-5         # InstanceNorm2d default eps
NEG_SLOPE = 0.4    # LeakyReLU negative slope

# (dilation, apply_instance_norm, apply_leaky_relu) per conv layer.
LAYER_CFG = (
    (1, True,  True),
    (2, False, True),
    (2, False, True),
    (1, True,  True),
    (2, False, True),
    (2, False, True),
    (1, True,  True),
    (1, False, False),
)


def _round_up(x, m):
    return -(-x // m) * m


def _downnet_kernel(*refs, H, W, Wp, layer_cfg):
    """Whole-network forward for one batch element.

    refs = (x_ref, mask_ref, w0, b0, ..., w7, b7, o_ref)
      x_ref:    (1, C0p, S)  zero-padded input; S = Hp*Wp (flattened padded)
      mask_ref: (1, S)       1.0 on the valid HxW interior, 0.0 on the border
      w_l:      (Coutp, 9*Cinp)  im2col-flattened weights (tap-major)
      b_l:      (Coutp, 1)       bias (unused for norm layers)
      o_ref:    (1, 1, S)    final conv output, still in padded space
    """
    x_ref, mask_ref, o_ref = refs[0], refs[1], refs[-1]
    wb = refs[2:-1]
    S = x_ref.shape[-1]

    mask = mask_ref[...]                    # (1, S)
    inv_hw = 1.0 / float(H * W)

    h = x_ref[0]                            # (C, S); border columns/rows are 0

    for li, (dil, do_norm, do_act) in enumerate(layer_cfg):
        w_ref, b_ref = wb[2 * li], wb[2 * li + 1]

        # 3x3 (optionally dilated) conv as ONE im2col matmul.  The 9 shifted
        # taps are lane rotations of the flattened zero-padded spatial axis;
        # the zero border guarantees correct "same" padding for the interior.
        taps = []
        for ky in (-1, 0, 1):
            for kx in (-1, 0, 1):
                off = (ky * Wp + kx) * dil
                taps.append(h if off == 0
                            else pltpu.roll(h, shift=(-off) % S, axis=1))
        patches = jnp.concatenate(taps, axis=0)                  # (9*C, S)
        acc = jnp.dot(w_ref[...], patches,
                      preferred_element_type=jnp.float32)        # (Cout, S)

        if do_norm:
            # InstanceNorm2d(affine=False): conv bias is exactly cancelled by
            # the mean subtraction -> skipped.  Stats over the HxW interior.
            y = acc * mask
            mean = jnp.sum(y, axis=1, keepdims=True) * inv_hw
            cen = (y - mean) * mask
            var = jnp.sum(cen * cen, axis=1, keepdims=True) * inv_hw
            y = cen * jax.lax.rsqrt(var + EPS)
        else:
            y = (acc + b_ref[...]) * mask    # re-zero border for next conv
        if do_act:
            y = jnp.where(y > 0.0, y, NEG_SLOPE * y)
        h = y

    o_ref[0] = h[0:1, :]     # real output channel 0 (Cout was padded to 8)


def downnet_forward(x_nchw, params):
    """Fused DownNet forward.  x_nchw: (N, Cin, H, W) -> (N, 1, H, W)."""
    N, Cin, H, W = x_nchw.shape
    Hp = H + 2 * PAD
    Wp = W + 2 * PAD
    # Grow Wp (extra zero columns, harmless) until the flattened padded
    # spatial size is a multiple of 128: clean lane rotations, dense stores.
    while (Hp * Wp) % 128:
        Wp += 1
    S = Hp * Wp

    # One-time zero pad of the (tiny) network input: channel-pad to a sublane
    # multiple and embed the HxW image at spatial offset (PAD, PAD).
    c0p = _round_up(Cin, 8)
    xp = jnp.zeros((N, c0p, Hp, Wp), jnp.float32)
    xp = xp.at[:, :Cin, PAD:PAD + H, PAD:PAD + W].set(
        x_nchw.astype(jnp.float32))
    xp = xp.reshape(N, c0p, S)

    # Interior mask (host-built constant).
    m = np.zeros((Hp, Wp), np.float32)
    m[PAD:PAD + H, PAD:PAD + W] = 1.0
    mask = jnp.asarray(m.reshape(1, S))

    # Pre-flatten weights to dense 2D (Cout_pad, 9*Cin_pad), tap-major then
    # input-channel; biases padded to (Cout_pad, 1).
    flat = []
    prev_cout_p = c0p
    for (w, b) in params:               # w: (3, 3, cin, cout) HWIO
        cin, cout = w.shape[2], w.shape[3]
        cin_p, cout_p = prev_cout_p, _round_up(cout, 8)
        wf = jnp.pad(w.astype(jnp.float32),
                     ((0, 0), (0, 0), (0, cin_p - cin), (0, cout_p - cout)))
        wf = jnp.transpose(wf.reshape(9, cin_p, cout_p),
                           (2, 0, 1)).reshape(cout_p, 9 * cin_p)
        bf = jnp.pad(b.astype(jnp.float32),
                     (0, cout_p - cout)).reshape(cout_p, 1)
        flat += [wf, bf]
        prev_cout_p = cout_p

    kernel = functools.partial(_downnet_kernel, H=H, W=W, Wp=Wp,
                               layer_cfg=LAYER_CFG)

    in_specs = [pl.BlockSpec((1, c0p, S), lambda n: (n, 0, 0)),
                pl.BlockSpec((1, S), lambda n: (0, 0))]
    in_specs += [pl.BlockSpec(a.shape, lambda n: (0, 0)) for a in flat]

    out = pl.pallas_call(
        kernel,
        out_shape=jax.ShapeDtypeStruct((N, 1, S), jnp.float32),
        grid=(N,),
        in_specs=in_specs,
        out_specs=pl.BlockSpec((1, 1, S), lambda n: (n, 0, 0)),
        compiler_params=pltpu.CompilerParams(
            dimension_semantics=("parallel",)),
    )(xp, mask, *flat)

    # Extract the valid HxW interior from the padded output space.
    out = out.reshape(N, 1, Hp, Wp)[:, :, PAD:PAD + H, PAD:PAD + W]
    return out


def init_downnet_params(key, n_feats, in_channel):
    """Deterministic synthetic parameters; HWIO layout (3, 3, cin, cout)."""
    chans = ([(in_channel, n_feats)] + [(n_feats, n_feats)] * 6
             + [(n_feats, 1)])
    params = []
    for (cin, cout) in chans:
        key, kw, kb = jax.random.split(key, 3)
        bound = 1.0 / float(np.sqrt(cin * 9))
        w = jax.random.uniform(kw, (3, 3, cin, cout), jnp.float32,
                               -bound, bound)
        b = jax.random.uniform(kb, (cout,), jnp.float32, -bound, bound)
        params.append((w, b))
    return params


def downnet_forward_ref(x_nchw, params):
    """Pure-JAX reference (correctness check only)."""
    x = jnp.transpose(x_nchw, (0, 2, 3, 1)).astype(jnp.float32)   # NHWC
    for (w, b), (dil, do_norm, do_act) in zip(params, LAYER_CFG):
        y = jax.lax.conv_general_dilated(
            x, w, window_strides=(1, 1),
            padding=[(dil, dil), (dil, dil)], rhs_dilation=(dil, dil),
            dimension_numbers=("NHWC", "HWIO", "NHWC"),
            precision=jax.lax.Precision.HIGHEST)
        y = y + b[None, None, None, :]
        if do_norm:
            mean = jnp.mean(y, axis=(1, 2), keepdims=True)
            var = jnp.mean((y - mean) ** 2, axis=(1, 2), keepdims=True)
            y = (y - mean) * jax.lax.rsqrt(var + EPS)
        if do_act:
            y = jnp.where(y > 0, y, NEG_SLOPE * y)
        x = y
    return jnp.transpose(x, (0, 3, 1, 2))                          # NCHW


if __name__ == "__main__":
    N, IN_CHANNEL, N_FEATS, H, W = 2, 4, 8, 16, 16

    key = jax.random.PRNGKey(0)
    key, kx = jax.random.split(key)
    x = jax.random.normal(kx, (N, IN_CHANNEL, H, W), jnp.float32)
    params = init_downnet_params(key, N_FEATS, IN_CHANNEL)

    out = jax.block_until_ready(jax.jit(downnet_forward)(x, params))
    assert out.shape == (N, 1, H, W), out.shape

    ref = jax.block_until_ready(downnet_forward_ref(x, params))
    max_err = float(jnp.max(jnp.abs(out - ref)))
    assert jnp.allclose(out, ref, atol=2e-3, rtol=2e-3), max_err

    print("KERNEL_OK")
</pallas_src>

<mosaic_0001>
module attributes {stable_mosaic.version = 11 : i64} {
  func.func @_downnet_kernel(%arg0: i32, %arg1: memref<1x8x640xf32, #tpu.memory_space<vmem>>, %arg2: memref<1x640xf32, #tpu.memory_space<vmem>>, %arg3: memref<8x72xf32, #tpu.memory_space<vmem>>, %arg4: memref<8x1xf32, #tpu.memory_space<vmem>>, %arg5: memref<8x72xf32, #tpu.memory_space<vmem>>, %arg6: memref<8x1xf32, #tpu.memory_space<vmem>>, %arg7: memref<8x72xf32, #tpu.memory_space<vmem>>, %arg8: memref<8x1xf32, #tpu.memory_space<vmem>>, %arg9: memref<8x72xf32, #tpu.memory_space<vmem>>, %arg10: memref<8x1xf32, #tpu.memory_space<vmem>>, %arg11: memref<8x72xf32, #tpu.memory_space<vmem>>, %arg12: memref<8x1xf32, #tpu.memory_space<vmem>>, %arg13: memref<8x72xf32, #tpu.memory_space<vmem>>, %arg14: memref<8x1xf32, #tpu.memory_space<vmem>>, %arg15: memref<8x72xf32, #tpu.memory_space<vmem>>, %arg16: memref<8x1xf32, #tpu.memory_space<vmem>>, %arg17: memref<8x72xf32, #tpu.memory_space<vmem>>, %arg18: memref<8x1xf32, #tpu.memory_space<vmem>>, %arg19: memref<1x1x640xf32, #tpu.memory_space<vmem>>) attributes {dimension_semantics = [#tpu.dimension_semantics<parallel>], iteration_bounds = array<i64: 2>, scalar_prefetch = 0 : i64, scratch_operands = 0 : i64, tpu.core_type = #tpu.core_type<tc>, window_params = [{transform_indices = @transform_0, window_bounds = array<i64: 1, 8, 640>}, {pipeline_mode = #tpu.pipeline_mode<synchronous>, transform_indices = @transform_1, window_bounds = array<i64: 1, 640>}, {pipeline_mode = #tpu.pipeline_mode<synchronous>, transform_indices = @transform_2, window_bounds = array<i64: 8, 72>}, {pipeline_mode = #tpu.pipeline_mode<synchronous>, transform_indices = @transform_3, window_bounds = array<i64: 8, 1>}, {pipeline_mode = #tpu.pipeline_mode<synchronous>, transform_indices = @transform_4, window_bounds = array<i64: 8, 72>}, {pipeline_mode = #tpu.pipeline_mode<synchronous>, transform_indices = @transform_5, window_bounds = array<i64: 8, 1>}, {pipeline_mode = #tpu.pipeline_mode<synchronous>, transform_indices = @transform_6, window_bounds = array<i64: 8, 72>}, {pipeline_mode = #tpu.pipeline_mode<synchronous>, transform_indices = @transform_7, window_bounds = array<i64: 8, 1>}, {pipeline_mode = #tpu.pipeline_mode<synchronous>, transform_indices = @transform_8, window_bounds = array<i64: 8, 72>}, {pipeline_mode = #tpu.pipeline_mode<synchronous>, transform_indices = @transform_9, window_bounds = array<i64: 8, 1>}, {pipeline_mode = #tpu.pipeline_mode<synchronous>, transform_indices = @transform_10, window_bounds = array<i64: 8, 72>}, {pipeline_mode = #tpu.pipeline_mode<synchronous>, transform_indices = @transform_11, window_bounds = array<i64: 8, 1>}, {pipeline_mode = #tpu.pipeline_mode<synchronous>, transform_indices = @transform_12, window_bounds = array<i64: 8, 72>}, {pipeline_mode = #tpu.pipeline_mode<synchronous>, transform_indices = @transform_13, window_bounds = array<i64: 8, 1>}, {pipeline_mode = #tpu.pipeline_mode<synchronous>, transform_indices = @transform_14, window_bounds = array<i64: 8, 72>}, {pipeline_mode = #tpu.pipeline_mode<synchronous>, transform_indices = @transform_15, window_bounds = array<i64: 8, 1>}, {pipeline_mode = #tpu.pipeline_mode<synchronous>, transform_indices = @transform_16, window_bounds = array<i64: 8, 72>}, {pipeline_mode = #tpu.pipeline_mode<synchronous>, transform_indices = @transform_17, window_bounds = array<i64: 8, 1>}, {transform_indices = @transform_18, window_bounds = array<i64: 1, 1, 640>}]} {
    %c0 = arith.constant 0 : index
    %c0_0 = arith.constant 0 : index
    %0 = vector.load %arg2[%c0, %c0_0] : memref<1x640xf32, #tpu.memory_space<vmem>>, vector<1x640xf32>
    %c0_1 = arith.constant 0 : index
    %c0_2 = arith.constant 0 : index
    %c0_3 = arith.constant 0 : index
    %1 = vector.load %arg1[%c0_1, %c0_2, %c0_3] : memref<1x8x640xf32, #tpu.memory_space<vmem>>, vector<1x8x640xf32>
    %2 = vector.shape_cast %1 : vector<1x8x640xf32> to vector<8x640xf32>
    %c33_i32 = arith.constant 33 : i32
    %3 = tpu.dynamic_rotate %2 by %c33_i32 dim 1 : vector<8x640xf32>, i32 -> vector<8x640xf32>
    %c32_i32 = arith.constant 32 : i32
    %4 = tpu.dynamic_rotate %2 by %c32_i32 dim 1 : vector<8x640xf32>, i32 -> vector<8x640xf32>
    %c31_i32 = arith.constant 31 : i32
    %5 = tpu.dynamic_rotate %2 by %c31_i32 dim 1 : vector<8x640xf32>, i32 -> vector<8x640xf32>
    %c1_i32 = arith.constant 1 : i32
    %6 = tpu.dynamic_rotate %2 by %c1_i32 dim 1 : vector<8x640xf32>, i32 -> vector<8x640xf32>
    %c639_i32 = arith.constant 639 : i32
    %7 = tpu.dynamic_rotate %2 by %c639_i32 dim 1 : vector<8x640xf32>, i32 -> vector<8x640xf32>
    %c609_i32 = arith.constant 609 : i32
    %8 = tpu.dynamic_rotate %2 by %c609_i32 dim 1 : vector<8x640xf32>, i32 -> vector<8x640xf32>
    %c608_i32 = arith.constant 608 : i32
    %9 = tpu.dynamic_rotate %2 by %c608_i32 dim 1 : vector<8x640xf32>, i32 -> vector<8x640xf32>
    %c607_i32 = arith.constant 607 : i32
    %10 = tpu.dynamic_rotate %2 by %c607_i32 dim 1 : vector<8x640xf32>, i32 -> vector<8x640xf32>
    %11 = tpu.concatenate %3, %4, %5, %6, %2, %7, %8, %9, %10 in 0 : vector<8x640xf32>, vector<8x640xf32>, vector<8x640xf32>, vector<8x640xf32>, vector<8x640xf32>, vector<8x640xf32>, vector<8x640xf32>, vector<8x640xf32>, vector<8x640xf32> -> vector<72x640xf32>
    %c0_4 = arith.constant 0 : index
    %c0_5 = arith.constant 0 : index
    %12 = vector.load %arg3[%c0_4, %c0_5] : memref<8x72xf32, #tpu.memory_space<vmem>>, vector<8x72xf32>
    %cst = arith.constant dense<0.000000e+00> : vector<8x640xf32>
    %13 = tpu.matmul %12, %11, %cst {dimension_numbers = #tpu.dot_dimension_numbers<[1], [0], [0], [1], [0, 0, 1, 1], [], []>} : vector<8x72xf32>, vector<72x640xf32>, vector<8x640xf32> -> vector<8x640xf32>
    %14 = vector.broadcast %0 : vector<1x640xf32> to vector<8x640xf32>
    %15 = arith.mulf %13, %14 : vector<8x640xf32>
    %cst_6 = arith.constant dense<0.000000e+00> : vector<8xf32>
    %16 = vector.multi_reduction <add>, %15, %cst_6 [1] : vector<8x640xf32> to vector<8xf32>
    %17 = vector.shape_cast %16 : vector<8xf32> to vector<8x1xf32>
    %cst_7 = arith.constant 3.906250e-03 : f32
    %18 = vector.broadcast %cst_7 : f32 to vector<8x1xf32>
    %19 = arith.mulf %17, %18 : vector<8x1xf32>
    %20 = vector.broadcast %19 : vector<8x1xf32> to vector<8x640xf32>
    %21 = arith.subf %15, %20 : vector<8x640xf32>
    %22 = vector.broadcast %0 : vector<1x640xf32> to vector<8x640xf32>
    %23 = arith.mulf %21, %22 : vector<8x640xf32>
    %24 = arith.mulf %23, %23 : vector<8x640xf32>
    %cst_8 = arith.constant dense<0.000000e+00> : vector<8xf32>
    %25 = vector.multi_reduction <add>, %24, %cst_8 [1] : vector<8x640xf32> to vector<8xf32>
    %26 = vector.shape_cast %25 : vector<8xf32> to vector<8x1xf32>
    %cst_9 = arith.constant 3.906250e-03 : f32
    %27 = vector.broadcast %cst_9 : f32 to vector<8x1xf32>
    %28 = arith.mulf %26, %27 : vector<8x1xf32>
    %cst_10 = arith.constant 9.99999974E-6 : f32
    %29 = vector.broadcast %cst_10 : f32 to vector<8x1xf32>
    %30 = arith.addf %28, %29 : vector<8x1xf32>
    %31 = math.rsqrt %30 : vector<8x1xf32>
    %32 = vector.broadcast %31 : vector<8x1xf32> to vector<8x640xf32>
    %33 = arith.mulf %23, %32 : vector<8x640xf32>
    %cst_11 = arith.constant 0.000000e+00 : f32
    %34 = vector.broadcast %cst_11 : f32 to vector<8x640xf32>
    %35 = arith.cmpf ogt, %33, %34 : vector<8x640xf32>
    %cst_12 = arith.constant 4.000000e-01 : f32
    %36 = vector.broadcast %cst_12 : f32 to vector<8x640xf32>
    %37 = arith.mulf %36, %33 : vector<8x640xf32>
    %38 = arith.select %35, %33, %37 : vector<8x640xi1>, vector<8x640xf32>
    %c66_i32 = arith.constant 66 : i32
    %39 = tpu.dynamic_rotate %38 by %c66_i32 dim 1 : vector<8x640xf32>, i32 -> vector<8x640xf32>
    %c64_i32 = arith.constant 64 : i32
    %40 = tpu.dynamic_rotate %38 by %c64_i32 dim 1 : vector<8x640xf32>, i32 -> vector<8x640xf32>
    %c62_i32 = arith.constant 62 : i32
    %41 = tpu.dynamic_rotate %38 by %c62_i32 dim 1 : vector<8x640xf32>, i32 -> vector<8x640xf32>
    %c2_i32 = arith.constant 2 : i32
    %42 = tpu.dynamic_rotate %38 by %c2_i32 dim 1 : vector<8x640xf32>, i32 -> vector<8x640xf32>
    %c638_i32 = arith.constant 638 : i32
    %43 = tpu.dynamic_rotate %38 by %c638_i32 dim 1 : vector<8x640xf32>, i32 -> vector<8x640xf32>
    %c578_i32 = arith.constant 578 : i32
    %44 = tpu.dynamic_rotate %38 by %c578_i32 dim 1 : vector<8x640xf32>, i32 -> vector<8x640xf32>
    %c576_i32 = arith.constant 576 : i32
    %45 = tpu.dynamic_rotate %38 by %c576_i32 dim 1 : vector<8x640xf32>, i32 -> vector<8x640xf32>
    %c574_i32 = arith.constant 574 : i32
    %46 = tpu.dynamic_rotate %38 by %c574_i32 dim 1 : vector<8x640xf32>, i32 -> vector<8x640xf32>
    %47 = tpu.concatenate %39, %40, %41, %42, %38, %43, %44, %45, %46 in 0 : vector<8x640xf32>, vector<8x640xf32>, vector<8x640xf32>, vector<8x640xf32>, vector<8x640xf32>, vector<8x640xf32>, vector<8x640xf32>, vector<8x640xf32>, vector<8x640xf32> -> vector<72x640xf32>
    %c0_13 = arith.constant 0 : index
    %c0_14 = arith.constant 0 : index
    %48 = vector.load %arg5[%c0_13, %c0_14] : memref<8x72xf32, #tpu.memory_space<vmem>>, vector<8x72xf32>
    %cst_15 = arith.constant dense<0.000000e+00> : vector<8x640xf32>
    %49 = tpu.matmul %48, %47, %cst_15 {dimension_numbers = #tpu.dot_dimension_numbers<[1], [0], [0], [1], [0, 0, 1, 1], [], []>} : vector<8x72xf32>, vector<72x640xf32>, vector<8x640xf32> -> vector<8x640xf32>
    %c0_16 = arith.constant 0 : index
    %c0_17 = arith.constant 0 : index
    %50 = vector.load %arg6[%c0_16, %c0_17] : memref<8x1xf32, #tpu.memory_space<vmem>>, vector<8x1xf32>
    %51 = vector.broadcast %50 : vector<8x1xf32> to vector<8x640xf32>
    %52 = arith.addf %49, %51 : vector<8x640xf32>
    %53 = vector.broadcast %0 : vector<1x640xf32> to vector<8x640xf32>
    %54 = arith.mulf %52, %53 : vector<8x640xf32>
    %cst_18 = arith.constant 0.000000e+00 : f32
    %55 = vector.broadcast %cst_18 : f32 to vector<8x640xf32>
    %56 = arith.cmpf ogt, %54, %55 : vector<8x640xf32>
    %cst_19 = arith.constant 4.000000e-01 : f32
    %57 = vector.broadcast %cst_19 : f32 to vector<8x640xf32>
    %58 = arith.mulf %57, %54 : vector<8x640xf32>
    %59 = arith.select %56, %54, %58 : vector<8x640xi1>, vector<8x640xf32>
    %c66_i32_20 = arith.constant 66 : i32
    %60 = tpu.dynamic_rotate %59 by %c66_i32_20 dim 1 : vector<8x640xf32>, i32 -> vector<8x640xf32>
    %c64_i32_21 = arith.constant 64 : i32
    %61 = tpu.dynamic_rotate %59 by %c64_i32_21 dim 1 : vector<8x640xf32>, i32 -> vector<8x640xf32>
    %c62_i32_22 = arith.constant 62 : i32
    %62 = tpu.dynamic_rotate %59 by %c62_i32_22 dim 1 : vector<8x640xf32>, i32 -> vector<8x640xf32>
    %c2_i32_23 = arith.constant 2 : i32
    %63 = tpu.dynamic_rotate %59 by %c2_i32_23 dim 1 : vector<8x640xf32>, i32 -> vector<8x640xf32>
    %c638_i32_24 = arith.constant 638 : i32
    %64 = tpu.dynamic_rotate %59 by %c638_i32_24 dim 1 : vector<8x640xf32>, i32 -> vector<8x640xf32>
    %c578_i32_25 = arith.constant 578 : i32
    %65 = tpu.dynamic_rotate %59 by %c578_i32_25 dim 1 : vector<8x640xf32>, i32 -> vector<8x640xf32>
    %c576_i32_26 = arith.constant 576 : i32
    %66 = tpu.dynamic_rotate %59 by %c576_i32_26 dim 1 : vector<8x640xf32>, i32 -> vector<8x640xf32>
    %c574_i32_27 = arith.constant 574 : i32
    %67 = tpu.dynamic_rotate %59 by %c574_i32_27 dim 1 : vector<8x640xf32>, i32 -> vector<8x640xf32>
    %68 = tpu.concatenate %60, %61, %62, %63, %59, %64, %65, %66, %67 in 0 : vector<8x640xf32>, vector<8x640xf32>, vector<8x640xf32>, vector<8x640xf32>, vector<8x640xf32>, vector<8x640xf32>, vector<8x640xf32>, vector<8x640xf32>, vector<8x640xf32> -> vector<72x640xf32>
    %c0_28 = arith.constant 0 : index
    %c0_29 = arith.constant 0 : index
    %69 = vector.load %arg7[%c0_28, %c0_29] : memref<8x72xf32, #tpu.memory_space<vmem>>, vector<8x72xf32>
    %cst_30 = arith.constant dense<0.000000e+00> : vector<8x640xf32>
    %70 = tpu.matmul %69, %68, %cst_30 {dimension_numbers = #tpu.dot_dimension_numbers<[1], [0], [0], [1], [0, 0, 1, 1], [], []>} : vector<8x72xf32>, vector<72x640xf32>, vector<8x640xf32> -> vector<8x640xf32>
    %c0_31 = arith.constant 0 : index
    %c0_32 = arith.constant 0 : index
    %71 = vector.load %arg8[%c0_31, %c0_32] : memref<8x1xf32, #tpu.memory_space<vmem>>, vector<8x1xf32>
    %72 = vector.broadcast %71 : vector<8x1xf32> to vector<8x640xf32>
    %73 = arith.addf %70, %72 : vector<8x640xf32>
    %74 = vector.broadcast %0 : vector<1x640xf32> to vector<8x640xf32>
    %75 = arith.mulf %73, %74 : vector<8x640xf32>
    %cst_33 = arith.constant 0.000000e+00 : f32
    %76 = vector.broadcast %cst_33 : f32 to vector<8x640xf32>
    %77 = arith.cmpf ogt, %75, %76 : vector<8x640xf32>
    %cst_34 = arith.constant 4.000000e-01 : f32
    %78 = vector.broadcast %cst_34 : f32 to vector<8x640xf32>
    %79 = arith.mulf %78, %75 : vector<8x640xf32>
    %80 = arith.select %77, %75, %79 : vector<8x640xi1>, vector<8x640xf32>
    %c33_i32_35 = arith.constant 33 : i32
    %81 = tpu.dynamic_rotate %80 by %c33_i32_35 dim 1 : vector<8x640xf32>, i32 -> vector<8x640xf32>
    %c32_i32_36 = arith.constant 32 : i32
    %82 = tpu.dynamic_rotate %80 by %c32_i32_36 dim 1 : vector<8x640xf32>, i32 -> vector<8x640xf32>
    %c31_i32_37 = arith.constant 31 : i32
    %83 = tpu.dynamic_rotate %80 by %c31_i32_37 dim 1 : vector<8x640xf32>, i32 -> vector<8x640xf32>
    %c1_i32_38 = arith.constant 1 : i32
    %84 = tpu.dynamic_rotate %80 by %c1_i32_38 dim 1 : vector<8x640xf32>, i32 -> vector<8x640xf32>
    %c639_i32_39 = arith.constant 639 : i32
    %85 = tpu.dynamic_rotate %80 by %c639_i32_39 dim 1 : vector<8x640xf32>, i32 -> vector<8x640xf32>
    %c609_i32_40 = arith.constant 609 : i32
    %86 = tpu.dynamic_rotate %80 by %c609_i32_40 dim 1 : vector<8x640xf32>, i32 -> vector<8x640xf32>
    %c608_i32_41 = arith.constant 608 : i32
    %87 = tpu.dynamic_rotate %80 by %c608_i32_41 dim 1 : vector<8x640xf32>, i32 -> vector<8x640xf32>
    %c607_i32_42 = arith.constant 607 : i32
    %88 = tpu.dynamic_rotate %80 by %c607_i32_42 dim 1 : vector<8x640xf32>, i32 -> vector<8x640xf32>
    %89 = tpu.concatenate %81, %82, %83, %84, %80, %85, %86, %87, %88 in 0 : vector<8x640xf32>, vector<8x640xf32>, vector<8x640xf32>, vector<8x640xf32>, vector<8x640xf32>, vector<8x640xf32>, vector<8x640xf32>, vector<8x640xf32>, vector<8x640xf32> -> vector<72x640xf32>
    %c0_43 = arith.constant 0 : index
    %c0_44 = arith.constant 0 : index
    %90 = vector.load %arg9[%c0_43, %c0_44] : memref<8x72xf32, #tpu.memory_space<vmem>>, vector<8x72xf32>
    %cst_45 = arith.constant dense<0.000000e+00> : vector<8x640xf32>
    %91 = tpu.matmul %90, %89, %cst_45 {dimension_numbers = #tpu.dot_dimension_numbers<[1], [0], [0], [1], [0, 0, 1, 1], [], []>} : vector<8x72xf32>, vector<72x640xf32>, vector<8x640xf32> -> vector<8x640xf32>
    %92 = vector.broadcast %0 : vector<1x640xf32> to vector<8x640xf32>
    %93 = arith.mulf %91, %92 : vector<8x640xf32>
    %cst_46 = arith.constant dense<0.000000e+00> : vector<8xf32>
    %94 = vector.multi_reduction <add>, %93, %cst_46 [1] : vector<8x640xf32> to vector<8xf32>
    %95 = vector.shape_cast %94 : vector<8xf32> to vector<8x1xf32>
    %cst_47 = arith.constant 3.906250e-03 : f32
    %96 = vector.broadcast %cst_47 : f32 to vector<8x1xf32>
    %97 = arith.mulf %95, %96 : vector<8x1xf32>
    %98 = vector.broadcast %97 : vector<8x1xf32> to vector<8x640xf32>
    %99 = arith.subf %93, %98 : vector<8x640xf32>
    %100 = vector.broadcast %0 : vector<1x640xf32> to vector<8x640xf32>
    %101 = arith.mulf %99, %100 : vector<8x640xf32>
    %102 = arith.mulf %101, %101 : vector<8x640xf32>
    %cst_48 = arith.constant dense<0.000000e+00> : vector<8xf32>
    %103 = vector.multi_reduction <add>, %102, %cst_48 [1] : vector<8x640xf32> to vector<8xf32>
    %104 = vector.shape_cast %103 : vector<8xf32> to vector<8x1xf32>
    %cst_49 = arith.constant 3.906250e-03 : f32
    %105 = vector.broadcast %cst_49 : f32 to vector<8x1xf32>
    %106 = arith.mulf %104, %105 : vector<8x1xf32>
    %cst_50 = arith.constant 9.99999974E-6 : f32
    %107 = vector.broadcast %cst_50 : f32 to vector<8x1xf32>
    %108 = arith.addf %106, %107 : vector<8x1xf32>
    %109 = math.rsqrt %108 : vector<8x1xf32>
    %110 = vector.broadcast %109 : vector<8x1xf32> to vector<8x640xf32>
    %111 = arith.mulf %101, %110 : vector<8x640xf32>
    %cst_51 = arith.constant 0.000000e+00 : f32
    %112 = vector.broadcast %cst_51 : f32 to vector<8x640xf32>
    %113 = arith.cmpf ogt, %111, %112 : vector<8x640xf32>
    %cst_52 = arith.constant 4.000000e-01 : f32
    %114 = vector.broadcast %cst_52 : f32 to vector<8x640xf32>
    %115 = arith.mulf %114, %111 : vector<8x640xf32>
    %116 = arith.select %113, %111, %115 : vector<8x640xi1>, vector<8x640xf32>
    %c66_i32_53 = arith.constant 66 : i32
    %117 = tpu.dynamic_rotate %116 by %c66_i32_53 dim 1 : vector<8x640xf32>, i32 -> vector<8x640xf32>
    %c64_i32_54 = arith.constant 64 : i32
    %118 = tpu.dynamic_rotate %116 by %c64_i32_54 dim 1 : vector<8x640xf32>, i32 -> vector<8x640xf32>
    %c62_i32_55 = arith.constant 62 : i32
    %119 = tpu.dynamic_rotate %116 by %c62_i32_55 dim 1 : vector<8x640xf32>, i32 -> vector<8x640xf32>
    %c2_i32_56 = arith.constant 2 : i32
    %120 = tpu.dynamic_rotate %116 by %c2_i32_56 dim 1 : vector<8x640xf32>, i32 -> vector<8x640xf32>
    %c638_i32_57 = arith.constant 638 : i32
    %121 = tpu.dynamic_rotate %116 by %c638_i32_57 dim 1 : vector<8x640xf32>, i32 -> vector<8x640xf32>
    %c578_i32_58 = arith.constant 578 : i32
    %122 = tpu.dynamic_rotate %116 by %c578_i32_58 dim 1 : vector<8x640xf32>, i32 -> vector<8x640xf32>
    %c576_i32_59 = arith.constant 576 : i32
    %123 = tpu.dynamic_rotate %116 by %c576_i32_59 dim 1 : vector<8x640xf32>, i32 -> vector<8x640xf32>
    %c574_i32_60 = arith.constant 574 : i32
    %124 = tpu.dynamic_rotate %116 by %c574_i32_60 dim 1 : vector<8x640xf32>, i32 -> vector<8x640xf32>
    %125 = tpu.concatenate %117, %118, %119, %120, %116, %121, %122, %123, %124 in 0 : vector<8x640xf32>, vector<8x640xf32>, vector<8x640xf32>, vector<8x640xf32>, vector<8x640xf32>, vector<8x640xf32>, vector<8x640xf32>, vector<8x640xf32>, vector<8x640xf32> -> vector<72x640xf32>
    %c0_61 = arith.constant 0 : index
    %c0_62 = arith.constant 0 : index
    %126 = vector.load %arg11[%c0_61, %c0_62] : memref<8x72xf32, #tpu.memory_space<vmem>>, vector<8x72xf32>
    %cst_63 = arith.constant dense<0.000000e+00> : vector<8x640xf32>
    %127 = tpu.matmul %126, %125, %cst_63 {dimension_numbers = #tpu.dot_dimension_numbers<[1], [0], [0], [1], [0, 0, 1, 1], [], []>} : vector<8x72xf32>, vector<72x640xf32>, vector<8x640xf32> -> vector<8x640xf32>
    %c0_64 = arith.constant 0 : index
    %c0_65 = arith.constant 0 : index
    %128 = vector.load %arg12[%c0_64, %c0_65] : memref<8x1xf32, #tpu.memory_space<vmem>>, vector<8x1xf32>
    %129 = vector.broadcast %128 : vector<8x1xf32> to vector<8x640xf32>
    %130 = arith.addf %127, %129 : vector<8x640xf32>
    %131 = vector.broadcast %0 : vector<1x640xf32> to vector<8x640xf32>
    %132 = arith.mulf %130, %131 : vector<8x640xf32>
    %cst_66 = arith.constant 0.000000e+00 : f32
    %133 = vector.broadcast %cst_66 : f32 to vector<8x640xf32>
    %134 = arith.cmpf ogt, %132, %133 : vector<8x640xf32>
    %cst_67 = arith.constant 4.000000e-01 : f32
    %135 = vector.broadcast %cst_67 : f32 to vector<8x640xf32>
    %136 = arith.mulf %135, %132 : vector<8x640xf32>
    %137 = arith.select %134, %132, %136 : vector<8x640xi1>, vector<8x640xf32>
    %c66_i32_68 = arith.constant 66 : i32
    %138 = tpu.dynamic_rotate %137 by %c66_i32_68 dim 1 : vector<8x640xf32>, i32 -> vector<8x640xf32>
    %c64_i32_69 = arith.constant 64 : i32
    %139 = tpu.dynamic_rotate %137 by %c64_i32_69 dim 1 : vector<8x640xf32>, i32 -> vector<8x640xf32>
    %c62_i32_70 = arith.constant 62 : i32
    %140 = tpu.dynamic_rotate %137 by %c62_i32_70 dim 1 : vector<8x640xf32>, i32 -> vector<8x640xf32>
    %c2_i32_71 = arith.constant 2 : i32
    %141 = tpu.dynamic_rotate %137 by %c2_i32_71 dim 1 : vector<8x640xf32>, i32 -> vector<8x640xf32>
    %c638_i32_72 = arith.constant 638 : i32
    %142 = tpu.dynamic_rotate %137 by %c638_i32_72 dim 1 : vector<8x640xf32>, i32 -> vector<8x640xf32>
    %c578_i32_73 = arith.constant 578 : i32
    %143 = tpu.dynamic_rotate %137 by %c578_i32_73 dim 1 : vector<8x640xf32>, i32 -> vector<8x640xf32>
    %c576_i32_74 = arith.constant 576 : i32
    %144 = tpu.dynamic_rotate %137 by %c576_i32_74 dim 1 : vector<8x640xf32>, i32 -> vector<8x640xf32>
    %c574_i32_75 = arith.constant 574 : i32
    %145 = tpu.dynamic_rotate %137 by %c574_i32_75 dim 1 : vector<8x640xf32>, i32 -> vector<8x640xf32>
    %146 = tpu.concatenate %138, %139, %140, %141, %137, %142, %143, %144, %145 in 0 : vector<8x640xf32>, vector<8x640xf32>, vector<8x640xf32>, vector<8x640xf32>, vector<8x640xf32>, vector<8x640xf32>, vector<8x640xf32>, vector<8x640xf32>, vector<8x640xf32> -> vector<72x640xf32>
    %c0_76 = arith.constant 0 : index
    %c0_77 = arith.constant 0 : index
    %147 = vector.load %arg13[%c0_76, %c0_77] : memref<8x72xf32, #tpu.memory_space<vmem>>, vector<8x72xf32>
    %cst_78 = arith.constant dense<0.000000e+00> : vector<8x640xf32>
    %148 = tpu.matmul %147, %146, %cst_78 {dimension_numbers = #tpu.dot_dimension_numbers<[1], [0], [0], [1], [0, 0, 1, 1], [], []>} : vector<8x72xf32>, vector<72x640xf32>, vector<8x640xf32> -> vector<8x640xf32>
    %c0_79 = arith.constant 0 : index
    %c0_80 = arith.constant 0 : index
    %149 = vector.load %arg14[%c0_79, %c0_80] : memref<8x1xf32, #tpu.memory_space<vmem>>, vector<8x1xf32>
    %150 = vector.broadcast %149 : vector<8x1xf32> to vector<8x640xf32>
    %151 = arith.addf %148, %150 : vector<8x640xf32>
    %152 = vector.broadcast %0 : vector<1x640xf32> to vector<8x640xf32>
    %153 = arith.mulf %151, %152 : vector<8x640xf32>
    %cst_81 = arith.constant 0.000000e+00 : f32
    %154 = vector.broadcast %cst_81 : f32 to vector<8x640xf32>
    %155 = arith.cmpf ogt, %153, %154 : vector<8x640xf32>
    %cst_82 = arith.constant 4.000000e-01 : f32
    %156 = vector.broadcast %cst_82 : f32 to vector<8x640xf32>
    %157 = arith.mulf %156, %153 : vector<8x640xf32>
    %158 = arith.select %155, %153, %157 : vector<8x640xi1>, vector<8x640xf32>
    %c33_i32_83 = arith.constant 33 : i32
    %159 = tpu.dynamic_rotate %158 by %c33_i32_83 dim 1 : vector<8x640xf32>, i32 -> vector<8x640xf32>
    %c32_i32_84 = arith.constant 32 : i32
    %160 = tpu.dynamic_rotate %158 by %c32_i32_84 dim 1 : vector<8x640xf32>, i32 -> vector<8x640xf32>
    %c31_i32_85 = arith.constant 31 : i32
    %161 = tpu.dynamic_rotate %158 by %c31_i32_85 dim 1 : vector<8x640xf32>, i32 -> vector<8x640xf32>
    %c1_i32_86 = arith.constant 1 : i32
    %162 = tpu.dynamic_rotate %158 by %c1_i32_86 dim 1 : vector<8x640xf32>, i32 -> vector<8x640xf32>
    %c639_i32_87 = arith.constant 639 : i32
    %163 = tpu.dynamic_rotate %158 by %c639_i32_87 dim 1 : vector<8x640xf32>, i32 -> vector<8x640xf32>
    %c609_i32_88 = arith.constant 609 : i32
    %164 = tpu.dynamic_rotate %158 by %c609_i32_88 dim 1 : vector<8x640xf32>, i32 -> vector<8x640xf32>
    %c608_i32_89 = arith.constant 608 : i32
    %165 = tpu.dynamic_rotate %158 by %c608_i32_89 dim 1 : vector<8x640xf32>, i32 -> vector<8x640xf32>
    %c607_i32_90 = arith.constant 607 : i32
    %166 = tpu.dynamic_rotate %158 by %c607_i32_90 dim 1 : vector<8x640xf32>, i32 -> vector<8x640xf32>
    %167 = tpu.concatenate %159, %160, %161, %162, %158, %163, %164, %165, %166 in 0 : vector<8x640xf32>, vector<8x640xf32>, vector<8x640xf32>, vector<8x640xf32>, vector<8x640xf32>, vector<8x640xf32>, vector<8x640xf32>, vector<8x640xf32>, vector<8x640xf32> -> vector<72x640xf32>
    %c0_91 = arith.constant 0 : index
    %c0_92 = arith.constant 0 : index
    %168 = vector.load %arg15[%c0_91, %c0_92] : memref<8x72xf32, #tpu.memory_space<vmem>>, vector<8x72xf32>
    %cst_93 = arith.constant dense<0.000000e+00> : vector<8x640xf32>
    %169 = tpu.matmul %168, %167, %cst_93 {dimension_numbers = #tpu.dot_dimension_numbers<[1], [0], [0], [1], [0, 0, 1, 1], [], []>} : vector<8x72xf32>, vector<72x640xf32>, vector<8x640xf32> -> vector<8x640xf32>
    %170 = vector.broadcast %0 : vector<1x640xf32> to vector<8x640xf32>
    %171 = arith.mulf %169, %170 : vector<8x640xf32>
    %cst_94 = arith.constant dense<0.000000e+00> : vector<8xf32>
    %172 = vector.multi_reduction <add>, %171, %cst_94 [1] : vector<8x640xf32> to vector<8xf32>
    %173 = vector.shape_cast %172 : vector<8xf32> to vector<8x1xf32>
    %cst_95 = arith.constant 3.906250e-03 : f32
    %174 = vector.broadcast %cst_95 : f32 to vector<8x1xf32>
    %175 = arith.mulf %173, %174 : vector<8x1xf32>
    %176 = vector.broadcast %175 : vector<8x1xf32> to vector<8x640xf32>
    %177 = arith.subf %171, %176 : vector<8x640xf32>
    %178 = vector.broadcast %0 : vector<1x640xf32> to vector<8x640xf32>
    %179 = arith.mulf %177, %178 : vector<8x640xf32>
    %180 = arith.mulf %179, %179 : vector<8x640xf32>
    %cst_96 = arith.constant dense<0.000000e+00> : vector<8xf32>
    %181 = vector.multi_reduction <add>, %180, %cst_96 [1] : vector<8x640xf32> to vector<8xf32>
    %182 = vector.shape_cast %181 : vector<8xf32> to vector<8x1xf32>
    %cst_97 = arith.constant 3.906250e-03 : f32
    %183 = vector.broadcast %cst_97 : f32 to vector<8x1xf32>
    %184 = arith.mulf %182, %183 : vector<8x1xf32>
    %cst_98 = arith.constant 9.99999974E-6 : f32
    %185 = vector.broadcast %cst_98 : f32 to vector<8x1xf32>
    %186 = arith.addf %184, %185 : vector<8x1xf32>
    %187 = math.rsqrt %186 : vector<8x1xf32>
    %188 = vector.broadcast %187 : vector<8x1xf32> to vector<8x640xf32>
    %189 = arith.mulf %179, %188 : vector<8x640xf32>
    %cst_99 = arith.constant 0.000000e+00 : f32
    %190 = vector.broadcast %cst_99 : f32 to vector<8x640xf32>
    %191 = arith.cmpf ogt, %189, %190 : vector<8x640xf32>
    %cst_100 = arith.constant 4.000000e-01 : f32
    %192 = vector.broadcast %cst_100 : f32 to vector<8x640xf32>
    %193 = arith.mulf %192, %189 : vector<8x640xf32>
    %194 = arith.select %191, %189, %193 : vector<8x640xi1>, vector<8x640xf32>
    %c33_i32_101 = arith.constant 33 : i32
    %195 = tpu.dynamic_rotate %194 by %c33_i32_101 dim 1 : vector<8x640xf32>, i32 -> vector<8x640xf32>
    %c32_i32_102 = arith.constant 32 : i32
    %196 = tpu.dynamic_rotate %194 by %c32_i32_102 dim 1 : vector<8x640xf32>, i32 -> vector<8x640xf32>
    %c31_i32_103 = arith.constant 31 : i32
    %197 = tpu.dynamic_rotate %194 by %c31_i32_103 dim 1 : vector<8x640xf32>, i32 -> vector<8x640xf32>
    %c1_i32_104 = arith.constant 1 : i32
    %198 = tpu.dynamic_rotate %194 by %c1_i32_104 dim 1 : vector<8x640xf32>, i32 -> vector<8x640xf32>
    %c639_i32_105 = arith.constant 639 : i32
    %199 = tpu.dynamic_rotate %194 by %c639_i32_105 dim 1 : vector<8x640xf32>, i32 -> vector<8x640xf32>
    %c609_i32_106 = arith.constant 609 : i32
    %200 = tpu.dynamic_rotate %194 by %c609_i32_106 dim 1 : vector<8x640xf32>, i32 -> vector<8x640xf32>
    %c608_i32_107 = arith.constant 608 : i32
    %201 = tpu.dynamic_rotate %194 by %c608_i32_107 dim 1 : vector<8x640xf32>, i32 -> vector<8x640xf32>
    %c607_i32_108 = arith.constant 607 : i32
    %202 = tpu.dynamic_rotate %194 by %c607_i32_108 dim 1 : vector<8x640xf32>, i32 -> vector<8x640xf32>
    %203 = tpu.concatenate %195, %196, %197, %198, %194, %199, %200, %201, %202 in 0 : vector<8x640xf32>, vector<8x640xf32>, vector<8x640xf32>, vector<8x640xf32>, vector<8x640xf32>, vector<8x640xf32>, vector<8x640xf32>, vector<8x640xf32>, vector<8x640xf32> -> vector<72x640xf32>
    %c0_109 = arith.constant 0 : index
    %c0_110 = arith.constant 0 : index
    %204 = vector.load %arg17[%c0_109, %c0_110] : memref<8x72xf32, #tpu.memory_space<vmem>>, vector<8x72xf32>
    %cst_111 = arith.constant dense<0.000000e+00> : vector<8x640xf32>
    %205 = tpu.matmul %204, %203, %cst_111 {dimension_numbers = #tpu.dot_dimension_numbers<[1], [0], [0], [1], [0, 0, 1, 1], [], []>} : vector<8x72xf32>, vector<72x640xf32>, vector<8x640xf32> -> vector<8x640xf32>
    %c0_112 = arith.constant 0 : index
    %c0_113 = arith.constant 0 : index
    %206 = vector.load %arg18[%c0_112, %c0_113] : memref<8x1xf32, #tpu.memory_space<vmem>>, vector<8x1xf32>
    %207 = vector.broadcast %206 : vector<8x1xf32> to vector<8x640xf32>
    %208 = arith.addf %205, %207 : vector<8x640xf32>
    %209 = vector.broadcast %0 : vector<1x640xf32> to vector<8x640xf32>
    %210 = arith.mulf %208, %209 : vector<8x640xf32>
    %211 = vector.extract_strided_slice %210 {offsets = [0, 0], sizes = [1, 640], strides = [1, 1]} : vector<8x640xf32> to vector<1x640xf32>
    %c0_114 = arith.constant 0 : index
    %c0_115 = arith.constant 0 : index
    %c0_116 = arith.constant 0 : index
    %212 = vector.load %arg19[%c0_114, %c0_115, %c0_116] : memref<1x1x640xf32, #tpu.memory_space<vmem>>, vector<1x1x640xf32>
    %213 = vector.shape_cast %212 : vector<1x1x640xf32> to vector<1x640xf32>
    %214 = vector.shape_cast %211 : vector<1x640xf32> to vector<1x1x640xf32>
    tpu.vector_store %arg19[%c0_114, %c0_115, %c0_116], %214 {strides = array<i32>} : memref<1x1x640xf32, #tpu.memory_space<vmem>>, vector<1x1x640xf32>,
    return
  }
  func.func @transform_0(%arg0: i32) -> (i32, i32, i32) {
    %c0_i32 = arith.constant 0 : i32
    %c0_i32_0 = arith.constant 0 : i32
    %c0_i32_1 = arith.constant 0 : i32
    return %arg0, %c0_i32, %c0_i32_0 : i32, i32, i32
  }
  func.func @transform_1(%arg0: i32) -> (i32, i32) {
    %c0_i32 = arith.constant 0 : i32
    %c0_i32_0 = arith.constant 0 : i32
    %c0_i32_1 = arith.constant 0 : i32
    return %c0_i32, %c0_i32_0 : i32, i32
  }
  func.func @transform_2(%arg0: i32) -> (i32, i32) {
    %c0_i32 = arith.constant 0 : i32
    %c0_i32_0 = arith.constant 0 : i32
    %c0_i32_1 = arith.constant 0 : i32
    return %c0_i32, %c0_i32_0 : i32, i32
  }
  func.func @transform_3(%arg0: i32) -> (i32, i32) {
    %c0_i32 = arith.constant 0 : i32
    %c0_i32_0 = arith.constant 0 : i32
    %c0_i32_1 = arith.constant 0 : i32
    return %c0_i32, %c0_i32_0 : i32, i32
  }
  func.func @transform_4(%arg0: i32) -> (i32, i32) {
    %c0_i32 = arith.constant 0 : i32
    %c0_i32_0 = arith.constant 0 : i32
    %c0_i32_1 = arith.constant 0 : i32
    return %c0_i32, %c0_i32_0 : i32, i32
  }
  func.func @transform_5(%arg0: i32) -> (i32, i32) {
    %c0_i32 = arith.constant 0 : i32
    %c0_i32_0 = arith.constant 0 : i32
    %c0_i32_1 = arith.constant 0 : i32
    return %c0_i32, %c0_i32_0 : i32, i32
  }
  func.func @transform_6(%arg0: i32) -> (i32, i32) {
    %c0_i32 = arith.constant 0 : i32
    %c0_i32_0 = arith.constant 0 : i32
    %c0_i32_1 = arith.constant 0 : i32
    return %c0_i32, %c0_i32_0 : i32, i32
  }
  func.func @transform_7(%arg0: i32) -> (i32, i32) {
    %c0_i32 = arith.constant 0 : i32
    %c0_i32_0 = arith.constant 0 : i32
    %c0_i32_1 = arith.constant 0 : i32
    return %c0_i32, %c0_i32_0 : i32, i32
  }
  func.func @transform_8(%arg0: i32) -> (i32, i32) {
    %c0_i32 = arith.constant 0 : i32
    %c0_i32_0 = arith.constant 0 : i32
    %c0_i32_1 = arith.constant 0 : i32
    return %c0_i32, %c0_i32_0 : i32, i32
  }
  func.func @transform_9(%arg0: i32) -> (i32, i32) {
    %c0_i32 = arith.constant 0 : i32
    %c0_i32_0 = arith.constant 0 : i32
    %c0_i32_1 = arith.constant 0 : i32
    return %c0_i32, %c0_i32_0 : i32, i32
  }
  func.func @transform_10(%arg0: i32) -> (i32, i32) {
    %c0_i32 = arith.constant 0 : i32
    %c0_i32_0 = arith.constant 0 : i32
    %c0_i32_1 = arith.constant 0 : i32
    return %c0_i32, %c0_i32_0 : i32, i32
  }
  func.func @transform_11(%arg0: i32) -> (i32, i32) {
    %c0_i32 = arith.constant 0 : i32
    %c0_i32_0 = arith.constant 0 : i32
    %c0_i32_1 = arith.constant 0 : i32
    return %c0_i32, %c0_i32_0 : i32, i32
  }
  func.func @transform_12(%arg0: i32) -> (i32, i32) {
    %c0_i32 = arith.constant 0 : i32
    %c0_i32_0 = arith.constant 0 : i32
    %c0_i32_1 = arith.constant 0 : i32
    return %c0_i32, %c0_i32_0 : i32, i32
  }
  func.func @transform_13(%arg0: i32) -> (i32, i32) {
    %c0_i32 = arith.constant 0 : i32
    %c0_i32_0 = arith.constant 0 : i32
    %c0_i32_1 = arith.constant 0 : i32
    return %c0_i32, %c0_i32_0 : i32, i32
  }
  func.func @transform_14(%arg0: i32) -> (i32, i32) {
    %c0_i32 = arith.constant 0 : i32
    %c0_i32_0 = arith.constant 0 : i32
    %c0_i32_1 = arith.constant 0 : i32
    return %c0_i32, %c0_i32_0 : i32, i32
  }
  func.func @transform_15(%arg0: i32) -> (i32, i32) {
    %c0_i32 = arith.constant 0 : i32
    %c0_i32_0 = arith.constant 0 : i32
    %c0_i32_1 = arith.constant 0 : i32
    return %c0_i32, %c0_i32_0 : i32, i32
  }
  func.func @transform_16(%arg0: i32) -> (i32, i32) {
    %c0_i32 = arith.constant 0 : i32
    %c0_i32_0 = arith.constant 0 : i32
    %c0_i32_1 = arith.constant 0 : i32
    return %c0_i32, %c0_i32_0 : i32, i32
  }
  func.func @transform_17(%arg0: i32) -> (i32, i32) {
    %c0_i32 = arith.constant 0 : i32
    %c0_i32_0 = arith.constant 0 : i32
    %c0_i32_1 = arith.constant 0 : i32
    return %c0_i32, %c0_i32_0 : i32, i32
  }
  func.func @transform_18(%arg0: i32) -> (i32, i32, i32) {
    %c0_i32 = arith.constant 0 : i32
    %c0_i32_0 = arith.constant 0 : i32
    %c0_i32_1 = arith.constant 0 : i32
    return %arg0, %c0_i32, %c0_i32_0 : i32, i32, i32
  }
}

</mosaic_0001>

<llo_original>
// kernel: downnet_forward.1
$region0: #{downnet_forward.1}
  #allocation0 [shape = 'u32[]', space=smem, size = 0x4, offset = 0x4, fixed_abs, tag = 'smem constant byte address 0x4 - core index']
  #allocation1 [shape = 'u32[144,128]{1,0:T(1,128)}', space=vmem, size = 0x12000, scoped, tag = 'internal scratch']
  %s0 = inlined_call_operand.vmem [shape: f32[2,8,640], index: 0, kind: input, shape index: {}]
  %s1 = inlined_call_operand.vmem [shape: f32[1,640], index: 1, kind: input, shape index: {}]
  %s2 = inlined_call_operand.vmem [shape: f32[8,72], index: 2, kind: input, shape index: {}]
  %s3 = inlined_call_operand.vmem [shape: f32[8,1], index: 3, kind: input, shape index: {}]
  %s4 = inlined_call_operand.vmem [shape: f32[8,72], index: 4, kind: input, shape index: {}]
  %s5 = inlined_call_operand.vmem [shape: f32[8,1], index: 5, kind: input, shape index: {}]
  %s6 = inlined_call_operand.vmem [shape: f32[8,72], index: 6, kind: input, shape index: {}]
  %s7 = inlined_call_operand.vmem [shape: f32[8,1], index: 7, kind: input, shape index: {}]
  %s8 = inlined_call_operand.vmem [shape: f32[8,72], index: 8, kind: input, shape index: {}]
  %s9 = inlined_call_operand.vmem [shape: f32[8,1], index: 9, kind: input, shape index: {}]
  %s10 = inlined_call_operand.vmem [shape: f32[8,72], index: 10, kind: input, shape index: {}]
  %s11 = inlined_call_operand.vmem [shape: f32[8,1], index: 11, kind: input, shape index: {}]
  %s12 = inlined_call_operand.vmem [shape: f32[8,72], index: 12, kind: input, shape index: {}]
  %s13 = inlined_call_operand.vmem [shape: f32[8,1], index: 13, kind: input, shape index: {}]
  %s14 = inlined_call_operand.vmem [shape: f32[8,72], index: 14, kind: input, shape index: {}]
  %s15 = inlined_call_operand.vmem [shape: f32[8,1], index: 15, kind: input, shape index: {}]
  %s16 = inlined_call_operand.vmem [shape: f32[8,72], index: 16, kind: input, shape index: {}]
  %s17 = inlined_call_operand.vmem [shape: f32[8,1], index: 17, kind: input, shape index: {}]
  %s18 = inlined_call_operand.vmem [shape: f32[2,1,640], index: 18, kind: output, shape index: {}]
  %s19 = sld [smem:[#allocation0]]
  $region105: #{downnet_forward.1} parent=0
    _
  %s21 = ssub.s32 1, %s19
  %s22 = scalar_select 0, %s21, %s19
  loop: start=0, step=1, limit=4
  $region2: #{downnet_forward.1} parent=0 // loop_pre_header
    _
  $region3: #{downnet_forward.1} parent=0 // loop_header
    %s24 = sphi 0, %s28
    %p25 = scmp.ge.s32.totalorder %s24, 4
    %s34 = sphi 0, %s36
    %s37 = sphi 0, %s34
    %s38 = sphi 0, %s37
    %s54 = sphi 0, %s38
    %s58 = sphi 0, %s58
    %s60 = sphi 0, %s58
    %s61 = sphi 0, %s60
    %s75 = sphi 0, %s61
    %s79 = sphi 0, %s79
    %s81 = sphi 0, %s79
    %s82 = sphi 0, %s81
    %s96 = sphi 0, %s82
    %s100 = sphi 0, %s100
    %s102 = sphi 0, %s100
    %s103 = sphi 0, %s102
    %s117 = sphi 0, %s103
    %s121 = sphi 0, %s121
    %s123 = sphi 0, %s121
    %s124 = sphi 0, %s123
    %s138 = sphi 0, %s124
    %s142 = sphi 0, %s142
    %s144 = sphi 0, %s142
    %s145 = sphi 0, %s144
    %s159 = sphi 0, %s145
    %s163 = sphi 0, %s163
    %s165 = sphi 0, %s163
    %s166 = sphi 0, %s165
    %s180 = sphi 0, %s166
    %s184 = sphi 0, %s184
    %s186 = sphi 0, %s184
    %s187 = sphi 0, %s186
    %s201 = sphi 0, %s187
    %s205 = sphi 0, %s205
    %s207 = sphi 0, %s205
    %s208 = sphi 0, %s207
    %s222 = sphi 0, %s208
    %s226 = sphi 0, %s226
    %s228 = sphi 0, %s226
    %s229 = sphi 0, %s228
    %s243 = sphi 0, %s229
    %s247 = sphi 0, %s247
    %s249 = sphi 0, %s247
    %s250 = sphi 0, %s249
    %s264 = sphi 0, %s250
    %s268 = sphi 0, %s268
    %s270 = sphi 0, %s268
    %s271 = sphi 0, %s270
    %s285 = sphi 0, %s271
    %s289 = sphi 0, %s289
    %s291 = sphi 0, %s289
    %s292 = sphi 0, %s291
    %s306 = sphi 0, %s292
    %s310 = sphi 0, %s310
    %s312 = sphi 0, %s310
    %s313 = sphi 0, %s312
    %s327 = sphi 0, %s313
    %s331 = sphi 0, %s331
    %s333 = sphi 0, %s331
    %s334 = sphi 0, %s333
    %s348 = sphi 0, %s334
    %s352 = sphi 0, %s352
    %s354 = sphi 0, %s352
    %s355 = sphi 0, %s354
    %s369 = sphi 0, %s355
    %s373 = sphi 0, %s373
    %s375 = sphi 0, %s373
    %s376 = sphi 0, %s375
    %s390 = sphi 0, %s376
    %s394 = sphi 0, %s394
    %s396 = sphi 0, %s394
    %s397 = sphi 0, %s396
    %s411 = sphi 0, %s397
    %s417 = sphi 0, %s419
    %s420 = sphi 0, %s417
    %s421 = sphi 0, %s420
    %s437 = sphi 0, %s421
  $region4: #{downnet_forward.1} parent=0 // loop_header_branch
    %27 = sbr.rel (%p25) target = $region8
  $region5: #{downnet_forward.1} parent=0 // loop_body
    %s29 = ssub.s32 %s24, 1
    %s30 = ssub.s32 %s24, 2
    %s31 = sadd.s32 %s24, 1
    %s32 = ssub.s32 %s24, %s31
    %p33 = scmp.eq.s32.totalorder %s32, 0
    %s35 = sadd.s32 %s34, 1
    %s36 = scalar_select %p33, %s34, %s35
    %p39 = pneg %p33
    %p40 = scmp.eq.s32.totalorder %s24, 1
    %p41 = por %p39, %p40
    %p42 = scmp.ne.s32.totalorder %s34, %s37
    %p43 = scmp.eq.s32.totalorder %s24, 0
    %p44 = por %p42, %p43
    %p45 = scmp.ne.s32.totalorder %s34, %s37
    %p46 = scmp.eq.s32.totalorder %s29, 1
    %p47 = por %p45, %p46
    %p48 = scmp.ne.s32.totalorder %s37, %s38
    %p49 = scmp.eq.s32.totalorder %s29, 0
    %p50 = por %p48, %p49
    %p51 = scmp.ne.s32.totalorder %s37, %s38
    %p52 = scmp.eq.s32.totalorder %s30, 1
    %p53 = por %p51, %p52
    %p55 = scmp.ne.s32.totalorder %s38, %s54
    %p56 = scmp.eq.s32.totalorder %s30, 0
    %p57 = por %p55, %p56
    %s59 = sadd.s32 %s58, 1
    %p62 = scmp.eq.s32.totalorder %s24, 1
    %p63 = scmp.ne.s32.totalorder %s58, %s60
    %p64 = scmp.eq.s32.totalorder %s24, 0
    %p65 = por %p63, %p64
    %p66 = scmp.ne.s32.totalorder %s58, %s60
    %p67 = scmp.eq.s32.totalorder %s29, 1
    %p68 = por %p66, %p67
    %p69 = scmp.ne.s32.totalorder %s60, %s61
    %p70 = scmp.eq.s32.totalorder %s29, 0
    %p71 = por %p69, %p70
    %p72 = scmp.ne.s32.totalorder %s60, %s61
    %p73 = scmp.eq.s32.totalorder %s30, 1
    %p74 = por %p72, %p73
    %p76 = scmp.ne.s32.totalorder %s61, %s75
    %p77 = scmp.eq.s32.totalorder %s30, 0
    %p78 = por %p76, %p77
    %s80 = sadd.s32 %s79, 1
    %p83 = scmp.eq.s32.totalorder %s24, 1
    %p84 = scmp.ne.s32.totalorder %s79, %s81
    %p85 = scmp.eq.s32.totalorder %s24, 0
    %p86 = por %p84, %p85
    %p87 = scmp.ne.s32.totalorder %s79, %s81
    %p88 = scmp.eq.s32.totalorder %s29, 1
    %p89 = por %p87, %p88
    %p90 = scmp.ne.s32.totalorder %s81, %s82
    %p91 = scmp.eq.s32.totalorder %s29, 0
    %p92 = por %p90, %p91
    %p93 = scmp.ne.s32.totalorder %s81, %s82
    %p94 = scmp.eq.s32.totalorder %s30, 1
    %p95 = por %p93, %p94
    %p97 = scmp.ne.s32.totalorder %s82, %s96
    %p98 = scmp.eq.s32.totalorder %s30, 0
    %p99 = por %p97, %p98
    %s101 = sadd.s32 %s100, 1
    %p104 = scmp.eq.s32.totalorder %s24, 1
    %p105 = scmp.ne.s32.totalorder %s100, %s102
    %p106 = scmp.eq.s32.totalorder %s24, 0
    %p107 = por %p105, %p106
    %p108 = scmp.ne.s32.totalorder %s100, %s102
    %p109 = scmp.eq.s32.totalorder %s29, 1
    %p110 = por %p108, %p109
    %p111 = scmp.ne.s32.totalorder %s102, %s103
    %p112 = scmp.eq.s32.totalorder %s29, 0
    %p113 = por %p111, %p112
    %p114 = scmp.ne.s32.totalorder %s102, %s103
    %p115 = scmp.eq.s32.totalorder %s30, 1
    %p116 = por %p114, %p115
    %p118 = scmp.ne.s32.totalorder %s103, %s117
    %p119 = scmp.eq.s32.totalorder %s30, 0
    %p120 = por %p118, %p119
    %s122 = sadd.s32 %s121, 1
    %p125 = scmp.eq.s32.totalorder %s24, 1
    %p126 = scmp.ne.s32.totalorder %s121, %s123
    %p127 = scmp.eq.s32.totalorder %s24, 0
    %p128 = por %p126, %p127
    %p129 = scmp.ne.s32.totalorder %s121, %s123
    %p130 = scmp.eq.s32.totalorder %s29, 1
    %p131 = por %p129, %p130
    %p132 = scmp.ne.s32.totalorder %s123, %s124
    %p133 = scmp.eq.s32.totalorder %s29, 0
    %p134 = por %p132, %p133
    %p135 = scmp.ne.s32.totalorder %s123, %s124
    %p136 = scmp.eq.s32.totalorder %s30, 1
    %p137 = por %p135, %p136
    %p139 = scmp.ne.s32.totalorder %s124, %s138
    %p140 = scmp.eq.s32.totalorder %s30, 0
    %p141 = por %p139, %p140
    %s143 = sadd.s32 %s142, 1
    %p146 = scmp.eq.s32.totalorder %s24, 1
    %p147 = scmp.ne.s32.totalorder %s142, %s144
    %p148 = scmp.eq.s32.totalorder %s24, 0
    %p149 = por %p147, %p148
    %p150 = scmp.ne.s32.totalorder %s142, %s144
    %p151 = scmp.eq.s32.totalorder %s29, 1
    %p152 = por %p150, %p151
    %p153 = scmp.ne.s32.totalorder %s144, %s145
    %p154 = scmp.eq.s32.totalorder %s29, 0
    %p155 = por %p153, %p154
    %p156 = scmp.ne.s32.totalorder %s144, %s145
    %p157 = scmp.eq.s32.totalorder %s30, 1
    %p158 = por %p156, %p157
    %p160 = scmp.ne.s32.totalorder %s145, %s159
    %p161 = scmp.eq.s32.totalorder %s30, 0
    %p162 = por %p160, %p161
    %s164 = sadd.s32 %s163, 1
    %p167 = scmp.eq.s32.totalorder %s24, 1
    %p168 = scmp.ne.s32.totalorder %s163, %s165
    %p169 = scmp.eq.s32.totalorder %s24, 0
    %p170 = por %p168, %p169
    %p171 = scmp.ne.s32.totalorder %s163, %s165
    %p172 = scmp.eq.s32.totalorder %s29, 1
    %p173 = por %p171, %p172
    %p174 = scmp.ne.s32.totalorder %s165, %s166
    %p175 = scmp.eq.s32.totalorder %s29, 0
    %p176 = por %p174, %p175
    %p177 = scmp.ne.s32.totalorder %s165, %s166
    %p178 = scmp.eq.s32.totalorder %s30, 1
    %p179 = por %p177, %p178
    %p181 = scmp.ne.s32.totalorder %s166, %s180
    %p182 = scmp.eq.s32.totalorder %s30, 0
    %p183 = por %p181, %p182
    %s185 = sadd.s32 %s184, 1
    %p188 = scmp.eq.s32.totalorder %s24, 1
    %p189 = scmp.ne.s32.totalorder %s184, %s186
    %p190 = scmp.eq.s32.totalorder %s24, 0
    %p191 = por %p189, %p190
    %p192 = scmp.ne.s32.totalorder %s184, %s186
    %p193 = scmp.eq.s32.totalorder %s29, 1
    %p194 = por %p192, %p193
    %p195 = scmp.ne.s32.totalorder %s186, %s187
    %p196 = scmp.eq.s32.totalorder %s29, 0
    %p197 = por %p195, %p196
    %p198 = scmp.ne.s32.totalorder %s186, %s187
    %p199 = scmp.eq.s32.totalorder %s30, 1
    %p200 = por %p198, %p199
    %p202 = scmp.ne.s32.totalorder %s187, %s201
    %p203 = scmp.eq.s32.totalorder %s30, 0
    %p204 = por %p202, %p203
    %s206 = sadd.s32 %s205, 1
    %p209 = scmp.eq.s32.totalorder %s24, 1
    %p210 = scmp.ne.s32.totalorder %s205, %s207
    %p211 = scmp.eq.s32.totalorder %s24, 0
    %p212 = por %p210, %p211
    %p213 = scmp.ne.s32.totalorder %s205, %s207
    %p214 = scmp.eq.s32.totalorder %s29, 1
    %p215 = por %p213, %p214
    %p216 = scmp.ne.s32.totalorder %s207, %s208
    %p217 = scmp.eq.s32.totalorder %s29, 0
    %p218 = por %p216, %p217
    %p219 = scmp.ne.s32.totalorder %s207, %s208
    %p220 = scmp.eq.s32.totalorder %s30, 1
    %p221 = por %p219, %p220
    %p223 = scmp.ne.s32.totalorder %s208, %s222
    %p224 = scmp.eq.s32.totalorder %s30, 0
    %p225 = por %p223, %p224
    %s227 = sadd.s32 %s226, 1
    %p230 = scmp.eq.s32.totalorder %s24, 1
    %p231 = scmp.ne.s32.totalorder %s226, %s228
    %p232 = scmp.eq.s32.totalorder %s24, 0
    %p233 = por %p231, %p232
    %p234 = scmp.ne.s32.totalorder %s226, %s228
    %p235 = scmp.eq.s32.totalorder %s29, 1
    %p236 = por %p234, %p235
    %p237 = scmp.ne.s32.totalorder %s228, %s229
    %p238 = scmp.eq.s32.totalorder %s29, 0
    %p239 = por %p237, %p238
    %p240 = scmp.ne.s32.totalorder %s228, %s229
    %p241 = scmp.eq.s32.totalorder %s30, 1
    %p242 = por %p240, %p241
    %p244 = scmp.ne.s32.totalorder %s229, %s243
    %p245 = scmp.eq.s32.totalorder %s30, 0
    %p246 = por %p244, %p245
    %s248 = sadd.s32 %s247, 1
    %p251 = scmp.eq.s32.totalorder %s24, 1
    %p252 = scmp.ne.s32.totalorder %s247, %s249
    %p253 = scmp.eq.s32.totalorder %s24, 0
    %p254 = por %p252, %p253
    %p255 = scmp.ne.s32.totalorder %s247, %s249
    %p256 = scmp.eq.s32.totalorder %s29, 1
    %p257 = por %p255, %p256
    %p258 = scmp.ne.s32.totalorder %s249, %s250
    %p259 = scmp.eq.s32.totalorder %s29, 0
    %p260 = por %p258, %p259
    %p261 = scmp.ne.s32.totalorder %s249, %s250
    %p262 = scmp.eq.s32.totalorder %s30, 1
    %p263 = por %p261, %p262
    %p265 = scmp.ne.s32.totalorder %s250, %s264
    %p266 = scmp.eq.s32.totalorder %s30, 0
    %p267 = por %p265, %p266
    %s269 = sadd.s32 %s268, 1
    %p272 = scmp.eq.s32.totalorder %s24, 1
    %p273 = scmp.ne.s32.totalorder %s268, %s270
    %p274 = scmp.eq.s32.totalorder %s24, 0
    %p275 = por %p273, %p274
    %p276 = scmp.ne.s32.totalorder %s268, %s270
    %p277 = scmp.eq.s32.totalorder %s29, 1
    %p278 = por %p276, %p277
    %p279 = scmp.ne.s32.totalorder %s270, %s271
    %p280 = scmp.eq.s32.totalorder %s29, 0
    %p281 = por %p279, %p280
    %p282 = scmp.ne.s32.totalorder %s270, %s271
    %p283 = scmp.eq.s32.totalorder %s30, 1
    %p284 = por %p282, %p283
    %p286 = scmp.ne.s32.totalorder %s271, %s285
    %p287 = scmp.eq.s32.totalorder %s30, 0
    %p288 = por %p286, %p287
    %s290 = sadd.s32 %s289, 1
    %p293 = scmp.eq.s32.totalorder %s24, 1
    %p294 = scmp.ne.s32.totalorder %s289, %s291
    %p295 = scmp.eq.s32.totalorder %s24, 0
    %p296 = por %p294, %p295
    %p297 = scmp.ne.s32.totalorder %s289, %s291
    %p298 = scmp.eq.s32.totalorder %s29, 1
    %p299 = por %p297, %p298
    %p300 = scmp.ne.s32.totalorder %s291, %s292
    %p301 = scmp.eq.s32.totalorder %s29, 0
    %p302 = por %p300, %p301
    %p303 = scmp.ne.s32.totalorder %s291, %s292
    %p304 = scmp.eq.s32.totalorder %s30, 1
    %p305 = por %p303, %p304
    %p307 = scmp.ne.s32.totalorder %s292, %s306
    %p308 = scmp.eq.s32.totalorder %s30, 0
    %p309 = por %p307, %p308
    %s311 = sadd.s32 %s310, 1
    %p314 = scmp.eq.s32.totalorder %s24, 1
    %p315 = scmp.ne.s32.totalorder %s310, %s312
    %p316 = scmp.eq.s32.totalorder %s24, 0
    %p317 = por %p315, %p316
    %p318 = scmp.ne.s32.totalorder %s310, %s312
    %p319 = scmp.eq.s32.totalorder %s29, 1
    %p320 = por %p318, %p319
    %p321 = scmp.ne.s32.totalorder %s312, %s313
    %p322 = scmp.eq.s32.totalorder %s29, 0
    %p323 = por %p321, %p322
    %p324 = scmp.ne.s32.totalorder %s312, %s313
    %p325 = scmp.eq.s32.totalorder %s30, 1
    %p326 = por %p324, %p325
    %p328 = scmp.ne.s32.totalorder %s313, %s327
    %p329 = scmp.eq.s32.totalorder %s30, 0
    %p330 = por %p328, %p329
    %s332 = sadd.s32 %s331, 1
    %p335 = scmp.eq.s32.totalorder %s24, 1
    %p336 = scmp.ne.s32.totalorder %s331, %s333
    %p337 = scmp.eq.s32.totalorder %s24, 0
    %p338 = por %p336, %p337
    %p339 = scmp.ne.s32.totalorder %s331, %s333
    %p340 = scmp.eq.s32.totalorder %s29, 1
    %p341 = por %p339, %p340
    %p342 = scmp.ne.s32.totalorder %s333, %s334
    %p343 = scmp.eq.s32.totalorder %s29, 0
    %p344 = por %p342, %p343
    %p345 = scmp.ne.s32.totalorder %s333, %s334
    %p346 = scmp.eq.s32.totalorder %s30, 1
    %p347 = por %p345, %p346
    %p349 = scmp.ne.s32.totalorder %s334, %s348
    %p350 = scmp.eq.s32.totalorder %s30, 0
    %p351 = por %p349, %p350
    %s353 = sadd.s32 %s352, 1
    %p356 = scmp.eq.s32.totalorder %s24, 1
    %p357 = scmp.ne.s32.totalorder %s352, %s354
    %p358 = scmp.eq.s32.totalorder %s24, 0
    %p359 = por %p357, %p358
    %p360 = scmp.ne.s32.totalorder %s352, %s354
    %p361 = scmp.eq.s32.totalorder %s29, 1
    %p362 = por %p360, %p361
    %p363 = scmp.ne.s32.totalorder %s354, %s355
    %p364 = scmp.eq.s32.totalorder %s29, 0
    %p365 = por %p363, %p364
    %p366 = scmp.ne.s32.totalorder %s354, %s355
    %p367 = scmp.eq.s32.totalorder %s30, 1
    %p368 = por %p366, %p367
    %p370 = scmp.ne.s32.totalorder %s355, %s369
    %p371 = scmp.eq.s32.totalorder %s30, 0
    %p372 = por %p370, %p371
    %s374 = sadd.s32 %s373, 1
    %p377 = scmp.eq.s32.totalorder %s24, 1
    %p378 = scmp.ne.s32.totalorder %s373, %s375
    %p379 = scmp.eq.s32.totalorder %s24, 0
    %p380 = por %p378, %p379
    %p381 = scmp.ne.s32.totalorder %s373, %s375
    %p382 = scmp.eq.s32.totalorder %s29, 1
    %p383 = por %p381, %p382
    %p384 = scmp.ne.s32.totalorder %s375, %s376
    %p385 = scmp.eq.s32.totalorder %s29, 0
    %p386 = por %p384, %p385
    %p387 = scmp.ne.s32.totalorder %s375, %s376
    %p388 = scmp.eq.s32.totalorder %s30, 1
    %p389 = por %p387, %p388
    %p391 = scmp.ne.s32.totalorder %s376, %s390
    %p392 = scmp.eq.s32.totalorder %s30, 0
    %p393 = por %p391, %p392
    %s395 = sadd.s32 %s394, 1
    %p398 = scmp.eq.s32.totalorder %s24, 1
    %p399 = scmp.ne.s32.totalorder %s394, %s396
    %p400 = scmp.eq.s32.totalorder %s24, 0
    %p401 = por %p399, %p400
    %p402 = scmp.ne.s32.totalorder %s394, %s396
    %p403 = scmp.eq.s32.totalorder %s29, 1
    %p404 = por %p402, %p403
    %p405 = scmp.ne.s32.totalorder %s396, %s397
    %p406 = scmp.eq.s32.totalorder %s29, 0
    %p407 = por %p405, %p406
    %p408 = scmp.ne.s32.totalorder %s396, %s397
    %p409 = scmp.eq.s32.totalorder %s30, 1
    %p410 = por %p408, %p409
    %p412 = scmp.ne.s32.totalorder %s397, %s411
    %p413 = scmp.eq.s32.totalorder %s30, 0
    %p414 = por %p412, %p413
    %s415 = ssub.s32 %s24, %s31
    %p416 = scmp.eq.s32.totalorder %s415, 0
    %s418 = sadd.s32 %s417, 1
    %s419 = scalar_select %p416, %s417, %s418
    %p422 = pneg %p416
    %p423 = scmp.eq.s32.totalorder %s24, 1
    %p424 = por %p422, %p423
    %p425 = scmp.ne.s32.totalorder %s417, %s420
    %p426 = scmp.eq.s32.totalorder %s24, 0
    %p427 = por %p425, %p426
    %p428 = scmp.ne.s32.totalorder %s417, %s420
    %p429 = scmp.eq.s32.totalorder %s29, 1
    %p430 = por %p428, %p429
    %p431 = scmp.ne.s32.totalorder %s420, %s421
    %p432 = scmp.eq.s32.totalorder %s29, 0
    %p433 = por %p431, %p432
    %p434 = scmp.ne.s32.totalorder %s420, %s421
    %p435 = scmp.eq.s32.totalorder %s30, 1
    %p436 = por %p434, %p435
    %p438 = scmp.ne.s32.totalorder %s421, %s437
    %p439 = scmp.eq.s32.totalorder %s30, 0
    %p440 = por %p438, %p439
    %p441 = scmp.le.s32.totalorder 1, %s24
    %p442 = scmp.lt.s32.totalorder %s24, 3
    %p443 = pnand %p441, %p442
    %p444 = pneg %p443
    // Predicated region
    $region9: #{downnet_forward.1} parent=5 // pred_check
      _
    $region10: #{downnet_forward.1} parent=5 // pred_check_branch
      %446 = sbr.rel (%p443) target = $region12
    $region11: #{downnet_forward.1} parent=5 // pred_region
      %s447 = ssub.s32 %s24, 1
      // Predicated region
      $region13: #{downnet_forward.1} parent=11 // pred_check
        %p448 = pneg %p71
      $region14: #{downnet_forward.1} parent=11 // pred_check_branch
        %450 = sbr.rel (%p448) target = $region16
      $region15: #{downnet_forward.1} parent=11 // pred_region
        _
      $region16: #{downnet_forward.1} parent=11 // pred_fallthru
        _
      // Predicated region
      $region17: #{downnet_forward.1} parent=11 // pred_check
        %p451 = pneg %p92
      $region18: #{downnet_forward.1} parent=11 // pred_check_branch
        %453 = sbr.rel (%p451) target = $region20
      $region19: #{downnet_forward.1} parent=11 // pred_region
        _
      $region20: #{downnet_forward.1} parent=11 // pred_fallthru
        _
      // Predicated region
      $region21: #{downnet_forward.1} parent=11 // pred_check
        %p454 = pneg %p113
      $region22: #{downnet_forward.1} parent=11 // pred_check_branch
        %456 = sbr.rel (%p454) target = $region24
      $region23: #{downnet_forward.1} parent=11 // pred_region
        _
      $region24: #{downnet_forward.1} parent=11 // pred_fallthru
        _
      // Predicated region
      $region25: #{downnet_forward.1} parent=11 // pred_check
        %p457 = pneg %p134
      $region26: #{downnet_forward.1} parent=11 // pred_check_branch
        %459 = sbr.rel (%p457) target = $region28
      $region27: #{downnet_forward.1} parent=11 // pred_region
        _
      $region28: #{downnet_forward.1} parent=11 // pred_fallthru
        _
      // Predicated region
      $region29: #{downnet_forward.1} parent=11 // pred_check
        %p460 = pneg %p155
      $region30: #{downnet_forward.1} parent=11 // pred_check_branch
        %462 = sbr.rel (%p460) target = $region32
      $region31: #{downnet_forward.1} parent=11 // pred_region
        _
      $region32: #{downnet_forward.1} parent=11 // pred_fallthru
        _
      // Predicated region
      $region33: #{downnet_forward.1} parent=11 // pred_check
        %p463 = pneg %p176
      $region34: #{downnet_forward.1} parent=11 // pred_check_branch
        %465 = sbr.rel (%p463) target = $region36
      $region35: #{downnet_forward.1} parent=11 // pred_region
        _
      $region36: #{downnet_forward.1} parent=11 // pred_fallthru
        _
      // Predicated region
      $region37: #{downnet_forward.1} parent=11 // pred_check
        %p466 = pneg %p197
      $region38: #{downnet_forward.1} parent=11 // pred_check_branch
        %468 = sbr.rel (%p466) target = $region40
      $region39: #{downnet_forward.1} parent=11 // pred_region
        _
      $region40: #{downnet_forward.1} parent=11 // pred_fallthru
        _
      // Predicated region
      $region41: #{downnet_forward.1} parent=11 // pred_check
        %p469 = pneg %p218
      $region42: #{downnet_forward.1} parent=11 // pred_check_branch
        %471 = sbr.rel (%p469) target = $region44
      $region43: #{downnet_forward.1} parent=11 // pred_region
        _
      $region44: #{downnet_forward.1} parent=11 // pred_fallthru
        _
      // Predicated region
      $region45: #{downnet_forward.1} parent=11 // pred_check
        %p472 = pneg %p239
      $region46: #{downnet_forward.1} parent=11 // pred_check_branch
        %474 = sbr.rel (%p472) target = $region48
      $region47: #{downnet_forward.1} parent=11 // pred_region
        _
      $region48: #{downnet_forward.1} parent=11 // pred_fallthru
        _
      // Predicated region
      $region49: #{downnet_forward.1} parent=11 // pred_check
        %p475 = pneg %p260
      $region50: #{downnet_forward.1} parent=11 // pred_check_branch
        %477 = sbr.rel (%p475) target = $region52
      $region51: #{downnet_forward.1} parent=11 // pred_region
        _
      $region52: #{downnet_forward.1} parent=11 // pred_fallthru
        _
      // Predicated region
      $region53: #{downnet_forward.1} parent=11 // pred_check
        %p478 = pneg %p281
      $region54: #{downnet_forward.1} parent=11 // pred_check_branch
        %480 = sbr.rel (%p478) target = $region56
      $region55: #{downnet_forward.1} parent=11 // pred_region
        _
      $region56: #{downnet_forward.1} parent=11 // pred_fallthru
        _
      // Predicated region
      $region57: #{downnet_forward.1} parent=11 // pred_check
        %p481 = pneg %p302
      $region58: #{downnet_forward.1} parent=11 // pred_check_branch
        %483 = sbr.rel (%p481) target = $region60
      $region59: #{downnet_forward.1} parent=11 // pred_region
        _
      $region60: #{downnet_forward.1} parent=11 // pred_fallthru
        _
      // Predicated region
      $region61: #{downnet_forward.1} parent=11 // pred_check
        %p484 = pneg %p323
      $region62: #{downnet_forward.1} parent=11 // pred_check_branch
        %486 = sbr.rel (%p484) target = $region64
      $region63: #{downnet_forward.1} parent=11 // pred_region
        _
      $region64: #{downnet_forward.1} parent=11 // pred_fallthru
        _
      // Predicated region
      $region65: #{downnet_forward.1} parent=11 // pred_check
        %p487 = pneg %p344
      $region66: #{downnet_forward.1} parent=11 // pred_check_branch
        %489 = sbr.rel (%p487) target = $region68
      $region67: #{downnet_forward.1} parent=11 // pred_region
        _
      $region68: #{downnet_forward.1} parent=11 // pred_fallthru
        _
      // Predicated region
      $region69: #{downnet_forward.1} parent=11 // pred_check
        %p490 = pneg %p365
      $region70: #{downnet_forward.1} parent=11 // pred_check_branch
        %492 = sbr.rel (%p490) target = $region72
      $region71: #{downnet_forward.1} parent=11 // pred_region
        _
      $region72: #{downnet_forward.1} parent=11 // pred_fallthru
        _
      // Predicated region
      $region73: #{downnet_forward.1} parent=11 // pred_check
        %p493 = pneg %p386
      $region74: #{downnet_forward.1} parent=11 // pred_check_branch
        %495 = sbr.rel (%p493) target = $region76
      $region75: #{downnet_forward.1} parent=11 // pred_region
        _
      $region76: #{downnet_forward.1} parent=11 // pred_fallthru
        _
      // Predicated region
      $region77: #{downnet_forward.1} parent=11 // pred_check
        %p496 = pneg %p407
      $region78: #{downnet_forward.1} parent=11 // pred_check_branch
        %498 = sbr.rel (%p496) target = $region80
      $region79: #{downnet_forward.1} parent=11 // pred_region
        _
      $region80: #{downnet_forward.1} parent=11 // pred_fallthru
        _
    $region12: #{downnet_forward.1} parent=5 // pred_fallthru
      _
    %p499 = scmp.lt.s32.totalorder %s24, 2
    // Predicated region
    $region81: #{downnet_forward.1} parent=5 // pred_check
      %p500 = pneg %p499
    $region82: #{downnet_forward.1} parent=5 // pred_check_branch
      %502 = sbr.rel (%p500) target = $region84
    $region83: #{downnet_forward.1} parent=5 // pred_region
      // Predicated region
      $region85: #{downnet_forward.1} parent=83 // pred_check
        %p503 = pneg %p44
      $region86: #{downnet_forward.1} parent=83 // pred_check_branch
        %505 = sbr.rel (%p503) target = $region88
      $region87: #{downnet_forward.1} parent=83 // pred_region
        %p506 = scmp.lt.s32.totalorder %s24, 1
        %s507 = scalar_select %p506, %s24, 1
        %s508 = smul.addr %s507, 5
        %s509 = smul.addr %s508, 8
        %s510 = scalar_lea.vmem %s0, %s509
      $region88: #{downnet_forward.1} parent=83 // pred_fallthru
        _
    $region84: #{downnet_forward.1} parent=5 // pred_fallthru
      _
    %p511 = scmp.le.s32.totalorder 1, %s24
    %p512 = scmp.lt.s32.totalorder %s24, 3
    %p513 = pnand %p511, %p512
    %p514 = pneg %p513
    // Predicated region
    $region89: #{downnet_forward.1} parent=5 // pred_check
      _
    $region90: #{downnet_forward.1} parent=5 // pred_check_branch
      %516 = sbr.rel (%p513) target = $region92
    $region91: #{downnet_forward.1} parent=5 // pred_region
      %s517 = ssub.s32 %s24, 1
      %p518 = scmp.lt.s32.totalorder %s29, 1
      %s519 = scalar_select %p518, %s29, 1
      %s520 = smul.addr %s519, 5
      %s521 = smul.addr %s520, 8
      %s522 = scalar_lea.vmem %s0, %s521
      %p523 = pneg %p50
      %p524 = pneg %p47
      %p525 = pneg %p71
      %p526 = pneg %p68
      %p527 = pneg %p92
      %p528 = pneg %p89
      %p529 = pneg %p113
      %p530 = pneg %p110
      %p531 = pneg %p134
      %p532 = pneg %p131
      %p533 = pneg %p155
      %p534 = pneg %p152
      %p535 = pneg %p176
      %p536 = pneg %p173
      %p537 = pneg %p197
      %p538 = pneg %p194
      %p539 = pneg %p218
      %p540 = pneg %p215
      %p541 = pneg %p239
      %p542 = pneg %p236
      %p543 = pneg %p260
      %p544 = pneg %p257
      %p545 = pneg %p281
      %p546 = pneg %p278
      %p547 = pneg %p302
      %p548 = pneg %p299
      %p549 = pneg %p323
      %p550 = pneg %p320
      %p551 = pneg %p344
      %p552 = pneg %p341
      %p553 = pneg %p365
      %p554 = pneg %p362
      %p555 = pneg %p386
      %p556 = pneg %p383
      %p557 = pneg %p407
      %p558 = pneg %p404
      %p559 = pneg %p433
      %p560 = pneg %p430
      %p561 = scmp.lt.s32.totalorder %s29, 1
      %s562 = scalar_select %p561, %s29, 1
      %s563 = smul.addr %s562, 5
      %s564 = scalar_lea.vmem %s18, %s563
      %p565 = scmp.lt.s32.totalorder %s29, 1
      %s566 = scalar_select %p565, %s29, 1
      %s567 = smul.addr %s566, 5
      %s568 = smul.addr %s567, 8
      %s569 = scalar_lea.vmem %s0, %s568
      %p570 = scmp.lt.s32.totalorder %s29, 1
      %s571 = scalar_select %p570, %s29, 1
      %s572 = smul.addr %s571, 5
      %s573 = scalar_lea.vmem %s18, %s572
      %v574 = vld [vmem:[%s1] sm:$0x1f]
      %v575 = vld [vmem:[%s569] sm:$0xff]
      %v576 = vld [vmem:[%s569 + $0x8] sm:$0xff]
      %v577 = vld [vmem:[%s569 + $0x10] sm:$0xff]
      %v578 = vld [vmem:[%s569 + $0x18] sm:$0xff]
      %v579 = vld [vmem:[%s569 + $0x20] sm:$0xff]
      %580 = vrot.lane.b32.xlu0 %v575, 33
      %v581 = vpop.permute.xlu0 %580
      %582 = vrot.lane.b32.xlu0 %v576, 33
      %v583 = vpop.permute.xlu0 %582
      %584 = vrot.lane.b32.xlu0 %v577, 33
      %v585 = vpop.permute.xlu0 %584
      %586 = vrot.lane.b32.xlu0 %v578, 33
      %v587 = vpop.permute.xlu0 %586
      %588 = vrot.lane.b32.xlu0 %v579, 33
      %v589 = vpop.permute.xlu0 %588
      %v590 = vlaneseq
      %v591 = vand.u32 %v590, 127
      %vm592 = vcmp.lt.s32.totalorder %v591, 33
      %v593 = vsel %vm592, %v587, %v589
      %v594 = vsel %vm592, %v585, %v587
      %v595 = vsel %vm592, %v583, %v585
      %v596 = vsel %vm592, %v581, %v583
      %v597 = vsel %vm592, %v589, %v581
      %598 = vrot.lane.b32.xlu0 %v575, 32
      %v599 = vpop.permute.xlu0 %598
      %600 = vrot.lane.b32.xlu0 %v576, 32
      %v601 = vpop.permute.xlu0 %600
      %602 = vrot.lane.b32.xlu0 %v577, 32
      %v603 = vpop.permute.xlu0 %602
      %604 = vrot.lane.b32.xlu0 %v578, 32
      %v605 = vpop.permute.xlu0 %604
      %606 = vrot.lane.b32.xlu0 %v579, 32
      %v607 = vpop.permute.xlu0 %606
      %vm608 = vcmp.lt.s32.totalorder %v591, 32
      %v609 = vsel %vm608, %v605, %v607
      %v610 = vsel %vm608, %v603, %v605
      %v611 = vsel %vm608, %v601, %v603
      %v612 = vsel %vm608, %v599, %v601
      %v613 = vsel %vm608, %v607, %v599
      %614 = vrot.lane.b32.xlu0 %v575, 31
      %v615 = vpop.permute.xlu0 %614
      %616 = vrot.lane.b32.xlu0 %v576, 31
      %v617 = vpop.permute.xlu0 %616
      %618 = vrot.lane.b32.xlu0 %v577, 31
      %v619 = vpop.permute.xlu0 %618
      %620 = vrot.lane.b32.xlu0 %v578, 31
      %v621 = vpop.permute.xlu0 %620
      %622 = vrot.lane.b32.xlu0 %v579, 31
      %v623 = vpop.permute.xlu0 %622
      %vm624 = vcmp.lt.s32.totalorder %v591, 31
      %v625 = vsel %vm624, %v621, %v623
      %v626 = vsel %vm624, %v619, %v621
      %v627 = vsel %vm624, %v617, %v619
      %v628 = vsel %vm624, %v615, %v617
      %v629 = vsel %vm624, %v623, %v615
      %630 = vrot.lane.b32.xlu0 %v575, 1
      %v631 = vpop.permute.xlu0 %630
      %632 = vrot.lane.b32.xlu0 %v576, 1
      %v633 = vpop.permute.xlu0 %632
      %634 = vrot.lane.b32.xlu0 %v577, 1
      %v635 = vpop.permute.xlu0 %634
      %636 = vrot.lane.b32.xlu0 %v578, 1
      %v637 = vpop.permute.xlu0 %636
      %638 = vrot.lane.b32.xlu0 %v579, 1
      %v639 = vpop.permute.xlu0 %638
      %vm640 = vcmp.lt.s32.totalorder %v591, 1
      %v641 = vsel %vm640, %v637, %v639
      %v642 = vsel %vm640, %v635, %v637
      %v643 = vsel %vm640, %v633, %v635
      %v644 = vsel %vm640, %v631, %v633
      %v645 = vsel %vm640, %v639, %v631
      %646 = vrot.lane.b32.xlu0 %v575, 127
      %v647 = vpop.permute.xlu0 %646
      %648 = vrot.lane.b32.xlu0 %v576, 127
      %v649 = vpop.permute.xlu0 %648
      %650 = vrot.lane.b32.xlu0 %v577, 127
      %v651 = vpop.permute.xlu0 %650
      %652 = vrot.lane.b32.xlu0 %v578, 127
      %v653 = vpop.permute.xlu0 %652
      %654 = vrot.lane.b32.xlu0 %v579, 127
      %v655 = vpop.permute.xlu0 %654
      %vm656 = vcmp.lt.s32.totalorder %v591, 127
      %v657 = vsel %vm656, %v653, %v655
      %v658 = vsel %vm656, %v651, %v653
      %v659 = vsel %vm656, %v649, %v651
      %v660 = vsel %vm656, %v647, %v649
      %v661 = vsel %vm656, %v655, %v647
      %662 = vrot.lane.b32.xlu0 %v575, 97
      %v663 = vpop.permute.xlu0 %662
      %664 = vrot.lane.b32.xlu0 %v576, 97
      %v665 = vpop.permute.xlu0 %664
      %666 = vrot.lane.b32.xlu0 %v577, 97
      %v667 = vpop.permute.xlu0 %666
      %668 = vrot.lane.b32.xlu0 %v578, 97
      %v669 = vpop.permute.xlu0 %668
      %670 = vrot.lane.b32.xlu0 %v579, 97
      %v671 = vpop.permute.xlu0 %670
      %vm672 = vcmp.lt.s32.totalorder %v591, 97
      %v673 = vsel %vm672, %v669, %v671
      %v674 = vsel %vm672, %v667, %v669
      %v675 = vsel %vm672, %v665, %v667
      %v676 = vsel %vm672, %v663, %v665
      %v677 = vsel %vm672, %v671, %v663
      %678 = vrot.lane.b32.xlu0 %v575, 96
      %v679 = vpop.permute.xlu0 %678
      %680 = vrot.lane.b32.xlu0 %v576, 96
      %v681 = vpop.permute.xlu0 %680
      %682 = vrot.lane.b32.xlu0 %v577, 96
      %v683 = vpop.permute.xlu0 %682
      %684 = vrot.lane.b32.xlu0 %v578, 96
      %v685 = vpop.permute.xlu0 %684
      %686 = vrot.lane.b32.xlu0 %v579, 96
      %v687 = vpop.permute.xlu0 %686
      %vm688 = vcmp.lt.s32.totalorder %v591, 96
      %v689 = vsel %vm688, %v685, %v687
      %v690 = vsel %vm688, %v683, %v685
      %v691 = vsel %vm688, %v681, %v683
      %v692 = vsel %vm688, %v679, %v681
      %v693 = vsel %vm688, %v687, %v679
      %694 = vrot.lane.b32.xlu0 %v575, 95
      %v695 = vpop.permute.xlu0 %694
      %696 = vrot.lane.b32.xlu0 %v576, 95
      %v697 = vpop.permute.xlu0 %696
      %698 = vrot.lane.b32.xlu0 %v577, 95
      %v699 = vpop.permute.xlu0 %698
      %700 = vrot.lane.b32.xlu0 %v578, 95
      %v701 = vpop.permute.xlu0 %700
      %702 = vrot.lane.b32.xlu0 %v579, 95
      %v703 = vpop.permute.xlu0 %702
      %vm704 = vcmp.lt.s32.totalorder %v591, 95
      %v705 = vsel %vm704, %v701, %v703
      %v706 = vsel %vm704, %v699, %v701
      %v707 = vsel %vm704, %v697, %v699
      %v708 = vsel %vm704, %v695, %v697
      %v709 = vsel %vm704, %v703, %v695
      %v710 = vld [vmem:[%s2] sm:$0xff]
      %vm711 = vcmask 588800
      %v713 = vsel %vm711, %v710, 0
      %715 = vmatprep.subr.mxu0 %v596
      %716 = vmatpush1.msra.mxu0 %v597
      %717 = vmatprep.subr.mxu0 %v612
      %718 = vmatpush1.msra.mxu0 %v613
      %719 = vmatprep.subr.mxu0 %v628
      %720 = vmatpush1.msra.mxu0 %v629
      %721 = vmatprep.subr.mxu0 %v644
      %722 = vmatpush1.msra.mxu0 %v645
      %723 = vmatprep.subr.mxu0 %v576
      %724 = vmatpush1.msra.mxu0 %v575
      %725 = vmatprep.subr.mxu0 %v659
      %726 = vmatpush1.msra.mxu0 %v660
      %727 = vmatprep.subr.mxu0 %v675
      %728 = vmatpush1.msra.mxu0 %v676
      %729 = vmatprep.subr.mxu0 %v691
      %730 = vmatpush1.msra.mxu0 %v692
      %731 = vmatprep.subr.mxu0 %v707
      %732 = vmatpush1.msra.mxu0 %v708
      %733 = vmatprep.subr.mxu0 0.0
      %734 = vmatpush1.msra.mxu0 0.0
      %735 = vmatprep.subr.mxu0 0.0
      %736 = vmatpush1.msra.mxu0 0.0
      %737 = vmatprep.subr.mxu0 0.0
      %738 = vmatpush1.msra.mxu0 0.0
      %739 = vmatprep.subr.mxu0 0.0
      %740 = vmatpush1.msra.mxu0 0.0
      %741 = vmatprep.subr.mxu0 0.0
      %742 = vmatpush1.msra.mxu0 0.0
      %743 = vmatprep.subr.mxu0 0.0
      %744 = vmatpush1.msra.mxu0 0.0
      %745 = vmatprep.subr.mxu0 0.0
      %746 = vmatpush1.msra.mxu0 0.0
      %747 = vmatprep.subr.mxu0 0.0
      %748 = vmatpush1.msra.mxu0 0.0
      %749 = vmatprep.subr.mxu0 0.0
      %750 = vmatpush1.msra.mxu0 0.0
      %751 = vmatprep.subr.mxu0 0.0
      %752 = vmatpush1.msra.mxu0 0.0
      %753 = vmatprep.subr.mxu0 0.0
      %754 = vmatpush1.msra.mxu0 0.0
      %755 = vmatprep.subr.mxu0 0.0
      %756 = vmatpush1.msra.mxu0 0.0
      %757 = vmatprep.subr.mxu0 0.0
      %758 = vmatpush1.msra.mxu0 0.0
      %759 = vmatprep.subr.mxu0 0.0
      %760 = vmatpush1.msra.mxu0 0.0
      %761 = vmatprep.subr.mxu0 0.0
      %762 = vmatpush1.msra.mxu0 0.0
      %763 = vmatprep.subr.mxu0 0.0
      %764 = vmatpush1.msra.mxu0 0.0
      %765 = vmatprep.subr.mxu0 0.0
      %766 = vmatpush1.msra.mxu0 0.0
      %767 = vmatprep.subr.mxu0 0.0
      %768 = vmatpush1.msra.mxu0 0.0
      %769 = vmatprep.subr.mxu0 0.0
      %770 = vmatpush1.msra.mxu0 0.0
      %771 = vmatprep.subr.mxu0 0.0
      %772 = vmatpush1.msra.mxu0 0.0
      %773 = vmatprep.subr.mxu0 0.0
      %774 = vmatpush1.msra.mxu0 0.0
      %775 = vmatprep.subr.mxu0 0.0
      %776 = vmatpush1.msra.mxu0 0.0
      %777 = vmatprep.subr.mxu0 0.0
      %778 = vmatpush1.msra.mxu0 0.0
      %779 = vmatprep.mubr.f32.mxu0 0.0
      %780 = vmatmul.mubr.f32.gmra.mrb[0].mxu0 %v713
      %v781 = vpop.f32.mrb[0].mxu0
      %v782 = vadd.f32 0.0, %v781
      %v783 = vpop.f32.mrb[0].mxu0
      %v784 = vadd.f32 0.0, %v783
      %785 = vdwg.mxu0
      %786 = vmatprep.subr.mxu0 %v594
      %787 = vmatpush1.msra.mxu0 %v595
      %788 = vmatprep.subr.mxu0 %v610
      %789 = vmatpush1.msra.mxu0 %v611
      %790 = vmatprep.subr.mxu0 %v626
      %791 = vmatpush1.msra.mxu0 %v627
      %792 = vmatprep.subr.mxu0 %v642
      %793 = vmatpush1.msra.mxu0 %v643
      %794 = vmatprep.subr.mxu0 %v578
      %795 = vmatpush1.msra.mxu0 %v577
      %796 = vmatprep.subr.mxu0 %v657
      %797 = vmatpush1.msra.mxu0 %v658
      %798 = vmatprep.subr.mxu0 %v673
      %799 = vmatpush1.msra.mxu0 %v674
      %800 = vmatprep.subr.mxu0 %v689
      %801 = vmatpush1.msra.mxu0 %v690
      %802 = vmatprep.subr.mxu0 %v705
      %803 = vmatpush1.msra.mxu0 %v706
      %804 = vmatprep.subr.mxu0 0.0
      %805 = vmatpush1.msra.mxu0 0.0
      %806 = vmatprep.subr.mxu0 0.0
      %807 = vmatpush1.msra.mxu0 0.0
      %808 = vmatprep.subr.mxu0 0.0
      %809 = vmatpush1.msra.mxu0 0.0
      %810 = vmatprep.subr.mxu0 0.0
      %811 = vmatpush1.msra.mxu0 0.0
      %812 = vmatprep.subr.mxu0 0.0
      %813 = vmatpush1.msra.mxu0 0.0
      %814 = vmatprep.subr.mxu0 0.0
      %815 = vmatpush1.msra.mxu0 0.0
      %816 = vmatprep.subr.mxu0 0.0
      %817 = vmatpush1.msra.mxu0 0.0
      %818 = vmatprep.subr.mxu0 0.0
      %819 = vmatpush1.msra.mxu0 0.0
      %820 = vmatprep.subr.mxu0 0.0
      %821 = vmatpush1.msra.mxu0 0.0
      %822 = vmatprep.subr.mxu0 0.0
      %823 = vmatpush1.msra.mxu0 0.0
      %824 = vmatprep.subr.mxu0 0.0
      %825 = vmatpush1.msra.mxu0 0.0
      %826 = vmatprep.subr.mxu0 0.0
      %827 = vmatpush1.msra.mxu0 0.0
      %828 = vmatprep.subr.mxu0 0.0
      %829 = vmatpush1.msra.mxu0 0.0
      %830 = vmatprep.subr.mxu0 0.0
      %831 = vmatpush1.msra.mxu0 0.0
      %832 = vmatprep.subr.mxu0 0.0
      %833 = vmatpush1.msra.mxu0 0.0
      %834 = vmatprep.subr.mxu0 0.0
      %835 = vmatpush1.msra.mxu0 0.0
      %836 = vmatprep.subr.mxu0 0.0
      %837 = vmatpush1.msra.mxu0 0.0
      %838 = vmatprep.subr.mxu0 0.0
      %839 = vmatpush1.msra.mxu0 0.0
      %840 = vmatprep.subr.mxu0 0.0
      %841 = vmatpush1.msra.mxu0 0.0
      %842 = vmatprep.subr.mxu0 0.0
      %843 = vmatpush1.msra.mxu0 0.0
      %844 = vmatprep.subr.mxu0 0.0
      %845 = vmatpush1.msra.mxu0 0.0
      %846 = vmatprep.subr.mxu0 0.0
      %847 = vmatpush1.msra.mxu0 0.0
      %848 = vmatprep.subr.mxu0 0.0
      %849 = vmatpush1.msra.mxu0 0.0
      %850 = vmatprep.mubr.f32.mxu0 0.0
      %851 = vmatmul.mubr.f32.gmra.mrb[0].mxu0 %v713
      %v852 = vpop.f32.mrb[0].mxu0
      %v853 = vadd.f32 0.0, %v852
      %v854 = vpop.f32.mrb[0].mxu0
      %v855 = vadd.f32 0.0, %v854
      %856 = vdwg.mxu0
      %857 = vmatprep.subr.mxu0 0.0
      %858 = vmatpush1.msra.mxu0 %v593
      %859 = vmatprep.subr.mxu0 0.0
      %860 = vmatpush1.msra.mxu0 %v609
      %861 = vmatprep.subr.mxu0 0.0
      %862 = vmatpush1.msra.mxu0 %v625
      %863 = vmatprep.subr.mxu0 0.0
      %864 = vmatpush1.msra.mxu0 %v641
      %865 = vmatprep.subr.mxu0 0.0
      %866 = vmatpush1.msra.mxu0 %v579
      %867 = vmatprep.subr.mxu0 0.0
      %868 = vmatpush1.msra.mxu0 %v661
      %869 = vmatprep.subr.mxu0 0.0
      %870 = vmatpush1.msra.mxu0 %v677
      %871 = vmatprep.subr.mxu0 0.0
      %872 = vmatpush1.msra.mxu0 %v693
      %873 = vmatprep.subr.mxu0 0.0
      %874 = vmatpush1.msra.mxu0 %v709
      %875 = vmatprep.subr.mxu0 0.0
      %876 = vmatpush1.msra.mxu0 0.0
      %877 = vmatprep.subr.mxu0 0.0
      %878 = vmatpush1.msra.mxu0 0.0
      %879 = vmatprep.subr.mxu0 0.0
      %880 = vmatpush1.msra.mxu0 0.0
      %881 = vmatprep.subr.mxu0 0.0
      %882 = vmatpush1.msra.mxu0 0.0
      %883 = vmatprep.subr.mxu0 0.0
      %884 = vmatpush1.msra.mxu0 0.0
      %885 = vmatprep.subr.mxu0 0.0
      %886 = vmatpush1.msra.mxu0 0.0
      %887 = vmatprep.subr.mxu0 0.0
      %888 = vmatpush1.msra.mxu0 0.0
      %889 = vmatprep.subr.mxu0 0.0
      %890 = vmatpush1.msra.mxu0 0.0
      %891 = vmatprep.subr.mxu0 0.0
      %892 = vmatpush1.msra.mxu0 0.0
      %893 = vmatprep.subr.mxu0 0.0
      %894 = vmatpush1.msra.mxu0 0.0
      %895 = vmatprep.subr.mxu0 0.0
      %896 = vmatpush1.msra.mxu0 0.0
      %897 = vmatprep.subr.mxu0 0.0
      %898 = vmatpush1.msra.mxu0 0.0
      %899 = vmatprep.subr.mxu0 0.0
      %900 = vmatpush1.msra.mxu0 0.0
      %901 = vmatprep.subr.mxu0 0.0
      %902 = vmatpush1.msra.mxu0 0.0
      %903 = vmatprep.subr.mxu0 0.0
      %904 = vmatpush1.msra.mxu0 0.0
      %905 = vmatprep.subr.mxu0 0.0
      %906 = vmatpush1.msra.mxu0 0.0
      %907 = vmatprep.subr.mxu0 0.0
      %908 = vmatpush1.msra.mxu0 0.0
      %909 = vmatprep.subr.mxu0 0.0
      %910 = vmatpush1.msra.mxu0 0.0
      %911 = vmatprep.subr.mxu0 0.0
      %912 = vmatpush1.msra.mxu0 0.0
      %913 = vmatprep.subr.mxu0 0.0
      %914 = vmatpush1.msra.mxu0 0.0
      %915 = vmatprep.subr.mxu0 0.0
      %916 = vmatpush1.msra.mxu0 0.0
      %917 = vmatprep.subr.mxu0 0.0
      %918 = vmatpush1.msra.mxu0 0.0
      %919 = vmatprep.subr.mxu0 0.0
      %920 = vmatpush1.msra.mxu0 0.0
      %921 = vmatprep.mubr.f32.mxu0 0.0
      %922 = vmatmul.mubr.f32.gmra.mrb[0].mxu0 %v713
      %v923 = vpop.f32.mrb[0].mxu0
      %v924 = vadd.f32 0.0, %v923
      %v925 = vpop.f32.mrb[0].mxu0
      %926 = vdwg.mxu0
      %v928 = vlaneseq
      %v929 = vshrl.u32 %v928, 7
      %v930 = vsub.s32 0, %v929
      %v931 = vrot.slane %v574, %v930
      %v932 = vlaneseq
      %v933 = vshrl.u32 %v932, 7
      %v934 = vsub.s32 1, %v933
      %v935 = vrot.slane %v574, %v934
      %v936 = vlaneseq
      %v937 = vshrl.u32 %v936, 7
      %v938 = vsub.s32 2, %v937
      %v939 = vrot.slane %v574, %v938
      %v940 = vlaneseq
      %v941 = vshrl.u32 %v940, 7
      %v942 = vsub.s32 3, %v941
      %v943 = vrot.slane %v574, %v942
      %v944 = vlaneseq
      %v945 = vshrl.u32 %v944, 7
      %v946 = vsub.s32 4, %v945
      %v947 = vrot.slane %v574, %v946
      %v953 = vmul.f32 %v782, %v931
      %v954 = vmul.f32 %v784, %v935
      %v955 = vmul.f32 %v853, %v939
      %v956 = vmul.f32 %v855, %v943
      %v957 = vmul.f32 %v924, %v947
      %v958 = vadd.f32 %v953, %v954
      %v959 = vadd.f32 %v958, %v955
      %v960 = vadd.f32 %v959, %v956
      %v961 = vadd.f32 %v960, %v957
      %962 = vadd.xlane.f32.xlu0 %v961
      %v963 = vpop.xlane.xlu0 %962
      %v964 = vmul.f32 %v963, 0.00390625
      %v965 = vsub.f32 %v953, %v964
      %v966 = vsub.f32 %v954, %v964
      %v967 = vsub.f32 %v955, %v964
      %v968 = vsub.f32 %v956, %v964
      %v969 = vsub.f32 %v957, %v964
      %v970 = vmul.f32 %v965, %v931
      %v971 = vmul.f32 %v966, %v935
      %v972 = vmul.f32 %v967, %v939
      %v973 = vmul.f32 %v968, %v943
      %v974 = vmul.f32 %v969, %v947
      %v975 = vmul.f32 %v970, %v970
      %v976 = vmul.f32 %v971, %v971
      %v977 = vmul.f32 %v972, %v972
      %v978 = vmul.f32 %v973, %v973
      %v979 = vmul.f32 %v974, %v974
      %v980 = vadd.f32 %v975, %v976
      %v981 = vadd.f32 %v980, %v977
      %v982 = vadd.f32 %v981, %v978
      %v983 = vadd.f32 %v982, %v979
      %984 = vadd.xlane.f32.xlu0 %v983
      %v985 = vpop.xlane.xlu0 %984
      %v986 = vmul.f32 %v985, 0.00390625
      %v987 = vadd.f32 %v986, 1e-05
      %v988 = vrsqrt.pop %v987
      %v989 = vmul.f32 %v970, %v988
      %v990 = vmul.f32 %v971, %v988
      %v991 = vmul.f32 %v972, %v988
      %v992 = vmul.f32 %v973, %v988
      %v993 = vmul.f32 %v974, %v988
      %vm994 = vcmp.gt.f32.partialorder %v989, 0.0
      %vm995 = vcmp.gt.f32.partialorder %v990, 0.0
      %vm996 = vcmp.gt.f32.partialorder %v991, 0.0
      %vm997 = vcmp.gt.f32.partialorder %v992, 0.0
      %vm998 = vcmp.gt.f32.partialorder %v993, 0.0
      %v999 = vmul.f32 %v989, 0.4
      %v1000 = vmul.f32 %v990, 0.4
      %v1001 = vmul.f32 %v991, 0.4
      %v1002 = vmul.f32 %v992, 0.4
      %v1003 = vmul.f32 %v993, 0.4
      %v1004 = vsel %vm994, %v989, %v999
      %v1005 = vsel %vm995, %v990, %v1000
      %v1006 = vsel %vm996, %v991, %v1001
      %v1007 = vsel %vm997, %v992, %v1002
      %v1008 = vsel %vm998, %v993, %v1003
      %1009 = vrot.lane.b32.xlu0 %v1004, 66
      %v1010 = vpop.permute.xlu0 %1009
      %1011 = vrot.lane.b32.xlu0 %v1005, 66
      %v1012 = vpop.permute.xlu0 %1011
      %1013 = vrot.lane.b32.xlu0 %v1006, 66
      %v1014 = vpop.permute.xlu0 %1013
      %1015 = vrot.lane.b32.xlu0 %v1007, 66
      %v1016 = vpop.permute.xlu0 %1015
      %1017 = vrot.lane.b32.xlu0 %v1008, 66
      %v1018 = vpop.permute.xlu0 %1017
      %vm1019 = vcmp.lt.s32.totalorder %v591, 66
      %v1020 = vsel %vm1019, %v1016, %v1018
      %v1021 = vsel %vm1019, %v1014, %v1016
      %v1022 = vsel %vm1019, %v1012, %v1014
      %v1023 = vsel %vm1019, %v1010, %v1012
      %v1024 = vsel %vm1019, %v1018, %v1010
      %1025 = vrot.lane.b32.xlu0 %v1004, 64
      %v1026 = vpop.permute.xlu0 %1025
      %1027 = vrot.lane.b32.xlu0 %v1005, 64
      %v1028 = vpop.permute.xlu0 %1027
      %1029 = vrot.lane.b32.xlu0 %v1006, 64
      %v1030 = vpop.permute.xlu0 %1029
      %1031 = vrot.lane.b32.xlu0 %v1007, 64
      %v1032 = vpop.permute.xlu0 %1031
      %1033 = vrot.lane.b32.xlu0 %v1008, 64
      %v1034 = vpop.permute.xlu0 %1033
      %vm1035 = vcmp.lt.s32.totalorder %v591, 64
      %v1036 = vsel %vm1035, %v1032, %v1034
      %v1037 = vsel %vm1035, %v1030, %v1032
      %v1038 = vsel %vm1035, %v1028, %v1030
      %v1039 = vsel %vm1035, %v1026, %v1028
      %v1040 = vsel %vm1035, %v1034, %v1026
      %1041 = vrot.lane.b32.xlu0 %v1004, 62
      %v1042 = vpop.permute.xlu0 %1041
      %1043 = vrot.lane.b32.xlu0 %v1005, 62
      %v1044 = vpop.permute.xlu0 %1043
      %1045 = vrot.lane.b32.xlu0 %v1006, 62
      %v1046 = vpop.permute.xlu0 %1045
      %1047 = vrot.lane.b32.xlu0 %v1007, 62
      %v1048 = vpop.permute.xlu0 %1047
      %1049 = vrot.lane.b32.xlu0 %v1008, 62
      %v1050 = vpop.permute.xlu0 %1049
      %vm1051 = vcmp.lt.s32.totalorder %v591, 62
      %v1052 = vsel %vm1051, %v1048, %v1050
      %v1053 = vsel %vm1051, %v1046, %v1048
      %v1054 = vsel %vm1051, %v1044, %v1046
      %v1055 = vsel %vm1051, %v1042, %v1044
      %v1056 = vsel %vm1051, %v1050, %v1042
      %1057 = vrot.lane.b32.xlu0 %v1004, 2
      %v1058 = vpop.permute.xlu0 %1057
      %1059 = vrot.lane.b32.xlu0 %v1005, 2
      %v1060 = vpop.permute.xlu0 %1059
      %1061 = vrot.lane.b32.xlu0 %v1006, 2
      %v1062 = vpop.permute.xlu0 %1061
      %1063 = vrot.lane.b32.xlu0 %v1007, 2
      %v1064 = vpop.permute.xlu0 %1063
      %1065 = vrot.lane.b32.xlu0 %v1008, 2
      %v1066 = vpop.permute.xlu0 %1065
      %vm1067 = vcmp.lt.s32.totalorder %v591, 2
      %v1068 = vsel %vm1067, %v1064, %v1066
      %v1069 = vsel %vm1067, %v1062, %v1064
      %v1070 = vsel %vm1067, %v1060, %v1062
      %v1071 = vsel %vm1067, %v1058, %v1060
      %v1072 = vsel %vm1067, %v1066, %v1058
      %1073 = vrot.lane.b32.xlu0 %v1004, 126
      %v1074 = vpop.permute.xlu0 %1073
      %1075 = vrot.lane.b32.xlu0 %v1005, 126
      %v1076 = vpop.permute.xlu0 %1075
      %1077 = vrot.lane.b32.xlu0 %v1006, 126
      %v1078 = vpop.permute.xlu0 %1077
      %1079 = vrot.lane.b32.xlu0 %v1007, 126
      %v1080 = vpop.permute.xlu0 %1079
      %1081 = vrot.lane.b32.xlu0 %v1008, 126
      %v1082 = vpop.permute.xlu0 %1081
      %vm1083 = vcmp.lt.s32.totalorder %v591, 126
      %v1084 = vsel %vm1083, %v1080, %v1082
      %v1085 = vsel %vm1083, %v1078, %v1080
      %v1086 = vsel %vm1083, %v1076, %v1078
      %v1087 = vsel %vm1083, %v1074, %v1076
      %v1088 = vsel %vm1083, %v1082, %v1074
      %v1089 = vld [vmem:[%s4] sm:$0xff]
      %v1090 = vld [vmem:[%s5] sm:$0xff]
      %1092 = vset.pattern.permute.xlu0 0
      %1093 = vperm.xlu0 %1092, %v1090
      %v1094 = vpop.permute.xlu0 %1093
      %v1097 = vsel %vm711, %v1089, 0
      %1099 = vmatprep.subr.mxu0 %v1023
      %1100 = vmatpush1.msra.mxu0 %v1024
      %1101 = vmatprep.subr.mxu0 %v1039
      %1102 = vmatpush1.msra.mxu0 %v1040
      %1103 = vmatprep.subr.mxu0 %v1055
      %1104 = vmatpush1.msra.mxu0 %v1056
      %1105 = vmatprep.subr.mxu0 %v1071
      %1106 = vmatpush1.msra.mxu0 %v1072
      %1107 = vmatprep.subr.mxu0 %v1005
      %1108 = vmatpush1.msra.mxu0 %v1004
      %1109 = vmatprep.subr.mxu0 %v1086
      %1110 = vmatpush1.msra.mxu0 %v1087
      %1111 = vmatprep.subr.mxu0 %v1022
      %1112 = vmatpush1.msra.mxu0 %v1023
      %1113 = vmatprep.subr.mxu0 %v1038
      %1114 = vmatpush1.msra.mxu0 %v1039
      %1115 = vmatprep.subr.mxu0 %v1054
      %1116 = vmatpush1.msra.mxu0 %v1055
      %1117 = vmatprep.subr.mxu0 0.0
      %1118 = vmatpush1.msra.mxu0 0.0
      %1119 = vmatprep.subr.mxu0 0.0
      %1120 = vmatpush1.msra.mxu0 0.0
      %1121 = vmatprep.subr.mxu0 0.0
      %1122 = vmatpush1.msra.mxu0 0.0
      %1123 = vmatprep.subr.mxu0 0.0
      %1124 = vmatpush1.msra.mxu0 0.0
      %1125 = vmatprep.subr.mxu0 0.0
      %1126 = vmatpush1.msra.mxu0 0.0
      %1127 = vmatprep.subr.mxu0 0.0
      %1128 = vmatpush1.msra.mxu0 0.0
      %1129 = vmatprep.subr.mxu0 0.0
      %1130 = vmatpush1.msra.mxu0 0.0
      %1131 = vmatprep.subr.mxu0 0.0
      %1132 = vmatpush1.msra.mxu0 0.0
      %1133 = vmatprep.subr.mxu0 0.0
      %1134 = vmatpush1.msra.mxu0 0.0
      %1135 = vmatprep.subr.mxu0 0.0
      %1136 = vmatpush1.msra.mxu0 0.0
      %1137 = vmatprep.subr.mxu0 0.0
      %1138 = vmatpush1.msra.mxu0 0.0
      %1139 = vmatprep.subr.mxu0 0.0
      %1140 = vmatpush1.msra.mxu0 0.0
      %1141 = vmatprep.subr.mxu0 0.0
      %1142 = vmatpush1.msra.mxu0 0.0
      %1143 = vmatprep.subr.mxu0 0.0
      %1144 = vmatpush1.msra.mxu0 0.0
      %1145 = vmatprep.subr.mxu0 0.0
      %1146 = vmatpush1.msra.mxu0 0.0
      %1147 = vmatprep.subr.mxu0 0.0
      %1148 = vmatpush1.msra.mxu0 0.0
      %1149 = vmatprep.subr.mxu0 0.0
      %1150 = vmatpush1.msra.mxu0 0.0
      %1151 = vmatprep.subr.mxu0 0.0
      %1152 = vmatpush1.msra.mxu0 0.0
      %1153 = vmatprep.subr.mxu0 0.0
      %1154 = vmatpush1.msra.mxu0 0.0
      %1155 = vmatprep.subr.mxu0 0.0
      %1156 = vmatpush1.msra.mxu0 0.0
      %1157 = vmatprep.subr.mxu0 0.0
      %1158 = vmatpush1.msra.mxu0 0.0
      %1159 = vmatprep.subr.mxu0 0.0
      %1160 = vmatpush1.msra.mxu0 0.0
      %1161 = vmatprep.subr.mxu0 0.0
      %1162 = vmatpush1.msra.mxu0 0.0
      %1163 = vmatprep.mubr.f32.mxu0 0.0
      %1164 = vmatmul.mubr.f32.gmra.mrb[0].mxu0 %v1097
      %v1165 = vpop.f32.mrb[0].mxu0
      %v1166 = vadd.f32 %v1094, %v1165
      %v1167 = vpop.f32.mrb[0].mxu0
      %v1168 = vadd.f32 %v1094, %v1167
      %1169 = vdwg.mxu0
      %1170 = vmatprep.subr.mxu0 %v1021
      %1171 = vmatpush1.msra.mxu0 %v1022
      %1172 = vmatprep.subr.mxu0 %v1037
      %1173 = vmatpush1.msra.mxu0 %v1038
      %1174 = vmatprep.subr.mxu0 %v1053
      %1175 = vmatpush1.msra.mxu0 %v1054
      %1176 = vmatprep.subr.mxu0 %v1069
      %1177 = vmatpush1.msra.mxu0 %v1070
      %1178 = vmatprep.subr.mxu0 %v1007
      %1179 = vmatpush1.msra.mxu0 %v1006
      %1180 = vmatprep.subr.mxu0 %v1084
      %1181 = vmatpush1.msra.mxu0 %v1085
      %1182 = vmatprep.subr.mxu0 %v1020
      %1183 = vmatpush1.msra.mxu0 %v1021
      %1184 = vmatprep.subr.mxu0 %v1036
      %1185 = vmatpush1.msra.mxu0 %v1037
      %1186 = vmatprep.subr.mxu0 %v1052
      %1187 = vmatpush1.msra.mxu0 %v1053
      %1188 = vmatprep.subr.mxu0 0.0
      %1189 = vmatpush1.msra.mxu0 0.0
      %1190 = vmatprep.subr.mxu0 0.0
      %1191 = vmatpush1.msra.mxu0 0.0
      %1192 = vmatprep.subr.mxu0 0.0
      %1193 = vmatpush1.msra.mxu0 0.0
      %1194 = vmatprep.subr.mxu0 0.0
      %1195 = vmatpush1.msra.mxu0 0.0
      %1196 = vmatprep.subr.mxu0 0.0
      %1197 = vmatpush1.msra.mxu0 0.0
      %1198 = vmatprep.subr.mxu0 0.0
      %1199 = vmatpush1.msra.mxu0 0.0
      %1200 = vmatprep.subr.mxu0 0.0
      %1201 = vmatpush1.msra.mxu0 0.0
      %1202 = vmatprep.subr.mxu0 0.0
      %1203 = vmatpush1.msra.mxu0 0.0
      %1204 = vmatprep.subr.mxu0 0.0
      %1205 = vmatpush1.msra.mxu0 0.0
      %1206 = vmatprep.subr.mxu0 0.0
      %1207 = vmatpush1.msra.mxu0 0.0
      %1208 = vmatprep.subr.mxu0 0.0
      %1209 = vmatpush1.msra.mxu0 0.0
      %1210 = vmatprep.subr.mxu0 0.0
      %1211 = vmatpush1.msra.mxu0 0.0
      %1212 = vmatprep.subr.mxu0 0.0
      %1213 = vmatpush1.msra.mxu0 0.0
      %1214 = vmatprep.subr.mxu0 0.0
      %1215 = vmatpush1.msra.mxu0 0.0
      %1216 = vmatprep.subr.mxu0 0.0
      %1217 = vmatpush1.msra.mxu0 0.0
      %1218 = vmatprep.subr.mxu0 0.0
      %1219 = vmatpush1.msra.mxu0 0.0
      %1220 = vmatprep.subr.mxu0 0.0
      %1221 = vmatpush1.msra.mxu0 0.0
      %1222 = vmatprep.subr.mxu0 0.0
      %1223 = vmatpush1.msra.mxu0 0.0
      %1224 = vmatprep.subr.mxu0 0.0
      %1225 = vmatpush1.msra.mxu0 0.0
      %1226 = vmatprep.subr.mxu0 0.0
      %1227 = vmatpush1.msra.mxu0 0.0
      %1228 = vmatprep.subr.mxu0 0.0
      %1229 = vmatpush1.msra.mxu0 0.0
      %1230 = vmatprep.subr.mxu0 0.0
      %1231 = vmatpush1.msra.mxu0 0.0
      %1232 = vmatprep.subr.mxu0 0.0
      %1233 = vmatpush1.msra.mxu0 0.0
      %1234 = vmatprep.mubr.f32.mxu0 0.0
      %1235 = vmatmul.mubr.f32.gmra.mrb[0].mxu0 %v1097
      %v1236 = vpop.f32.mrb[0].mxu0
      %v1237 = vadd.f32 %v1094, %v1236
      %v1238 = vpop.f32.mrb[0].mxu0
      %v1239 = vadd.f32 %v1094, %v1238
      %1240 = vdwg.mxu0
      %1241 = vmatprep.subr.mxu0 0.0
      %1242 = vmatpush1.msra.mxu0 %v1020
      %1243 = vmatprep.subr.mxu0 0.0
      %1244 = vmatpush1.msra.mxu0 %v1036
      %1245 = vmatprep.subr.mxu0 0.0
      %1246 = vmatpush1.msra.mxu0 %v1052
      %1247 = vmatprep.subr.mxu0 0.0
      %1248 = vmatpush1.msra.mxu0 %v1068
      %1249 = vmatprep.subr.mxu0 0.0
      %1250 = vmatpush1.msra.mxu0 %v1008
      %1251 = vmatprep.subr.mxu0 0.0
      %1252 = vmatpush1.msra.mxu0 %v1088
      %1253 = vmatprep.subr.mxu0 0.0
      %1254 = vmatpush1.msra.mxu0 %v1024
      %1255 = vmatprep.subr.mxu0 0.0
      %1256 = vmatpush1.msra.mxu0 %v1040
      %1257 = vmatprep.subr.mxu0 0.0
      %1258 = vmatpush1.msra.mxu0 %v1056
      %1259 = vmatprep.subr.mxu0 0.0
      %1260 = vmatpush1.msra.mxu0 0.0
      %1261 = vmatprep.subr.mxu0 0.0
      %1262 = vmatpush1.msra.mxu0 0.0
      %1263 = vmatprep.subr.mxu0 0.0
      %1264 = vmatpush1.msra.mxu0 0.0
      %1265 = vmatprep.subr.mxu0 0.0
      %1266 = vmatpush1.msra.mxu0 0.0
      %1267 = vmatprep.subr.mxu0 0.0
      %1268 = vmatpush1.msra.mxu0 0.0
      %1269 = vmatprep.subr.mxu0 0.0
      %1270 = vmatpush1.msra.mxu0 0.0
      %1271 = vmatprep.subr.mxu0 0.0
      %1272 = vmatpush1.msra.mxu0 0.0
      %1273 = vmatprep.subr.mxu0 0.0
      %1274 = vmatpush1.msra.mxu0 0.0
      %1275 = vmatprep.subr.mxu0 0.0
      %1276 = vmatpush1.msra.mxu0 0.0
      %1277 = vmatprep.subr.mxu0 0.0
      %1278 = vmatpush1.msra.mxu0 0.0
      %1279 = vmatprep.subr.mxu0 0.0
      %1280 = vmatpush1.msra.mxu0 0.0
      %1281 = vmatprep.subr.mxu0 0.0
      %1282 = vmatpush1.msra.mxu0 0.0
      %1283 = vmatprep.subr.mxu0 0.0
      %1284 = vmatpush1.msra.mxu0 0.0
      %1285 = vmatprep.subr.mxu0 0.0
      %1286 = vmatpush1.msra.mxu0 0.0
      %1287 = vmatprep.subr.mxu0 0.0
      %1288 = vmatpush1.msra.mxu0 0.0
      %1289 = vmatprep.subr.mxu0 0.0
      %1290 = vmatpush1.msra.mxu0 0.0
      %1291 = vmatprep.subr.mxu0 0.0
      %1292 = vmatpush1.msra.mxu0 0.0
      %1293 = vmatprep.subr.mxu0 0.0
      %1294 = vmatpush1.msra.mxu0 0.0
      %1295 = vmatprep.subr.mxu0 0.0
      %1296 = vmatpush1.msra.mxu0 0.0
      %1297 = vmatprep.subr.mxu0 0.0
      %1298 = vmatpush1.msra.mxu0 0.0
      %1299 = vmatprep.subr.mxu0 0.0
      %1300 = vmatpush1.msra.mxu0 0.0
      %1301 = vmatprep.subr.mxu0 0.0
      %1302 = vmatpush1.msra.mxu0 0.0
      %1303 = vmatprep.subr.mxu0 0.0
      %1304 = vmatpush1.msra.mxu0 0.0
      %1305 = vmatprep.mubr.f32.mxu0 0.0
      %1306 = vmatmul.mubr.f32.gmra.mrb[0].mxu0 %v1097
      %v1307 = vpop.f32.mrb[0].mxu0
      %v1308 = vadd.f32 %v1094, %v1307
      %v1309 = vpop.f32.mrb[0].mxu0
      %1310 = vdwg.mxu0
      %v1311 = vmul.f32 %v1166, %v931
      %v1312 = vmul.f32 %v1168, %v935
      %v1313 = vmul.f32 %v1237, %v939
      %v1314 = vmul.f32 %v1239, %v943
      %v1315 = vmul.f32 %v1308, %v947
      %vm1316 = vcmp.gt.f32.partialorder %v1311, 0.0
      %vm1317 = vcmp.gt.f32.partialorder %v1312, 0.0
      %vm1318 = vcmp.gt.f32.partialorder %v1313, 0.0
      %vm1319 = vcmp.gt.f32.partialorder %v1314, 0.0
      %vm1320 = vcmp.gt.f32.partialorder %v1315, 0.0
      %v1321 = vmul.f32 %v1311, 0.4
      %v1322 = vmul.f32 %v1312, 0.4
      %v1323 = vmul.f32 %v1313, 0.4
      %v1324 = vmul.f32 %v1314, 0.4
      %v1325 = vmul.f32 %v1315, 0.4
      %v1326 = vsel %vm1316, %v1311, %v1321
      %v1327 = vsel %vm1317, %v1312, %v1322
      %v1328 = vsel %vm1318, %v1313, %v1323
      %v1329 = vsel %vm1319, %v1314, %v1324
      %v1330 = vsel %vm1320, %v1315, %v1325
      %1331 = vrot.lane.b32.xlu0 %v1326, 66
      %v1332 = vpop.permute.xlu0 %1331
      %1333 = vrot.lane.b32.xlu0 %v1327, 66
      %v1334 = vpop.permute.xlu0 %1333
      %1335 = vrot.lane.b32.xlu0 %v1328, 66
      %v1336 = vpop.permute.xlu0 %1335
      %1337 = vrot.lane.b32.xlu0 %v1329, 66
      %v1338 = vpop.permute.xlu0 %1337
      %1339 = vrot.lane.b32.xlu0 %v1330, 66
      %v1340 = vpop.permute.xlu0 %1339
      %v1341 = vsel %vm1019, %v1338, %v1340
      %v1342 = vsel %vm1019, %v1336, %v1338
      %v1343 = vsel %vm1019, %v1334, %v1336
      %v1344 = vsel %vm1019, %v1332, %v1334
      %v1345 = vsel %vm1019, %v1340, %v1332
      %1346 = vrot.lane.b32.xlu0 %v1326, 64
      %v1347 = vpop.permute.xlu0 %1346
      %1348 = vrot.lane.b32.xlu0 %v1327, 64
      %v1349 = vpop.permute.xlu0 %1348
      %1350 = vrot.lane.b32.xlu0 %v1328, 64
      %v1351 = vpop.permute.xlu0 %1350
      %1352 = vrot.lane.b32.xlu0 %v1329, 64
      %v1353 = vpop.permute.xlu0 %1352
      %1354 = vrot.lane.b32.xlu0 %v1330, 64
      %v1355 = vpop.permute.xlu0 %1354
      %v1356 = vsel %vm1035, %v1353, %v1355
      %v1357 = vsel %vm1035, %v1351, %v1353
      %v1358 = vsel %vm1035, %v1349, %v1351
      %v1359 = vsel %vm1035, %v1347, %v1349
      %v1360 = vsel %vm1035, %v1355, %v1347
      %1361 = vrot.lane.b32.xlu0 %v1326, 62
      %v1362 = vpop.permute.xlu0 %1361
      %1363 = vrot.lane.b32.xlu0 %v1327, 62
      %v1364 = vpop.permute.xlu0 %1363
      %1365 = vrot.lane.b32.xlu0 %v1328, 62
      %v1366 = vpop.permute.xlu0 %1365
      %1367 = vrot.lane.b32.xlu0 %v1329, 62
      %v1368 = vpop.permute.xlu0 %1367
      %1369 = vrot.lane.b32.xlu0 %v1330, 62
      %v1370 = vpop.permute.xlu0 %1369
      %v1371 = vsel %vm1051, %v1368, %v1370
      %v1372 = vsel %vm1051, %v1366, %v1368
      %v1373 = vsel %vm1051, %v1364, %v1366
      %v1374 = vsel %vm1051, %v1362, %v1364
      %v1375 = vsel %vm1051, %v1370, %v1362
      %1376 = vrot.lane.b32.xlu0 %v1326, 2
      %v1377 = vpop.permute.xlu0 %1376
      %1378 = vrot.lane.b32.xlu0 %v1327, 2
      %v1379 = vpop.permute.xlu0 %1378
      %1380 = vrot.lane.b32.xlu0 %v1328, 2
      %v1381 = vpop.permute.xlu0 %1380
      %1382 = vrot.lane.b32.xlu0 %v1329, 2
      %v1383 = vpop.permute.xlu0 %1382
      %1384 = vrot.lane.b32.xlu0 %v1330, 2
      %v1385 = vpop.permute.xlu0 %1384
      %v1386 = vsel %vm1067, %v1383, %v1385
      %v1387 = vsel %vm1067, %v1381, %v1383
      %v1388 = vsel %vm1067, %v1379, %v1381
      %v1389 = vsel %vm1067, %v1377, %v1379
      %v1390 = vsel %vm1067, %v1385, %v1377
      %1391 = vrot.lane.b32.xlu0 %v1326, 126
      %v1392 = vpop.permute.xlu0 %1391
      %1393 = vrot.lane.b32.xlu0 %v1327, 126
      %v1394 = vpop.permute.xlu0 %1393
      %1395 = vrot.lane.b32.xlu0 %v1328, 126
      %v1396 = vpop.permute.xlu0 %1395
      %1397 = vrot.lane.b32.xlu0 %v1329, 126
      %v1398 = vpop.permute.xlu0 %1397
      %1399 = vrot.lane.b32.xlu0 %v1330, 126
      %v1400 = vpop.permute.xlu0 %1399
      %v1401 = vsel %vm1083, %v1398, %v1400
      %v1402 = vsel %vm1083, %v1396, %v1398
      %v1403 = vsel %vm1083, %v1394, %v1396
      %v1404 = vsel %vm1083, %v1392, %v1394
      %v1405 = vsel %vm1083, %v1400, %v1392
      %v1406 = vld [vmem:[%s6] sm:$0xff]
      %v1407 = vld [vmem:[%s7] sm:$0xff]
      %1409 = vset.pattern.permute.xlu0 0
      %1410 = vperm.xlu0 %1409, %v1407
      %v1411 = vpop.permute.xlu0 %1410
      %v1414 = vsel %vm711, %v1406, 0
      %1416 = vmatprep.subr.mxu0 %v1344
      %1417 = vmatpush1.msra.mxu0 %v1345
      %1418 = vmatprep.subr.mxu0 %v1359
      %1419 = vmatpush1.msra.mxu0 %v1360
      %1420 = vmatprep.subr.mxu0 %v1374
      %1421 = vmatpush1.msra.mxu0 %v1375
      %1422 = vmatprep.subr.mxu0 %v1389
      %1423 = vmatpush1.msra.mxu0 %v1390
      %1424 = vmatprep.subr.mxu0 %v1327
      %1425 = vmatpush1.msra.mxu0 %v1326
      %1426 = vmatprep.subr.mxu0 %v1403
      %1427 = vmatpush1.msra.mxu0 %v1404
      %1428 = vmatprep.subr.mxu0 %v1343
      %1429 = vmatpush1.msra.mxu0 %v1344
      %1430 = vmatprep.subr.mxu0 %v1358
      %1431 = vmatpush1.msra.mxu0 %v1359
      %1432 = vmatprep.subr.mxu0 %v1373
      %1433 = vmatpush1.msra.mxu0 %v1374
      %1434 = vmatprep.subr.mxu0 0.0
      %1435 = vmatpush1.msra.mxu0 0.0
      %1436 = vmatprep.subr.mxu0 0.0
      %1437 = vmatpush1.msra.mxu0 0.0
      %1438 = vmatprep.subr.mxu0 0.0
      %1439 = vmatpush1.msra.mxu0 0.0
      %1440 = vmatprep.subr.mxu0 0.0
      %1441 = vmatpush1.msra.mxu0 0.0
      %1442 = vmatprep.subr.mxu0 0.0
      %1443 = vmatpush1.msra.mxu0 0.0
      %1444 = vmatprep.subr.mxu0 0.0
      %1445 = vmatpush1.msra.mxu0 0.0
      %1446 = vmatprep.subr.mxu0 0.0
      %1447 = vmatpush1.msra.mxu0 0.0
      %1448 = vmatprep.subr.mxu0 0.0
      %1449 = vmatpush1.msra.mxu0 0.0
      %1450 = vmatprep.subr.mxu0 0.0
      %1451 = vmatpush1.msra.mxu0 0.0
      %1452 = vmatprep.subr.mxu0 0.0
      %1453 = vmatpush1.msra.mxu0 0.0
      %1454 = vmatprep.subr.mxu0 0.0
      %1455 = vmatpush1.msra.mxu0 0.0
      %1456 = vmatprep.subr.mxu0 0.0
      %1457 = vmatpush1.msra.mxu0 0.0
      %1458 = vmatprep.subr.mxu0 0.0
      %1459 = vmatpush1.msra.mxu0 0.0
      %1460 = vmatprep.subr.mxu0 0.0
      %1461 = vmatpush1.msra.mxu0 0.0
      %1462 = vmatprep.subr.mxu0 0.0
      %1463 = vmatpush1.msra.mxu0 0.0
      %1464 = vmatprep.subr.mxu0 0.0
      %1465 = vmatpush1.msra.mxu0 0.0
      %1466 = vmatprep.subr.mxu0 0.0
      %1467 = vmatpush1.msra.mxu0 0.0
      %1468 = vmatprep.subr.mxu0 0.0
      %1469 = vmatpush1.msra.mxu0 0.0
      %1470 = vmatprep.subr.mxu0 0.0
      %1471 = vmatpush1.msra.mxu0 0.0
      %1472 = vmatprep.subr.mxu0 0.0
      %1473 = vmatpush1.msra.mxu0 0.0
      %1474 = vmatprep.subr.mxu0 0.0
      %1475 = vmatpush1.msra.mxu0 0.0
      %1476 = vmatprep.subr.mxu0 0.0
      %1477 = vmatpush1.msra.mxu0 0.0
      %1478 = vmatprep.subr.mxu0 0.0
      %1479 = vmatpush1.msra.mxu0 0.0
      %1480 = vmatprep.mubr.f32.mxu0 0.0
      %1481 = vmatmul.mubr.f32.gmra.mrb[0].mxu0 %v1414
      %v1482 = vpop.f32.mrb[0].mxu0
      %v1483 = vadd.f32 %v1411, %v1482
      %v1484 = vpop.f32.mrb[0].mxu0
      %v1485 = vadd.f32 %v1411, %v1484
      %1486 = vdwg.mxu0
      %1487 = vmatprep.subr.mxu0 %v1342
      %1488 = vmatpush1.msra.mxu0 %v1343
      %1489 = vmatprep.subr.mxu0 %v1357
      %1490 = vmatpush1.msra.mxu0 %v1358
      %1491 = vmatprep.subr.mxu0 %v1372
      %1492 = vmatpush1.msra.mxu0 %v1373
      %1493 = vmatprep.subr.mxu0 %v1387
      %1494 = vmatpush1.msra.mxu0 %v1388
      %1495 = vmatprep.subr.mxu0 %v1329
      %1496 = vmatpush1.msra.mxu0 %v1328
      %1497 = vmatprep.subr.mxu0 %v1401
      %1498 = vmatpush1.msra.mxu0 %v1402
      %1499 = vmatprep.subr.mxu0 %v1341
      %1500 = vmatpush1.msra.mxu0 %v1342
      %1501 = vmatprep.subr.mxu0 %v1356
      %1502 = vmatpush1.msra.mxu0 %v1357
      %1503 = vmatprep.subr.mxu0 %v1371
      %1504 = vmatpush1.msra.mxu0 %v1372
      %1505 = vmatprep.subr.mxu0 0.0
      %1506 = vmatpush1.msra.mxu0 0.0
      %1507 = vmatprep.subr.mxu0 0.0
      %1508 = vmatpush1.msra.mxu0 0.0
      %1509 = vmatprep.subr.mxu0 0.0
      %1510 = vmatpush1.msra.mxu0 0.0
      %1511 = vmatprep.subr.mxu0 0.0
      %1512 = vmatpush1.msra.mxu0 0.0
      %1513 = vmatprep.subr.mxu0 0.0
      %1514 = vmatpush1.msra.mxu0 0.0
      %1515 = vmatprep.subr.mxu0 0.0
      %1516 = vmatpush1.msra.mxu0 0.0
      %1517 = vmatprep.subr.mxu0 0.0
      %1518 = vmatpush1.msra.mxu0 0.0
      %1519 = vmatprep.subr.mxu0 0.0
      %1520 = vmatpush1.msra.mxu0 0.0
      %1521 = vmatprep.subr.mxu0 0.0
      %1522 = vmatpush1.msra.mxu0 0.0
      %1523 = vmatprep.subr.mxu0 0.0
      %1524 = vmatpush1.msra.mxu0 0.0
      %1525 = vmatprep.subr.mxu0 0.0
      %1526 = vmatpush1.msra.mxu0 0.0
      %1527 = vmatprep.subr.mxu0 0.0
      %1528 = vmatpush1.msra.mxu0 0.0
      %1529 = vmatprep.subr.mxu0 0.0
      %1530 = vmatpush1.msra.mxu0 0.0
      %1531 = vmatprep.subr.mxu0 0.0
      %1532 = vmatpush1.msra.mxu0 0.0
      %1533 = vmatprep.subr.mxu0 0.0
      %1534 = vmatpush1.msra.mxu0 0.0
      %1535 = vmatprep.subr.mxu0 0.0
      %1536 = vmatpush1.msra.mxu0 0.0
      %1537 = vmatprep.subr.mxu0 0.0
      %1538 = vmatpush1.msra.mxu0 0.0
      %1539 = vmatprep.subr.mxu0 0.0
      %1540 = vmatpush1.msra.mxu0 0.0
      %1541 = vmatprep.subr.mxu0 0.0
      %1542 = vmatpush1.msra.mxu0 0.0
      %1543 = vmatprep.subr.mxu0 0.0
      %1544 = vmatpush1.msra.mxu0 0.0
      %1545 = vmatprep.subr.mxu0 0.0
      %1546 = vmatpush1.msra.mxu0 0.0
      %1547 = vmatprep.subr.mxu0 0.0
      %1548 = vmatpush1.msra.mxu0 0.0
      %1549 = vmatprep.subr.mxu0 0.0
      %1550 = vmatpush1.msra.mxu0 0.0
      %1551 = vmatprep.mubr.f32.mxu0 0.0
      %1552 = vmatmul.mubr.f32.gmra.mrb[0].mxu0 %v1414
      %v1553 = vpop.f32.mrb[0].mxu0
      %v1554 = vadd.f32 %v1411, %v1553
      %v1555 = vpop.f32.mrb[0].mxu0
      %v1556 = vadd.f32 %v1411, %v1555
      %1557 = vdwg.mxu0
      %1558 = vmatprep.subr.mxu0 0.0
      %1559 = vmatpush1.msra.mxu0 %v1341
      %1560 = vmatprep.subr.mxu0 0.0
      %1561 = vmatpush1.msra.mxu0 %v1356
      %1562 = vmatprep.subr.mxu0 0.0
      %1563 = vmatpush1.msra.mxu0 %v1371
      %1564 = vmatprep.subr.mxu0 0.0
      %1565 = vmatpush1.msra.mxu0 %v1386
      %1566 = vmatprep.subr.mxu0 0.0
      %1567 = vmatpush1.msra.mxu0 %v1330
      %1568 = vmatprep.subr.mxu0 0.0
      %1569 = vmatpush1.msra.mxu0 %v1405
      %1570 = vmatprep.subr.mxu0 0.0
      %1571 = vmatpush1.msra.mxu0 %v1345
      %1572 = vmatprep.subr.mxu0 0.0
      %1573 = vmatpush1.msra.mxu0 %v1360
      %1574 = vmatprep.subr.mxu0 0.0
      %1575 = vmatpush1.msra.mxu0 %v1375
      %1576 = vmatprep.subr.mxu0 0.0
      %1577 = vmatpush1.msra.mxu0 0.0
      %1578 = vmatprep.subr.mxu0 0.0
      %1579 = vmatpush1.msra.mxu0 0.0
      %1580 = vmatprep.subr.mxu0 0.0
      %1581 = vmatpush1.msra.mxu0 0.0
      %1582 = vmatprep.subr.mxu0 0.0
      %1583 = vmatpush1.msra.mxu0 0.0
      %1584 = vmatprep.subr.mxu0 0.0
      %1585 = vmatpush1.msra.mxu0 0.0
      %1586 = vmatprep.subr.mxu0 0.0
      %1587 = vmatpush1.msra.mxu0 0.0
      %1588 = vmatprep.subr.mxu0 0.0
      %1589 = vmatpush1.msra.mxu0 0.0
      %1590 = vmatprep.subr.mxu0 0.0
      %1591 = vmatpush1.msra.mxu0 0.0
      %1592 = vmatprep.subr.mxu0 0.0
      %1593 = vmatpush1.msra.mxu0 0.0
      %1594 = vmatprep.subr.mxu0 0.0
      %1595 = vmatpush1.msra.mxu0 0.0
      %1596 = vmatprep.subr.mxu0 0.0
      %1597 = vmatpush1.msra.mxu0 0.0
      %1598 = vmatprep.subr.mxu0 0.0
      %1599 = vmatpush1.msra.mxu0 0.0
      %1600 = vmatprep.subr.mxu0 0.0
      %1601 = vmatpush1.msra.mxu0 0.0
      %1602 = vmatprep.subr.mxu0 0.0
      %1603 = vmatpush1.msra.mxu0 0.0
      %1604 = vmatprep.subr.mxu0 0.0
      %1605 = vmatpush1.msra.mxu0 0.0
      %1606 = vmatprep.subr.mxu0 0.0
      %1607 = vmatpush1.msra.mxu0 0.0
      %1608 = vmatprep.subr.mxu0 0.0
      %1609 = vmatpush1.msra.mxu0 0.0
      %1610 = vmatprep.subr.mxu0 0.0
      %1611 = vmatpush1.msra.mxu0 0.0
      %1612 = vmatprep.subr.mxu0 0.0
      %1613 = vmatpush1.msra.mxu0 0.0
      %1614 = vmatprep.subr.mxu0 0.0
      %1615 = vmatpush1.msra.mxu0 0.0
      %1616 = vmatprep.subr.mxu0 0.0
      %1617 = vmatpush1.msra.mxu0 0.0
      %1618 = vmatprep.subr.mxu0 0.0
      %1619 = vmatpush1.msra.mxu0 0.0
      %1620 = vmatprep.subr.mxu0 0.0
      %1621 = vmatpush1.msra.mxu0 0.0
      %1622 = vmatprep.mubr.f32.mxu0 0.0
      %1623 = vmatmul.mubr.f32.gmra.mrb[0].mxu0 %v1414
      %v1624 = vpop.f32.mrb[0].mxu0
      %v1625 = vadd.f32 %v1411, %v1624
      %v1626 = vpop.f32.mrb[0].mxu0
      %1627 = vdwg.mxu0
      %v1628 = vmul.f32 %v1483, %v931
      %v1629 = vmul.f32 %v1485, %v935
      %v1630 = vmul.f32 %v1554, %v939
      %v1631 = vmul.f32 %v1556, %v943
      %v1632 = vmul.f32 %v1625, %v947
      %vm1633 = vcmp.gt.f32.partialorder %v1628, 0.0
      %vm1634 = vcmp.gt.f32.partialorder %v1629, 0.0
      %vm1635 = vcmp.gt.f32.partialorder %v1630, 0.0
      %vm1636 = vcmp.gt.f32.partialorder %v1631, 0.0
      %vm1637 = vcmp.gt.f32.partialorder %v1632, 0.0
      %v1638 = vmul.f32 %v1628, 0.4
      %v1639 = vmul.f32 %v1629, 0.4
      %v1640 = vmul.f32 %v1630, 0.4
      %v1641 = vmul.f32 %v1631, 0.4
      %v1642 = vmul.f32 %v1632, 0.4
      %v1643 = vsel %vm1633, %v1628, %v1638
      %v1644 = vsel %vm1634, %v1629, %v1639
      %v1645 = vsel %vm1635, %v1630, %v1640
      %v1646 = vsel %vm1636, %v1631, %v1641
      %v1647 = vsel %vm1637, %v1632, %v1642
      %1648 = vrot.lane.b32.xlu0 %v1643, 33
      %v1649 = vpop.permute.xlu0 %1648
      %1650 = vrot.lane.b32.xlu0 %v1644, 33
      %v1651 = vpop.permute.xlu0 %1650
      %1652 = vrot.lane.b32.xlu0 %v1645, 33
      %v1653 = vpop.permute.xlu0 %1652
      %1654 = vrot.lane.b32.xlu0 %v1646, 33
      %v1655 = vpop.permute.xlu0 %1654
      %1656 = vrot.lane.b32.xlu0 %v1647, 33
      %v1657 = vpop.permute.xlu0 %1656
      %v1658 = vsel %vm592, %v1655, %v1657
      %v1659 = vsel %vm592, %v1653, %v1655
      %v1660 = vsel %vm592, %v1651, %v1653
      %v1661 = vsel %vm592, %v1649, %v1651
      %v1662 = vsel %vm592, %v1657, %v1649
      %1663 = vrot.lane.b32.xlu0 %v1643, 32
      %v1664 = vpop.permute.xlu0 %1663
      %1665 = vrot.lane.b32.xlu0 %v1644, 32
      %v1666 = vpop.permute.xlu0 %1665
      %1667 = vrot.lane.b32.xlu0 %v1645, 32
      %v1668 = vpop.permute.xlu0 %1667
      %1669 = vrot.lane.b32.xlu0 %v1646, 32
      %v1670 = vpop.permute.xlu0 %1669
      %1671 = vrot.lane.b32.xlu0 %v1647, 32
      %v1672 = vpop.permute.xlu0 %1671
      %v1673 = vsel %vm608, %v1670, %v1672
      %v1674 = vsel %vm608, %v1668, %v1670
      %v1675 = vsel %vm608, %v1666, %v1668
      %v1676 = vsel %vm608, %v1664, %v1666
      %v1677 = vsel %vm608, %v1672, %v1664
      %1678 = vrot.lane.b32.xlu0 %v1643, 31
      %v1679 = vpop.permute.xlu0 %1678
      %1680 = vrot.lane.b32.xlu0 %v1644, 31
      %v1681 = vpop.permute.xlu0 %1680
      %1682 = vrot.lane.b32.xlu0 %v1645, 31
      %v1683 = vpop.permute.xlu0 %1682
      %1684 = vrot.lane.b32.xlu0 %v1646, 31
      %v1685 = vpop.permute.xlu0 %1684
      %1686 = vrot.lane.b32.xlu0 %v1647, 31
      %v1687 = vpop.permute.xlu0 %1686
      %v1688 = vsel %vm624, %v1685, %v1687
      %v1689 = vsel %vm624, %v1683, %v1685
      %v1690 = vsel %vm624, %v1681, %v1683
      %v1691 = vsel %vm624, %v1679, %v1681
      %v1692 = vsel %vm624, %v1687, %v1679
      %1693 = vrot.lane.b32.xlu0 %v1643, 1
      %v1694 = vpop.permute.xlu0 %1693
      %1695 = vrot.lane.b32.xlu0 %v1644, 1
      %v1696 = vpop.permute.xlu0 %1695
      %1697 = vrot.lane.b32.xlu0 %v1645, 1
      %v1698 = vpop.permute.xlu0 %1697
      %1699 = vrot.lane.b32.xlu0 %v1646, 1
      %v1700 = vpop.permute.xlu0 %1699
      %1701 = vrot.lane.b32.xlu0 %v1647, 1
      %v1702 = vpop.permute.xlu0 %1701
      %v1703 = vsel %vm640, %v1700, %v1702
      %v1704 = vsel %vm640, %v1698, %v1700
      %v1705 = vsel %vm640, %v1696, %v1698
      %v1706 = vsel %vm640, %v1694, %v1696
      %v1707 = vsel %vm640, %v1702, %v1694
      %1708 = vrot.lane.b32.xlu0 %v1643, 127
      %v1709 = vpop.permute.xlu0 %1708
      %1710 = vrot.lane.b32.xlu0 %v1644, 127
      %v1711 = vpop.permute.xlu0 %1710
      %1712 = vrot.lane.b32.xlu0 %v1645, 127
      %v1713 = vpop.permute.xlu0 %1712
      %1714 = vrot.lane.b32.xlu0 %v1646, 127
      %v1715 = vpop.permute.xlu0 %1714
      %1716 = vrot.lane.b32.xlu0 %v1647, 127
      %v1717 = vpop.permute.xlu0 %1716
      %v1718 = vsel %vm656, %v1715, %v1717
      %v1719 = vsel %vm656, %v1713, %v1715
      %v1720 = vsel %vm656, %v1711, %v1713
      %v1721 = vsel %vm656, %v1709, %v1711
      %v1722 = vsel %vm656, %v1717, %v1709
      %1723 = vrot.lane.b32.xlu0 %v1643, 97
      %v1724 = vpop.permute.xlu0 %1723
      %1725 = vrot.lane.b32.xlu0 %v1644, 97
      %v1726 = vpop.permute.xlu0 %1725
      %1727 = vrot.lane.b32.xlu0 %v1645, 97
      %v1728 = vpop.permute.xlu0 %1727
      %1729 = vrot.lane.b32.xlu0 %v1646, 97
      %v1730 = vpop.permute.xlu0 %1729
      %1731 = vrot.lane.b32.xlu0 %v1647, 97
      %v1732 = vpop.permute.xlu0 %1731
      %v1733 = vsel %vm672, %v1730, %v1732
      %v1734 = vsel %vm672, %v1728, %v1730
      %v1735 = vsel %vm672, %v1726, %v1728
      %v1736 = vsel %vm672, %v1724, %v1726
      %v1737 = vsel %vm672, %v1732, %v1724
      %1738 = vrot.lane.b32.xlu0 %v1643, 96
      %v1739 = vpop.permute.xlu0 %1738
      %1740 = vrot.lane.b32.xlu0 %v1644, 96
      %v1741 = vpop.permute.xlu0 %1740
      %1742 = vrot.lane.b32.xlu0 %v1645, 96
      %v1743 = vpop.permute.xlu0 %1742
      %1744 = vrot.lane.b32.xlu0 %v1646, 96
      %v1745 = vpop.permute.xlu0 %1744
      %1746 = vrot.lane.b32.xlu0 %v1647, 96
      %v1747 = vpop.permute.xlu0 %1746
      %v1748 = vsel %vm688, %v1745, %v1747
      %v1749 = vsel %vm688, %v1743, %v1745
      %v1750 = vsel %vm688, %v1741, %v1743
      %v1751 = vsel %vm688, %v1739, %v1741
      %v1752 = vsel %vm688, %v1747, %v1739
      %1753 = vrot.lane.b32.xlu0 %v1643, 95
      %v1754 = vpop.permute.xlu0 %1753
      %1755 = vrot.lane.b32.xlu0 %v1644, 95
      %v1756 = vpop.permute.xlu0 %1755
      %1757 = vrot.lane.b32.xlu0 %v1645, 95
      %v1758 = vpop.permute.xlu0 %1757
      %1759 = vrot.lane.b32.xlu0 %v1646, 95
      %v1760 = vpop.permute.xlu0 %1759
      %1761 = vrot.lane.b32.xlu0 %v1647, 95
      %v1762 = vpop.permute.xlu0 %1761
      %v1763 = vsel %vm704, %v1760, %v1762
      %v1764 = vsel %vm704, %v1758, %v1760
      %v1765 = vsel %vm704, %v1756, %v1758
      %v1766 = vsel %vm704, %v1754, %v1756
      %v1767 = vsel %vm704, %v1762, %v1754
      %v1768 = vld [vmem:[%s8] sm:$0xff]
      %v1770 = vsel %vm711, %v1768, 0
      %1772 = vmatprep.subr.mxu0 %v1661
      %1773 = vmatpush1.msra.mxu0 %v1662
      %1774 = vmatprep.subr.mxu0 %v1676
      %1775 = vmatpush1.msra.mxu0 %v1677
      %1776 = vmatprep.subr.mxu0 %v1691
      %1777 = vmatpush1.msra.mxu0 %v1692
      %1778 = vmatprep.subr.mxu0 %v1706
      %1779 = vmatpush1.msra.mxu0 %v1707
      %1780 = vmatprep.subr.mxu0 %v1644
      %1781 = vmatpush1.msra.mxu0 %v1643
      %1782 = vmatprep.subr.mxu0 %v1720
      %1783 = vmatpush1.msra.mxu0 %v1721
      %1784 = vmatprep.subr.mxu0 %v1735
      %1785 = vmatpush1.msra.mxu0 %v1736
      %1786 = vmatprep.subr.mxu0 %v1750
      %1787 = vmatpush1.msra.mxu0 %v1751
      %1788 = vmatprep.subr.mxu0 %v1765
      %1789 = vmatpush1.msra.mxu0 %v1766
      %1790 = vmatprep.subr.mxu0 0.0
      %1791 = vmatpush1.msra.mxu0 0.0
      %1792 = vmatprep.subr.mxu0 0.0
      %1793 = vmatpush1.msra.mxu0 0.0
      %1794 = vmatprep.subr.mxu0 0.0
      %1795 = vmatpush1.msra.mxu0 0.0
      %1796 = vmatprep.subr.mxu0 0.0
      %1797 = vmatpush1.msra.mxu0 0.0
      %1798 = vmatprep.subr.mxu0 0.0
      %1799 = vmatpush1.msra.mxu0 0.0
      %1800 = vmatprep.subr.mxu0 0.0
      %1801 = vmatpush1.msra.mxu0 0.0
      %1802 = vmatprep.subr.mxu0 0.0
      %1803 = vmatpush1.msra.mxu0 0.0
      %1804 = vmatprep.subr.mxu0 0.0
      %1805 = vmatpush1.msra.mxu0 0.0
      %1806 = vmatprep.subr.mxu0 0.0
      %1807 = vmatpush1.msra.mxu0 0.0
      %1808 = vmatprep.subr.mxu0 0.0
      %1809 = vmatpush1.msra.mxu0 0.0
      %1810 = vmatprep.subr.mxu0 0.0
      %1811 = vmatpush1.msra.mxu0 0.0
      %1812 = vmatprep.subr.mxu0 0.0
      %1813 = vmatpush1.msra.mxu0 0.0
      %1814 = vmatprep.subr.mxu0 0.0
      %1815 = vmatpush1.msra.mxu0 0.0
      %1816 = vmatprep.subr.mxu0 0.0
      %1817 = vmatpush1.msra.mxu0 0.0
      %1818 = vmatprep.subr.mxu0 0.0
      %1819 = vmatpush1.msra.mxu0 0.0
      %1820 = vmatprep.subr.mxu0 0.0
      %1821 = vmatpush1.msra.mxu0 0.0
      %1822 = vmatprep.subr.mxu0 0.0
      %1823 = vmatpush1.msra.mxu0 0.0
      %1824 = vmatprep.subr.mxu0 0.0
      %1825 = vmatpush1.msra.mxu0 0.0
      %1826 = vmatprep.subr.mxu0 0.0
      %1827 = vmatpush1.msra.mxu0 0.0
      %1828 = vmatprep.subr.mxu0 0.0
      %1829 = vmatpush1.msra.mxu0 0.0
      %1830 = vmatprep.subr.mxu0 0.0
      %1831 = vmatpush1.msra.mxu0 0.0
      %1832 = vmatprep.subr.mxu0 0.0
      %1833 = vmatpush1.msra.mxu0 0.0
      %1834 = vmatprep.subr.mxu0 0.0
      %1835 = vmatpush1.msra.mxu0 0.0
      %1836 = vmatprep.mubr.f32.mxu0 0.0
      %1837 = vmatmul.mubr.f32.gmra.mrb[0].mxu0 %v1770
      %v1838 = vpop.f32.mrb[0].mxu0
      %v1839 = vadd.f32 0.0, %v1838
      %v1840 = vpop.f32.mrb[0].mxu0
      %v1841 = vadd.f32 0.0, %v1840
      %1842 = vdwg.mxu0
      %1843 = vmatprep.subr.mxu0 %v1659
      %1844 = vmatpush1.msra.mxu0 %v1660
      %1845 = vmatprep.subr.mxu0 %v1674
      %1846 = vmatpush1.msra.mxu0 %v1675
      %1847 = vmatprep.subr.mxu0 %v1689
      %1848 = vmatpush1.msra.mxu0 %v1690
      %1849 = vmatprep.subr.mxu0 %v1704
      %1850 = vmatpush1.msra.mxu0 %v1705
      %1851 = vmatprep.subr.mxu0 %v1646
      %1852 = vmatpush1.msra.mxu0 %v1645
      %1853 = vmatprep.subr.mxu0 %v1718
      %1854 = vmatpush1.msra.mxu0 %v1719
      %1855 = vmatprep.subr.mxu0 %v1733
      %1856 = vmatpush1.msra.mxu0 %v1734
      %1857 = vmatprep.subr.mxu0 %v1748
      %1858 = vmatpush1.msra.mxu0 %v1749
      %1859 = vmatprep.subr.mxu0 %v1763
      %1860 = vmatpush1.msra.mxu0 %v1764
      %1861 = vmatprep.subr.mxu0 0.0
      %1862 = vmatpush1.msra.mxu0 0.0
      %1863 = vmatprep.subr.mxu0 0.0
      %1864 = vmatpush1.msra.mxu0 0.0
      %1865 = vmatprep.subr.mxu0 0.0
      %1866 = vmatpush1.msra.mxu0 0.0
      %1867 = vmatprep.subr.mxu0 0.0
      %1868 = vmatpush1.msra.mxu0 0.0
      %1869 = vmatprep.subr.mxu0 0.0
      %1870 = vmatpush1.msra.mxu0 0.0
      %1871 = vmatprep.subr.mxu0 0.0
      %1872 = vmatpush1.msra.mxu0 0.0
      %1873 = vmatprep.subr.mxu0 0.0
      %1874 = vmatpush1.msra.mxu0 0.0
      %1875 = vmatprep.subr.mxu0 0.0
      %1876 = vmatpush1.msra.mxu0 0.0
      %1877 = vmatprep.subr.mxu0 0.0
      %1878 = vmatpush1.msra.mxu0 0.0
      %1879 = vmatprep.subr.mxu0 0.0
      %1880 = vmatpush1.msra.mxu0 0.0
      %1881 = vmatprep.subr.mxu0 0.0
      %1882 = vmatpush1.msra.mxu0 0.0
      %1883 = vmatprep.subr.mxu0 0.0
      %1884 = vmatpush1.msra.mxu0 0.0
      %1885 = vmatprep.subr.mxu0 0.0
      %1886 = vmatpush1.msra.mxu0 0.0
      %1887 = vmatprep.subr.mxu0 0.0
      %1888 = vmatpush1.msra.mxu0 0.0
      %1889 = vmatprep.subr.mxu0 0.0
      %1890 = vmatpush1.msra.mxu0 0.0
      %1891 = vmatprep.subr.mxu0 0.0
      %1892 = vmatpush1.msra.mxu0 0.0
      %1893 = vmatprep.subr.mxu0 0.0
      %1894 = vmatpush1.msra.mxu0 0.0
      %1895 = vmatprep.subr.mxu0 0.0
      %1896 = vmatpush1.msra.mxu0 0.0
      %1897 = vmatprep.subr.mxu0 0.0
      %1898 = vmatpush1.msra.mxu0 0.0
      %1899 = vmatprep.subr.mxu0 0.0
      %1900 = vmatpush1.msra.mxu0 0.0
      %1901 = vmatprep.subr.mxu0 0.0
      %1902 = vmatpush1.msra.mxu0 0.0
      %1903 = vmatprep.subr.mxu0 0.0
      %1904 = vmatpush1.msra.mxu0 0.0
      %1905 = vmatprep.subr.mxu0 0.0
      %1906 = vmatpush1.msra.mxu0 0.0
      %1907 = vmatprep.mubr.f32.mxu0 0.0
      %1908 = vmatmul.mubr.f32.gmra.mrb[0].mxu0 %v1770
      %v1909 = vpop.f32.mrb[0].mxu0
      %v1910 = vadd.f32 0.0, %v1909
      %v1911 = vpop.f32.mrb[0].mxu0
      %v1912 = vadd.f32 0.0, %v1911
      %1913 = vdwg.mxu0
      %1914 = vmatprep.subr.mxu0 0.0
      %1915 = vmatpush1.msra.mxu0 %v1658
      %1916 = vmatprep.subr.mxu0 0.0
      %1917 = vmatpush1.msra.mxu0 %v1673
      %1918 = vmatprep.subr.mxu0 0.0
      %1919 = vmatpush1.msra.mxu0 %v1688
      %1920 = vmatprep.subr.mxu0 0.0
      %1921 = vmatpush1.msra.mxu0 %v1703
      %1922 = vmatprep.subr.mxu0 0.0
      %1923 = vmatpush1.msra.mxu0 %v1647
      %1924 = vmatprep.subr.mxu0 0.0
      %1925 = vmatpush1.msra.mxu0 %v1722
      %1926 = vmatprep.subr.mxu0 0.0
      %1927 = vmatpush1.msra.mxu0 %v1737
      %1928 = vmatprep.subr.mxu0 0.0
      %1929 = vmatpush1.msra.mxu0 %v1752
      %1930 = vmatprep.subr.mxu0 0.0
      %1931 = vmatpush1.msra.mxu0 %v1767
      %1932 = vmatprep.subr.mxu0 0.0
      %1933 = vmatpush1.msra.mxu0 0.0
      %1934 = vmatprep.subr.mxu0 0.0
      %1935 = vmatpush1.msra.mxu0 0.0
      %1936 = vmatprep.subr.mxu0 0.0
      %1937 = vmatpush1.msra.mxu0 0.0
      %1938 = vmatprep.subr.mxu0 0.0
      %1939 = vmatpush1.msra.mxu0 0.0
      %1940 = vmatprep.subr.mxu0 0.0
      %1941 = vmatpush1.msra.mxu0 0.0
      %1942 = vmatprep.subr.mxu0 0.0
      %1943 = vmatpush1.msra.mxu0 0.0
      %1944 = vmatprep.subr.mxu0 0.0
      %1945 = vmatpush1.msra.mxu0 0.0
      %1946 = vmatprep.subr.mxu0 0.0
      %1947 = vmatpush1.msra.mxu0 0.0
      %1948 = vmatprep.subr.mxu0 0.0
      %1949 = vmatpush1.msra.mxu0 0.0
      %1950 = vmatprep.subr.mxu0 0.0
      %1951 = vmatpush1.msra.mxu0 0.0
      %1952 = vmatprep.subr.mxu0 0.0
      %1953 = vmatpush1.msra.mxu0 0.0
      %1954 = vmatprep.subr.mxu0 0.0
      %1955 = vmatpush1.msra.mxu0 0.0
      %1956 = vmatprep.subr.mxu0 0.0
      %1957 = vmatpush1.msra.mxu0 0.0
      %1958 = vmatprep.subr.mxu0 0.0
      %1959 = vmatpush1.msra.mxu0 0.0
      %1960 = vmatprep.subr.mxu0 0.0
      %1961 = vmatpush1.msra.mxu0 0.0
      %1962 = vmatprep.subr.mxu0 0.0
      %1963 = vmatpush1.msra.mxu0 0.0
      %1964 = vmatprep.subr.mxu0 0.0
      %1965 = vmatpush1.msra.mxu0 0.0
      %1966 = vmatprep.subr.mxu0 0.0
      %1967 = vmatpush1.msra.mxu0 0.0
      %1968 = vmatprep.subr.mxu0 0.0
      %1969 = vmatpush1.msra.mxu0 0.0
      %1970 = vmatprep.subr.mxu0 0.0
      %1971 = vmatpush1.msra.mxu0 0.0
      %1972 = vmatprep.subr.mxu0 0.0
      %1973 = vmatpush1.msra.mxu0 0.0
      %1974 = vmatprep.subr.mxu0 0.0
      %1975 = vmatpush1.msra.mxu0 0.0
      %1976 = vmatprep.subr.mxu0 0.0
      %1977 = vmatpush1.msra.mxu0 0.0
      %1978 = vmatprep.mubr.f32.mxu0 0.0
      %1979 = vmatmul.mubr.f32.gmra.mrb[0].mxu0 %v1770
      %v1980 = vpop.f32.mrb[0].mxu0
      %v1981 = vadd.f32 0.0, %v1980
      %v1982 = vpop.f32.mrb[0].mxu0
      %1983 = vdwg.mxu0
      %v1984 = vmul.f32 %v1839, %v931
      %v1985 = vmul.f32 %v1841, %v935
      %v1986 = vmul.f32 %v1910, %v939
      %v1987 = vmul.f32 %v1912, %v943
      %v1988 = vmul.f32 %v1981, %v947
      %v1989 = vadd.f32 %v1984, %v1985
      %v1990 = vadd.f32 %v1989, %v1986
      %v1991 = vadd.f32 %v1990, %v1987
      %v1992 = vadd.f32 %v1991, %v1988
      %1993 = vadd.xlane.f32.xlu0 %v1992
      %v1994 = vpop.xlane.xlu0 %1993
      %v1995 = vmul.f32 %v1994, 0.00390625
      %v1996 = vsub.f32 %v1984, %v1995
      %v1997 = vsub.f32 %v1985, %v1995
      %v1998 = vsub.f32 %v1986, %v1995
      %v1999 = vsub.f32 %v1987, %v1995
      %v2000 = vsub.f32 %v1988, %v1995
      %v2001 = vmul.f32 %v1996, %v931
      %v2002 = vmul.f32 %v1997, %v935
      %v2003 = vmul.f32 %v1998, %v939
      %v2004 = vmul.f32 %v1999, %v943
      %v2005 = vmul.f32 %v2000, %v947
      %v2006 = vmul.f32 %v2001, %v2001
      %v2007 = vmul.f32 %v2002, %v2002
      %v2008 = vmul.f32 %v2003, %v2003
      %v2009 = vmul.f32 %v2004, %v2004
      %v2010 = vmul.f32 %v2005, %v2005
      %v2011 = vadd.f32 %v2006, %v2007
      %v2012 = vadd.f32 %v2011, %v2008
      %v2013 = vadd.f32 %v2012, %v2009
      %v2014 = vadd.f32 %v2013, %v2010
      %2015 = vadd.xlane.f32.xlu0 %v2014
      %v2016 = vpop.xlane.xlu0 %2015
      %v2017 = vmul.f32 %v2016, 0.00390625
      %v2018 = vadd.f32 %v2017, 1e-05
      %v2019 = vrsqrt.pop %v2018
      %v2020 = vmul.f32 %v2001, %v2019
      %v2021 = vmul.f32 %v2002, %v2019
      %v2022 = vmul.f32 %v2003, %v2019
      %v2023 = vmul.f32 %v2004, %v2019
      %v2024 = vmul.f32 %v2005, %v2019
      %vm2025 = vcmp.gt.f32.partialorder %v2020, 0.0
      %vm2026 = vcmp.gt.f32.partialorder %v2021, 0.0
      %vm2027 = vcmp.gt.f32.partialorder %v2022, 0.0
      %vm2028 = vcmp.gt.f32.partialorder %v2023, 0.0
      %vm2029 = vcmp.gt.f32.partialorder %v2024, 0.0
      %v2030 = vmul.f32 %v2020, 0.4
      %v2031 = vmul.f32 %v2021, 0.4
      %v2032 = vmul.f32 %v2022, 0.4
      %v2033 = vmul.f32 %v2023, 0.4
      %v2034 = vmul.f32 %v2024, 0.4
      %v2035 = vsel %vm2025, %v2020, %v2030
      %v2036 = vsel %vm2026, %v2021, %v2031
      %v2037 = vsel %vm2027, %v2022, %v2032
      %v2038 = vsel %vm2028, %v2023, %v2033
      %v2039 = vsel %vm2029, %v2024, %v2034
      %2040 = vrot.lane.b32.xlu0 %v2035, 66
      %v2041 = vpop.permute.xlu0 %2040
      %2042 = vrot.lane.b32.xlu0 %v2036, 66
      %v2043 = vpop.permute.xlu0 %2042
      %2044 = vrot.lane.b32.xlu0 %v2037, 66
      %v2045 = vpop.permute.xlu0 %2044
      %2046 = vrot.lane.b32.xlu0 %v2038, 66
      %v2047 = vpop.permute.xlu0 %2046
      %2048 = vrot.lane.b32.xlu0 %v2039, 66
      %v2049 = vpop.permute.xlu0 %2048
      %v2050 = vsel %vm1019, %v2047, %v2049
      %v2051 = vsel %vm1019, %v2045, %v2047
      %v2052 = vsel %vm1019, %v2043, %v2045
      %v2053 = vsel %vm1019, %v2041, %v2043
      %v2054 = vsel %vm1019, %v2049, %v2041
      %2055 = vrot.lane.b32.xlu0 %v2035, 64
      %v2056 = vpop.permute.xlu0 %2055
      %2057 = vrot.lane.b32.xlu0 %v2036, 64
      %v2058 = vpop.permute.xlu0 %2057
      %2059 = vrot.lane.b32.xlu0 %v2037, 64
      %v2060 = vpop.permute.xlu0 %2059
      %2061 = vrot.lane.b32.xlu0 %v2038, 64
      %v2062 = vpop.permute.xlu0 %2061
      %2063 = vrot.lane.b32.xlu0 %v2039, 64
      %v2064 = vpop.permute.xlu0 %2063
      %v2065 = vsel %vm1035, %v2062, %v2064
      %v2066 = vsel %vm1035, %v2060, %v2062
      %v2067 = vsel %vm1035, %v2058, %v2060
      %v2068 = vsel %vm1035, %v2056, %v2058
      %v2069 = vsel %vm1035, %v2064, %v2056
      %2070 = vrot.lane.b32.xlu0 %v2035, 62
      %v2071 = vpop.permute.xlu0 %2070
      %2072 = vrot.lane.b32.xlu0 %v2036, 62
      %v2073 = vpop.permute.xlu0 %2072
      %2074 = vrot.lane.b32.xlu0 %v2037, 62
      %v2075 = vpop.permute.xlu0 %2074
      %2076 = vrot.lane.b32.xlu0 %v2038, 62
      %v2077 = vpop.permute.xlu0 %2076
      %2078 = vrot.lane.b32.xlu0 %v2039, 62
      %v2079 = vpop.permute.xlu0 %2078
      %v2080 = vsel %vm1051, %v2077, %v2079
      %v2081 = vsel %vm1051, %v2075, %v2077
      %v2082 = vsel %vm1051, %v2073, %v2075
      %v2083 = vsel %vm1051, %v2071, %v2073
      %v2084 = vsel %vm1051, %v2079, %v2071
      %2085 = vrot.lane.b32.xlu0 %v2035, 2
      %v2086 = vpop.permute.xlu0 %2085
      %2087 = vrot.lane.b32.xlu0 %v2036, 2
      %v2088 = vpop.permute.xlu0 %2087
      %2089 = vrot.lane.b32.xlu0 %v2037, 2
      %v2090 = vpop.permute.xlu0 %2089
      %2091 = vrot.lane.b32.xlu0 %v2038, 2
      %v2092 = vpop.permute.xlu0 %2091
      %2093 = vrot.lane.b32.xlu0 %v2039, 2
      %v2094 = vpop.permute.xlu0 %2093
      %v2095 = vsel %vm1067, %v2092, %v2094
      %v2096 = vsel %vm1067, %v2090, %v2092
      %v2097 = vsel %vm1067, %v2088, %v2090
      %v2098 = vsel %vm1067, %v2086, %v2088
      %v2099 = vsel %vm1067, %v2094, %v2086
      %2100 = vrot.lane.b32.xlu0 %v2035, 126
      %v2101 = vpop.permute.xlu0 %2100
      %2102 = vrot.lane.b32.xlu0 %v2036, 126
      %v2103 = vpop.permute.xlu0 %2102
      %2104 = vrot.lane.b32.xlu0 %v2037, 126
      %v2105 = vpop.permute.xlu0 %2104
      %2106 = vrot.lane.b32.xlu0 %v2038, 126
      %v2107 = vpop.permute.xlu0 %2106
      %2108 = vrot.lane.b32.xlu0 %v2039, 126
      %v2109 = vpop.permute.xlu0 %2108
      %v2110 = vsel %vm1083, %v2107, %v2109
      %v2111 = vsel %vm1083, %v2105, %v2107
      %v2112 = vsel %vm1083, %v2103, %v2105
      %v2113 = vsel %vm1083, %v2101, %v2103
      %v2114 = vsel %vm1083, %v2109, %v2101
      %v2115 = vld [vmem:[%s10] sm:$0xff]
      %v2116 = vld [vmem:[%s11] sm:$0xff]
      %2118 = vset.pattern.permute.xlu0 0
      %2119 = vperm.xlu0 %2118, %v2116
      %v2120 = vpop.permute.xlu0 %2119
      %v2123 = vsel %vm711, %v2115, 0
      %2125 = vmatprep.subr.mxu0 %v2053
      %2126 = vmatpush1.msra.mxu0 %v2054
      %2127 = vmatprep.subr.mxu0 %v2068
      %2128 = vmatpush1.msra.mxu0 %v2069
      %2129 = vmatprep.subr.mxu0 %v2083
      %2130 = vmatpush1.msra.mxu0 %v2084
      %2131 = vmatprep.subr.mxu0 %v2098
      %2132 = vmatpush1.msra.mxu0 %v2099
      %2133 = vmatprep.subr.mxu0 %v2036
      %2134 = vmatpush1.msra.mxu0 %v2035
      %2135 = vmatprep.subr.mxu0 %v2112
      %2136 = vmatpush1.msra.mxu0 %v2113
      %2137 = vmatprep.subr.mxu0 %v2052
      %2138 = vmatpush1.msra.mxu0 %v2053
      %2139 = vmatprep.subr.mxu0 %v2067
      %2140 = vmatpush1.msra.mxu0 %v2068
      %2141 = vmatprep.subr.mxu0 %v2082
      %2142 = vmatpush1.msra.mxu0 %v2083
      %2143 = vmatprep.subr.mxu0 0.0
      %2144 = vmatpush1.msra.mxu0 0.0
      %2145 = vmatprep.subr.mxu0 0.0
      %2146 = vmatpush1.msra.mxu0 0.0
      %2147 = vmatprep.subr.mxu0 0.0
      %2148 = vmatpush1.msra.mxu0 0.0
      %2149 = vmatprep.subr.mxu0 0.0
      %2150 = vmatpush1.msra.mxu0 0.0
      %2151 = vmatprep.subr.mxu0 0.0
      %2152 = vmatpush1.msra.mxu0 0.0
      %2153 = vmatprep.subr.mxu0 0.0
      %2154 = vmatpush1.msra.mxu0 0.0
      %2155 = vmatprep.subr.mxu0 0.0
      %2156 = vmatpush1.msra.mxu0 0.0
      %2157 = vmatprep.subr.mxu0 0.0
      %2158 = vmatpush1.msra.mxu0 0.0
      %2159 = vmatprep.subr.mxu0 0.0
      %2160 = vmatpush1.msra.mxu0 0.0
      %2161 = vmatprep.subr.mxu0 0.0
      %2162 = vmatpush1.msra.mxu0 0.0
      %2163 = vmatprep.subr.mxu0 0.0
      %2164 = vmatpush1.msra.mxu0 0.0
      %2165 = vmatprep.subr.mxu0 0.0
      %2166 = vmatpush1.msra.mxu0 0.0
      %2167 = vmatprep.subr.mxu0 0.0
      %2168 = vmatpush1.msra.mxu0 0.0
      %2169 = vmatprep.subr.mxu0 0.0
      %2170 = vmatpush1.msra.mxu0 0.0
      %2171 = vmatprep.subr.mxu0 0.0
      %2172 = vmatpush1.msra.mxu0 0.0
      %2173 = vmatprep.subr.mxu0 0.0
      %2174 = vmatpush1.msra.mxu0 0.0
      %2175 = vmatprep.subr.mxu0 0.0
      %2176 = vmatpush1.msra.mxu0 0.0
      %2177 = vmatprep.subr.mxu0 0.0
      %2178 = vmatpush1.msra.mxu0 0.0
      %2179 = vmatprep.subr.mxu0 0.0
      %2180 = vmatpush1.msra.mxu0 0.0
      %2181 = vmatprep.subr.mxu0 0.0
      %2182 = vmatpush1.msra.mxu0 0.0
      %2183 = vmatprep.subr.mxu0 0.0
      %2184 = vmatpush1.msra.mxu0 0.0
      %2185 = vmatprep.subr.mxu0 0.0
      %2186 = vmatpush1.msra.mxu0 0.0
      %2187 = vmatprep.subr.mxu0 0.0
      %2188 = vmatpush1.msra.mxu0 0.0
      %2189 = vmatprep.mubr.f32.mxu0 0.0
      %2190 = vmatmul.mubr.f32.gmra.mrb[0].mxu0 %v2123
      %v2191 = vpop.f32.mrb[0].mxu0
      %v2192 = vadd.f32 %v2120, %v2191
      %v2193 = vpop.f32.mrb[0].mxu0
      %v2194 = vadd.f32 %v2120, %v2193
      %2195 = vdwg.mxu0
      %2196 = vmatprep.subr.mxu0 %v2051
      %2197 = vmatpush1.msra.mxu0 %v2052
      %2198 = vmatprep.subr.mxu0 %v2066
      %2199 = vmatpush1.msra.mxu0 %v2067
      %2200 = vmatprep.subr.mxu0 %v2081
      %2201 = vmatpush1.msra.mxu0 %v2082
      %2202 = vmatprep.subr.mxu0 %v2096
      %2203 = vmatpush1.msra.mxu0 %v2097
      %2204 = vmatprep.subr.mxu0 %v2038
      %2205 = vmatpush1.msra.mxu0 %v2037
      %2206 = vmatprep.subr.mxu0 %v2110
      %2207 = vmatpush1.msra.mxu0 %v2111
      %2208 = vmatprep.subr.mxu0 %v2050
      %2209 = vmatpush1.msra.mxu0 %v2051
      %2210 = vmatprep.subr.mxu0 %v2065
      %2211 = vmatpush1.msra.mxu0 %v2066
      %2212 = vmatprep.subr.mxu0 %v2080
      %2213 = vmatpush1.msra.mxu0 %v2081
      %2214 = vmatprep.subr.mxu0 0.0
      %2215 = vmatpush1.msra.mxu0 0.0
      %2216 = vmatprep.subr.mxu0 0.0
      %2217 = vmatpush1.msra.mxu0 0.0
      %2218 = vmatprep.subr.mxu0 0.0
      %2219 = vmatpush1.msra.mxu0 0.0
      %2220 = vmatprep.subr.mxu0 0.0
      %2221 = vmatpush1.msra.mxu0 0.0
      %2222 = vmatprep.subr.mxu0 0.0
      %2223 = vmatpush1.msra.mxu0 0.0
      %2224 = vmatprep.subr.mxu0 0.0
      %2225 = vmatpush1.msra.mxu0 0.0
      %2226 = vmatprep.subr.mxu0 0.0
      %2227 = vmatpush1.msra.mxu0 0.0
      %2228 = vmatprep.subr.mxu0 0.0
      %2229 = vmatpush1.msra.mxu0 0.0
      %2230 = vmatprep.subr.mxu0 0.0
      %2231 = vmatpush1.msra.mxu0 0.0
      %2232 = vmatprep.subr.mxu0 0.0
      %2233 = vmatpush1.msra.mxu0 0.0
      %2234 = vmatprep.subr.mxu0 0.0
      %2235 = vmatpush1.msra.mxu0 0.0
      %2236 = vmatprep.subr.mxu0 0.0
      %2237 = vmatpush1.msra.mxu0 0.0
      %2238 = vmatprep.subr.mxu0 0.0
      %2239 = vmatpush1.msra.mxu0 0.0
      %2240 = vmatprep.subr.mxu0 0.0
      %2241 = vmatpush1.msra.mxu0 0.0
      %2242 = vmatprep.subr.mxu0 0.0
      %2243 = vmatpush1.msra.mxu0 0.0
      %2244 = vmatprep.subr.mxu0 0.0
      %2245 = vmatpush1.msra.mxu0 0.0
      %2246 = vmatprep.subr.mxu0 0.0
      %2247 = vmatpush1.msra.mxu0 0.0
      %2248 = vmatprep.subr.mxu0 0.0
      %2249 = vmatpush1.msra.mxu0 0.0
      %2250 = vmatprep.subr.mxu0 0.0
      %2251 = vmatpush1.msra.mxu0 0.0
      %2252 = vmatprep.subr.mxu0 0.0
      %2253 = vmatpush1.msra.mxu0 0.0
      %2254 = vmatprep.subr.mxu0 0.0
      %2255 = vmatpush1.msra.mxu0 0.0
      %2256 = vmatprep.subr.mxu0 0.0
      %2257 = vmatpush1.msra.mxu0 0.0
      %2258 = vmatprep.subr.mxu0 0.0
      %2259 = vmatpush1.msra.mxu0 0.0
      %2260 = vmatprep.mubr.f32.mxu0 0.0
      %2261 = vmatmul.mubr.f32.gmra.mrb[0].mxu0 %v2123
      %v2262 = vpop.f32.mrb[0].mxu0
      %v2263 = vadd.f32 %v2120, %v2262
      %v2264 = vpop.f32.mrb[0].mxu0
      %v2265 = vadd.f32 %v2120, %v2264
      %2266 = vdwg.mxu0
      %2267 = vmatprep.subr.mxu0 0.0
      %2268 = vmatpush1.msra.mxu0 %v2050
      %2269 = vmatprep.subr.mxu0 0.0
      %2270 = vmatpush1.msra.mxu0 %v2065
      %2271 = vmatprep.subr.mxu0 0.0
      %2272 = vmatpush1.msra.mxu0 %v2080
      %2273 = vmatprep.subr.mxu0 0.0
      %2274 = vmatpush1.msra.mxu0 %v2095
      %2275 = vmatprep.subr.mxu0 0.0
      %2276 = vmatpush1.msra.mxu0 %v2039
      %2277 = vmatprep.subr.mxu0 0.0
      %2278 = vmatpush1.msra.mxu0 %v2114
      %2279 = vmatprep.subr.mxu0 0.0
      %2280 = vmatpush1.msra.mxu0 %v2054
      %2281 = vmatprep.subr.mxu0 0.0
      %2282 = vmatpush1.msra.mxu0 %v2069
      %2283 = vmatprep.subr.mxu0 0.0
      %2284 = vmatpush1.msra.mxu0 %v2084
      %2285 = vmatprep.subr.mxu0 0.0
      %2286 = vmatpush1.msra.mxu0 0.0
      %2287 = vmatprep.subr.mxu0 0.0
      %2288 = vmatpush1.msra.mxu0 0.0
      %2289 = vmatprep.subr.mxu0 0.0
      %2290 = vmatpush1.msra.mxu0 0.0
      %2291 = vmatprep.subr.mxu0 0.0
      %2292 = vmatpush1.msra.mxu0 0.0
      %2293 = vmatprep.subr.mxu0 0.0
      %2294 = vmatpush1.msra.mxu0 0.0
      %2295 = vmatprep.subr.mxu0 0.0
      %2296 = vmatpush1.msra.mxu0 0.0
      %2297 = vmatprep.subr.mxu0 0.0
      %2298 = vmatpush1.msra.mxu0 0.0
      %2299 = vmatprep.subr.mxu0 0.0
      %2300 = vmatpush1.msra.mxu0 0.0
      %2301 = vmatprep.subr.mxu0 0.0
      %2302 = vmatpush1.msra.mxu0 0.0
      %2303 = vmatprep.subr.mxu0 0.0
      %2304 = vmatpush1.msra.mxu0 0.0
      %2305 = vmatprep.subr.mxu0 0.0
      %2306 = vmatpush1.msra.mxu0 0.0
      %2307 = vmatprep.subr.mxu0 0.0
      %2308 = vmatpush1.msra.mxu0 0.0
      %2309 = vmatprep.subr.mxu0 0.0
      %2310 = vmatpush1.msra.mxu0 0.0
      %2311 = vmatprep.subr.mxu0 0.0
      %2312 = vmatpush1.msra.mxu0 0.0
      %2313 = vmatprep.subr.mxu0 0.0
      %2314 = vmatpush1.msra.mxu0 0.0
      %2315 = vmatprep.subr.mxu0 0.0
      %2316 = vmatpush1.msra.mxu0 0.0
      %2317 = vmatprep.subr.mxu0 0.0
      %2318 = vmatpush1.msra.mxu0 0.0
      %2319 = vmatprep.subr.mxu0 0.0
      %2320 = vmatpush1.msra.mxu0 0.0
      %2321 = vmatprep.subr.mxu0 0.0
      %2322 = vmatpush1.msra.mxu0 0.0
      %2323 = vmatprep.subr.mxu0 0.0
      %2324 = vmatpush1.msra.mxu0 0.0
      %2325 = vmatprep.subr.mxu0 0.0
      %2326 = vmatpush1.msra.mxu0 0.0
      %2327 = vmatprep.subr.mxu0 0.0
      %2328 = vmatpush1.msra.mxu0 0.0
      %2329 = vmatprep.subr.mxu0 0.0
      %2330 = vmatpush1.msra.mxu0 0.0
      %2331 = vmatprep.mubr.f32.mxu0 0.0
      %2332 = vmatmul.mubr.f32.gmra.mrb[0].mxu0 %v2123
      %v2333 = vpop.f32.mrb[0].mxu0
      %v2334 = vadd.f32 %v2120, %v2333
      %v2335 = vpop.f32.mrb[0].mxu0
      %2336 = vdwg.mxu0
      %v2337 = vmul.f32 %v2192, %v931
      %v2338 = vmul.f32 %v2194, %v935
      %v2339 = vmul.f32 %v2263, %v939
      %v2340 = vmul.f32 %v2265, %v943
      %v2341 = vmul.f32 %v2334, %v947
      %vm2342 = vcmp.gt.f32.partialorder %v2337, 0.0
      %vm2343 = vcmp.gt.f32.partialorder %v2338, 0.0
      %vm2344 = vcmp.gt.f32.partialorder %v2339, 0.0
      %vm2345 = vcmp.gt.f32.partialorder %v2340, 0.0
      %vm2346 = vcmp.gt.f32.partialorder %v2341, 0.0
      %v2347 = vmul.f32 %v2337, 0.4
      %v2348 = vmul.f32 %v2338, 0.4
      %v2349 = vmul.f32 %v2339, 0.4
      %v2350 = vmul.f32 %v2340, 0.4
      %v2351 = vmul.f32 %v2341, 0.4
      %v2352 = vsel %vm2342, %v2337, %v2347
      %v2353 = vsel %vm2343, %v2338, %v2348
      %v2354 = vsel %vm2344, %v2339, %v2349
      %v2355 = vsel %vm2345, %v2340, %v2350
      %v2356 = vsel %vm2346, %v2341, %v2351
      %2357 = vrot.lane.b32.xlu0 %v2352, 66
      %v2358 = vpop.permute.xlu0 %2357
      %2359 = vrot.lane.b32.xlu0 %v2353, 66
      %v2360 = vpop.permute.xlu0 %2359
      %2361 = vrot.lane.b32.xlu0 %v2354, 66
      %v2362 = vpop.permute.xlu0 %2361
      %2363 = vrot.lane.b32.xlu0 %v2355, 66
      %v2364 = vpop.permute.xlu0 %2363
      %2365 = vrot.lane.b32.xlu0 %v2356, 66
      %v2366 = vpop.permute.xlu0 %2365
      %v2367 = vsel %vm1019, %v2364, %v2366
      %v2368 = vsel %vm1019, %v2362, %v2364
      %v2369 = vsel %vm1019, %v2360, %v2362
      %v2370 = vsel %vm1019, %v2358, %v2360
      %v2371 = vsel %vm1019, %v2366, %v2358
      %2372 = vrot.lane.b32.xlu0 %v2352, 64
      %v2373 = vpop.permute.xlu0 %2372
      %2374 = vrot.lane.b32.xlu0 %v2353, 64
      %v2375 = vpop.permute.xlu0 %2374
      %2376 = vrot.lane.b32.xlu0 %v2354, 64
      %v2377 = vpop.permute.xlu0 %2376
      %2378 = vrot.lane.b32.xlu0 %v2355, 64
      %v2379 = vpop.permute.xlu0 %2378
      %2380 = vrot.lane.b32.xlu0 %v2356, 64
      %v2381 = vpop.permute.xlu0 %2380
      %v2382 = vsel %vm1035, %v2379, %v2381
      %v2383 = vsel %vm1035, %v2377, %v2379
      %v2384 = vsel %vm1035, %v2375, %v2377
      %v2385 = vsel %vm1035, %v2373, %v2375
      %v2386 = vsel %vm1035, %v2381, %v2373
      %2387 = vrot.lane.b32.xlu0 %v2352, 62
      %v2388 = vpop.permute.xlu0 %2387
      %2389 = vrot.lane.b32.xlu0 %v2353, 62
      %v2390 = vpop.permute.xlu0 %2389
      %2391 = vrot.lane.b32.xlu0 %v2354, 62
      %v2392 = vpop.permute.xlu0 %2391
      %2393 = vrot.lane.b32.xlu0 %v2355, 62
      %v2394 = vpop.permute.xlu0 %2393
      %2395 = vrot.lane.b32.xlu0 %v2356, 62
      %v2396 = vpop.permute.xlu0 %2395
      %v2397 = vsel %vm1051, %v2394, %v2396
      %v2398 = vsel %vm1051, %v2392, %v2394
      %v2399 = vsel %vm1051, %v2390, %v2392
      %v2400 = vsel %vm1051, %v2388, %v2390
      %v2401 = vsel %vm1051, %v2396, %v2388
      %2402 = vrot.lane.b32.xlu0 %v2352, 2
      %v2403 = vpop.permute.xlu0 %2402
      %2404 = vrot.lane.b32.xlu0 %v2353, 2
      %v2405 = vpop.permute.xlu0 %2404
      %2406 = vrot.lane.b32.xlu0 %v2354, 2
      %v2407 = vpop.permute.xlu0 %2406
      %2408 = vrot.lane.b32.xlu0 %v2355, 2
      %v2409 = vpop.permute.xlu0 %2408
      %2410 = vrot.lane.b32.xlu0 %v2356, 2
      %v2411 = vpop.permute.xlu0 %2410
      %v2412 = vsel %vm1067, %v2409, %v2411
      %v2413 = vsel %vm1067, %v2407, %v2409
      %v2414 = vsel %vm1067, %v2405, %v2407
      %v2415 = vsel %vm1067, %v2403, %v2405
      %v2416 = vsel %vm1067, %v2411, %v2403
      %2417 = vrot.lane.b32.xlu0 %v2352, 126
      %v2418 = vpop.permute.xlu0 %2417
      %2419 = vrot.lane.b32.xlu0 %v2353, 126
      %v2420 = vpop.permute.xlu0 %2419
      %2421 = vrot.lane.b32.xlu0 %v2354, 126
      %v2422 = vpop.permute.xlu0 %2421
      %2423 = vrot.lane.b32.xlu0 %v2355, 126
      %v2424 = vpop.permute.xlu0 %2423
      %2425 = vrot.lane.b32.xlu0 %v2356, 126
      %v2426 = vpop.permute.xlu0 %2425
      %v2427 = vsel %vm1083, %v2424, %v2426
      %v2428 = vsel %vm1083, %v2422, %v2424
      %v2429 = vsel %vm1083, %v2420, %v2422
      %v2430 = vsel %vm1083, %v2418, %v2420
      %v2431 = vsel %vm1083, %v2426, %v2418
      %v2432 = vld [vmem:[%s12] sm:$0xff]
      %v2433 = vld [vmem:[%s13] sm:$0xff]
      %2435 = vset.pattern.permute.xlu0 0
      %2436 = vperm.xlu0 %2435, %v2433
      %v2437 = vpop.permute.xlu0 %2436
      %v2440 = vsel %vm711, %v2432, 0
      %2442 = vmatprep.subr.mxu0 %v2370
      %2443 = vmatpush1.msra.mxu0 %v2371
      %2444 = vmatprep.subr.mxu0 %v2385
      %2445 = vmatpush1.msra.mxu0 %v2386
      %2446 = vmatprep.subr.mxu0 %v2400
      %2447 = vmatpush1.msra.mxu0 %v2401
      %2448 = vmatprep.subr.mxu0 %v2415
      %2449 = vmatpush1.msra.mxu0 %v2416
      %2450 = vmatprep.subr.mxu0 %v2353
      %2451 = vmatpush1.msra.mxu0 %v2352
      %2452 = vmatprep.subr.mxu0 %v2429
      %2453 = vmatpush1.msra.mxu0 %v2430
      %2454 = vmatprep.subr.mxu0 %v2369
      %2455 = vmatpush1.msra.mxu0 %v2370
      %2456 = vmatprep.subr.mxu0 %v2384
      %2457 = vmatpush1.msra.mxu0 %v2385
      %2458 = vmatprep.subr.mxu0 %v2399
      %2459 = vmatpush1.msra.mxu0 %v2400
      %2460 = vmatprep.subr.mxu0 0.0
      %2461 = vmatpush1.msra.mxu0 0.0
      %2462 = vmatprep.subr.mxu0 0.0
      %2463 = vmatpush1.msra.mxu0 0.0
      %2464 = vmatprep.subr.mxu0 0.0
      %2465 = vmatpush1.msra.mxu0 0.0
      %2466 = vmatprep.subr.mxu0 0.0
      %2467 = vmatpush1.msra.mxu0 0.0
      %2468 = vmatprep.subr.mxu0 0.0
      %2469 = vmatpush1.msra.mxu0 0.0
      %2470 = vmatprep.subr.mxu0 0.0
      %2471 = vmatpush1.msra.mxu0 0.0
      %2472 = vmatprep.subr.mxu0 0.0
      %2473 = vmatpush1.msra.mxu0 0.0
      %2474 = vmatprep.subr.mxu0 0.0
      %2475 = vmatpush1.msra.mxu0 0.0
      %2476 = vmatprep.subr.mxu0 0.0
      %2477 = vmatpush1.msra.mxu0 0.0
      %2478 = vmatprep.subr.mxu0 0.0
      %2479 = vmatpush1.msra.mxu0 0.0
      %2480 = vmatprep.subr.mxu0 0.0
      %2481 = vmatpush1.msra.mxu0 0.0
      %2482 = vmatprep.subr.mxu0 0.0
      %2483 = vmatpush1.msra.mxu0 0.0
      %2484 = vmatprep.subr.mxu0 0.0
      %2485 = vmatpush1.msra.mxu0 0.0
      %2486 = vmatprep.subr.mxu0 0.0
      %2487 = vmatpush1.msra.mxu0 0.0
      %2488 = vmatprep.subr.mxu0 0.0
      %2489 = vmatpush1.msra.mxu0 0.0
      %2490 = vmatprep.subr.mxu0 0.0
      %2491 = vmatpush1.msra.mxu0 0.0
      %2492 = vmatprep.subr.mxu0 0.0
      %2493 = vmatpush1.msra.mxu0 0.0
      %2494 = vmatprep.subr.mxu0 0.0
      %2495 = vmatpush1.msra.mxu0 0.0
      %2496 = vmatprep.subr.mxu0 0.0
      %2497 = vmatpush1.msra.mxu0 0.0
      %2498 = vmatprep.subr.mxu0 0.0
      %2499 = vmatpush1.msra.mxu0 0.0
      %2500 = vmatprep.subr.mxu0 0.0
      %2501 = vmatpush1.msra.mxu0 0.0
      %2502 = vmatprep.subr.mxu0 0.0
      %2503 = vmatpush1.msra.mxu0 0.0
      %2504 = vmatprep.subr.mxu0 0.0
      %2505 = vmatpush1.msra.mxu0 0.0
      %2506 = vmatprep.mubr.f32.mxu0 0.0
      %2507 = vmatmul.mubr.f32.gmra.mrb[0].mxu0 %v2440
      %v2508 = vpop.f32.mrb[0].mxu0
      %v2509 = vadd.f32 %v2437, %v2508
      %v2510 = vpop.f32.mrb[0].mxu0
      %v2511 = vadd.f32 %v2437, %v2510
      %2512 = vdwg.mxu0
      %2513 = vmatprep.subr.mxu0 %v2368
      %2514 = vmatpush1.msra.mxu0 %v2369
      %2515 = vmatprep.subr.mxu0 %v2383
      %2516 = vmatpush1.msra.mxu0 %v2384
      %2517 = vmatprep.subr.mxu0 %v2398
      %2518 = vmatpush1.msra.mxu0 %v2399
      %2519 = vmatprep.subr.mxu0 %v2413
      %2520 = vmatpush1.msra.mxu0 %v2414
      %2521 = vmatprep.subr.mxu0 %v2355
      %2522 = vmatpush1.msra.mxu0 %v2354
      %2523 = vmatprep.subr.mxu0 %v2427
      %2524 = vmatpush1.msra.mxu0 %v2428
      %2525 = vmatprep.subr.mxu0 %v2367
      %2526 = vmatpush1.msra.mxu0 %v2368
      %2527 = vmatprep.subr.mxu0 %v2382
      %2528 = vmatpush1.msra.mxu0 %v2383
      %2529 = vmatprep.subr.mxu0 %v2397
      %2530 = vmatpush1.msra.mxu0 %v2398
      %2531 = vmatprep.subr.mxu0 0.0
      %2532 = vmatpush1.msra.mxu0 0.0
      %2533 = vmatprep.subr.mxu0 0.0
      %2534 = vmatpush1.msra.mxu0 0.0
      %2535 = vmatprep.subr.mxu0 0.0
      %2536 = vmatpush1.msra.mxu0 0.0
      %2537 = vmatprep.subr.mxu0 0.0
      %2538 = vmatpush1.msra.mxu0 0.0
      %2539 = vmatprep.subr.mxu0 0.0
      %2540 = vmatpush1.msra.mxu0 0.0
      %2541 = vmatprep.subr.mxu0 0.0
      %2542 = vmatpush1.msra.mxu0 0.0
      %2543 = vmatprep.subr.mxu0 0.0
      %2544 = vmatpush1.msra.mxu0 0.0
      %2545 = vmatprep.subr.mxu0 0.0
      %2546 = vmatpush1.msra.mxu0 0.0
      %2547 = vmatprep.subr.mxu0 0.0
      %2548 = vmatpush1.msra.mxu0 0.0
      %2549 = vmatprep.subr.mxu0 0.0
      %2550 = vmatpush1.msra.mxu0 0.0
      %2551 = vmatprep.subr.mxu0 0.0
      %2552 = vmatpush1.msra.mxu0 0.0
      %2553 = vmatprep.subr.mxu0 0.0
      %2554 = vmatpush1.msra.mxu0 0.0
      %2555 = vmatprep.subr.mxu0 0.0
      %2556 = vmatpush1.msra.mxu0 0.0
      %2557 = vmatprep.subr.mxu0 0.0
      %2558 = vmatpush1.msra.mxu0 0.0
      %2559 = vmatprep.subr.mxu0 0.0
      %2560 = vmatpush1.msra.mxu0 0.0
      %2561 = vmatprep.subr.mxu0 0.0
      %2562 = vmatpush1.msra.mxu0 0.0
      %2563 = vmatprep.subr.mxu0 0.0
      %2564 = vmatpush1.msra.mxu0 0.0
      %2565 = vmatprep.subr.mxu0 0.0
      %2566 = vmatpush1.msra.mxu0 0.0
      %2567 = vmatprep.subr.mxu0 0.0
      %2568 = vmatpush1.msra.mxu0 0.0
      %2569 = vmatprep.subr.mxu0 0.0
      %2570 = vmatpush1.msra.mxu0 0.0
      %2571 = vmatprep.subr.mxu0 0.0
      %2572 = vmatpush1.msra.mxu0 0.0
      %2573 = vmatprep.subr.mxu0 0.0
      %2574 = vmatpush1.msra.mxu0 0.0
      %2575 = vmatprep.subr.mxu0 0.0
      %2576 = vmatpush1.msra.mxu0 0.0
      %2577 = vmatprep.mubr.f32.mxu0 0.0
      %2578 = vmatmul.mubr.f32.gmra.mrb[0].mxu0 %v2440
      %v2579 = vpop.f32.mrb[0].mxu0
      %v2580 = vadd.f32 %v2437, %v2579
      %v2581 = vpop.f32.mrb[0].mxu0
      %v2582 = vadd.f32 %v2437, %v2581
      %2583 = vdwg.mxu0
      %2584 = vmatprep.subr.mxu0 0.0
      %2585 = vmatpush1.msra.mxu0 %v2367
      %2586 = vmatprep.subr.mxu0 0.0
      %2587 = vmatpush1.msra.mxu0 %v2382
      %2588 = vmatprep.subr.mxu0 0.0
      %2589 = vmatpush1.msra.mxu0 %v2397
      %2590 = vmatprep.subr.mxu0 0.0
      %2591 = vmatpush1.msra.mxu0 %v2412
      %2592 = vmatprep.subr.mxu0 0.0
      %2593 = vmatpush1.msra.mxu0 %v2356
      %2594 = vmatprep.subr.mxu0 0.0
      %2595 = vmatpush1.msra.mxu0 %v2431
      %2596 = vmatprep.subr.mxu0 0.0
      %2597 = vmatpush1.msra.mxu0 %v2371
      %2598 = vmatprep.subr.mxu0 0.0
      %2599 = vmatpush1.msra.mxu0 %v2386
      %2600 = vmatprep.subr.mxu0 0.0
      %2601 = vmatpush1.msra.mxu0 %v2401
      %2602 = vmatprep.subr.mxu0 0.0
      %2603 = vmatpush1.msra.mxu0 0.0
      %2604 = vmatprep.subr.mxu0 0.0
      %2605 = vmatpush1.msra.mxu0 0.0
      %2606 = vmatprep.subr.mxu0 0.0
      %2607 = vmatpush1.msra.mxu0 0.0
      %2608 = vmatprep.subr.mxu0 0.0
      %2609 = vmatpush1.msra.mxu0 0.0
      %2610 = vmatprep.subr.mxu0 0.0
      %2611 = vmatpush1.msra.mxu0 0.0
      %2612 = vmatprep.subr.mxu0 0.0
      %2613 = vmatpush1.msra.mxu0 0.0
      %2614 = vmatprep.subr.mxu0 0.0
      %2615 = vmatpush1.msra.mxu0 0.0
      %2616 = vmatprep.subr.mxu0 0.0
      %2617 = vmatpush1.msra.mxu0 0.0
      %2618 = vmatprep.subr.mxu0 0.0
      %2619 = vmatpush1.msra.mxu0 0.0
      %2620 = vmatprep.subr.mxu0 0.0
      %2621 = vmatpush1.msra.mxu0 0.0
      %2622 = vmatprep.subr.mxu0 0.0
      %2623 = vmatpush1.msra.mxu0 0.0
      %2624 = vmatprep.subr.mxu0 0.0
      %2625 = vmatpush1.msra.mxu0 0.0
      %2626 = vmatprep.subr.mxu0 0.0
      %2627 = vmatpush1.msra.mxu0 0.0
      %2628 = vmatprep.subr.mxu0 0.0
      %2629 = vmatpush1.msra.mxu0 0.0
      %2630 = vmatprep.subr.mxu0 0.0
      %2631 = vmatpush1.msra.mxu0 0.0
      %2632 = vmatprep.subr.mxu0 0.0
      %2633 = vmatpush1.msra.mxu0 0.0
      %2634 = vmatprep.subr.mxu0 0.0
      %2635 = vmatpush1.msra.mxu0 0.0
      %2636 = vmatprep.subr.mxu0 0.0
      %2637 = vmatpush1.msra.mxu0 0.0
      %2638 = vmatprep.subr.mxu0 0.0
      %2639 = vmatpush1.msra.mxu0 0.0
      %2640 = vmatprep.subr.mxu0 0.0
      %2641 = vmatpush1.msra.mxu0 0.0
      %2642 = vmatprep.subr.mxu0 0.0
      %2643 = vmatpush1.msra.mxu0 0.0
      %2644 = vmatprep.subr.mxu0 0.0
      %2645 = vmatpush1.msra.mxu0 0.0
      %2646 = vmatprep.subr.mxu0 0.0
      %2647 = vmatpush1.msra.mxu0 0.0
      %2648 = vmatprep.mubr.f32.mxu0 0.0
      %2649 = vmatmul.mubr.f32.gmra.mrb[0].mxu0 %v2440
      %v2650 = vpop.f32.mrb[0].mxu0
      %v2651 = vadd.f32 %v2437, %v2650
      %v2652 = vpop.f32.mrb[0].mxu0
      %2653 = vdwg.mxu0
      %v2654 = vmul.f32 %v2509, %v931
      %v2655 = vmul.f32 %v2511, %v935
      %v2656 = vmul.f32 %v2580, %v939
      %v2657 = vmul.f32 %v2582, %v943
      %v2658 = vmul.f32 %v2651, %v947
      %vm2659 = vcmp.gt.f32.partialorder %v2654, 0.0
      %vm2660 = vcmp.gt.f32.partialorder %v2655, 0.0
      %vm2661 = vcmp.gt.f32.partialorder %v2656, 0.0
      %vm2662 = vcmp.gt.f32.partialorder %v2657, 0.0
      %vm2663 = vcmp.gt.f32.partialorder %v2658, 0.0
      %v2664 = vmul.f32 %v2654, 0.4
      %v2665 = vmul.f32 %v2655, 0.4
      %v2666 = vmul.f32 %v2656, 0.4
      %v2667 = vmul.f32 %v2657, 0.4
      %v2668 = vmul.f32 %v2658, 0.4
      %v2669 = vsel %vm2659, %v2654, %v2664
      %v2670 = vsel %vm2660, %v2655, %v2665
      %v2671 = vsel %vm2661, %v2656, %v2666
      %v2672 = vsel %vm2662, %v2657, %v2667
      %v2673 = vsel %vm2663, %v2658, %v2668
      %2674 = vrot.lane.b32.xlu0 %v2669, 33
      %v2675 = vpop.permute.xlu0 %2674
      %2676 = vrot.lane.b32.xlu0 %v2670, 33
      %v2677 = vpop.permute.xlu0 %2676
      %2678 = vrot.lane.b32.xlu0 %v2671, 33
      %v2679 = vpop.permute.xlu0 %2678
      %2680 = vrot.lane.b32.xlu0 %v2672, 33
      %v2681 = vpop.permute.xlu0 %2680
      %2682 = vrot.lane.b32.xlu0 %v2673, 33
      %v2683 = vpop.permute.xlu0 %2682
      %v2684 = vsel %vm592, %v2681, %v2683
      %v2685 = vsel %vm592, %v2679, %v2681
      %v2686 = vsel %vm592, %v2677, %v2679
      %v2687 = vsel %vm592, %v2675, %v2677
      %v2688 = vsel %vm592, %v2683, %v2675
      %2689 = vrot.lane.b32.xlu0 %v2669, 32
      %v2690 = vpop.permute.xlu0 %2689
      %2691 = vrot.lane.b32.xlu0 %v2670, 32
      %v2692 = vpop.permute.xlu0 %2691
      %2693 = vrot.lane.b32.xlu0 %v2671, 32
      %v2694 = vpop.permute.xlu0 %2693
      %2695 = vrot.lane.b32.xlu0 %v2672, 32
      %v2696 = vpop.permute.xlu0 %2695
      %2697 = vrot.lane.b32.xlu0 %v2673, 32
      %v2698 = vpop.permute.xlu0 %2697
      %v2699 = vsel %vm608, %v2696, %v2698
      %v2700 = vsel %vm608, %v2694, %v2696
      %v2701 = vsel %vm608, %v2692, %v2694
      %v2702 = vsel %vm608, %v2690, %v2692
      %v2703 = vsel %vm608, %v2698, %v2690
      %2704 = vrot.lane.b32.xlu0 %v2669, 31
      %v2705 = vpop.permute.xlu0 %2704
      %2706 = vrot.lane.b32.xlu0 %v2670, 31
      %v2707 = vpop.permute.xlu0 %2706
      %2708 = vrot.lane.b32.xlu0 %v2671, 31
      %v2709 = vpop.permute.xlu0 %2708
      %2710 = vrot.lane.b32.xlu0 %v2672, 31
      %v2711 = vpop.permute.xlu0 %2710
      %2712 = vrot.lane.b32.xlu0 %v2673, 31
      %v2713 = vpop.permute.xlu0 %2712
      %v2714 = vsel %vm624, %v2711, %v2713
      %v2715 = vsel %vm624, %v2709, %v2711
      %v2716 = vsel %vm624, %v2707, %v2709
      %v2717 = vsel %vm624, %v2705, %v2707
      %v2718 = vsel %vm624, %v2713, %v2705
      %2719 = vrot.lane.b32.xlu0 %v2669, 1
      %v2720 = vpop.permute.xlu0 %2719
      %2721 = vrot.lane.b32.xlu0 %v2670, 1
      %v2722 = vpop.permute.xlu0 %2721
      %2723 = vrot.lane.b32.xlu0 %v2671, 1
      %v2724 = vpop.permute.xlu0 %2723
      %2725 = vrot.lane.b32.xlu0 %v2672, 1
      %v2726 = vpop.permute.xlu0 %2725
      %2727 = vrot.lane.b32.xlu0 %v2673, 1
      %v2728 = vpop.permute.xlu0 %2727
      %v2729 = vsel %vm640, %v2726, %v2728
      %v2730 = vsel %vm640, %v2724, %v2726
      %v2731 = vsel %vm640, %v2722, %v2724
      %v2732 = vsel %vm640, %v2720, %v2722
      %v2733 = vsel %vm640, %v2728, %v2720
      %2734 = vrot.lane.b32.xlu0 %v2669, 127
      %v2735 = vpop.permute.xlu0 %2734
      %2736 = vrot.lane.b32.xlu0 %v2670, 127
      %v2737 = vpop.permute.xlu0 %2736
      %2738 = vrot.lane.b32.xlu0 %v2671, 127
      %v2739 = vpop.permute.xlu0 %2738
      %2740 = vrot.lane.b32.xlu0 %v2672, 127
      %v2741 = vpop.permute.xlu0 %2740
      %2742 = vrot.lane.b32.xlu0 %v2673, 127
      %v2743 = vpop.permute.xlu0 %2742
      %v2744 = vsel %vm656, %v2741, %v2743
      %v2745 = vsel %vm656, %v2739, %v2741
      %v2746 = vsel %vm656, %v2737, %v2739
      %v2747 = vsel %vm656, %v2735, %v2737
      %v2748 = vsel %vm656, %v2743, %v2735
      %2749 = vrot.lane.b32.xlu0 %v2669, 97
      %v2750 = vpop.permute.xlu0 %2749
      %2751 = vrot.lane.b32.xlu0 %v2670, 97
      %v2752 = vpop.permute.xlu0 %2751
      %2753 = vrot.lane.b32.xlu0 %v2671, 97
      %v2754 = vpop.permute.xlu0 %2753
      %2755 = vrot.lane.b32.xlu0 %v2672, 97
      %v2756 = vpop.permute.xlu0 %2755
      %2757 = vrot.lane.b32.xlu0 %v2673, 97
      %v2758 = vpop.permute.xlu0 %2757
      %v2759 = vsel %vm672, %v2756, %v2758
      %v2760 = vsel %vm672, %v2754, %v2756
      %v2761 = vsel %vm672, %v2752, %v2754
      %v2762 = vsel %vm672, %v2750, %v2752
      %v2763 = vsel %vm672, %v2758, %v2750
      %2764 = vrot.lane.b32.xlu0 %v2669, 96
      %v2765 = vpop.permute.xlu0 %2764
      %2766 = vrot.lane.b32.xlu0 %v2670, 96
      %v2767 = vpop.permute.xlu0 %2766
      %2768 = vrot.lane.b32.xlu0 %v2671, 96
      %v2769 = vpop.permute.xlu0 %2768
      %2770 = vrot.lane.b32.xlu0 %v2672, 96
      %v2771 = vpop.permute.xlu0 %2770
      %2772 = vrot.lane.b32.xlu0 %v2673, 96
      %v2773 = vpop.permute.xlu0 %2772
      %v2774 = vsel %vm688, %v2771, %v2773
      %v2775 = vsel %vm688, %v2769, %v2771
      %v2776 = vsel %vm688, %v2767, %v2769
      %v2777 = vsel %vm688, %v2765, %v2767
      %v2778 = vsel %vm688, %v2773, %v2765
      %2779 = vrot.lane.b32.xlu0 %v2669, 95
      %v2780 = vpop.permute.xlu0 %2779
      %2781 = vrot.lane.b32.xlu0 %v2670, 95
      %v2782 = vpop.permute.xlu0 %2781
      %2783 = vrot.lane.b32.xlu0 %v2671, 95
      %v2784 = vpop.permute.xlu0 %2783
      %2785 = vrot.lane.b32.xlu0 %v2672, 95
      %v2786 = vpop.permute.xlu0 %2785
      %2787 = vrot.lane.b32.xlu0 %v2673, 95
      %v2788 = vpop.permute.xlu0 %2787
      %v2789 = vsel %vm704, %v2786, %v2788
      %v2790 = vsel %vm704, %v2784, %v2786
      %v2791 = vsel %vm704, %v2782, %v2784
      %v2792 = vsel %vm704, %v2780, %v2782
      %v2793 = vsel %vm704, %v2788, %v2780
      %v2794 = vld [vmem:[%s14] sm:$0xff]
      %v2796 = vsel %vm711, %v2794, 0
      %2798 = vmatprep.subr.mxu0 %v2687
      %2799 = vmatpush1.msra.mxu0 %v2688
      %2800 = vmatprep.subr.mxu0 %v2702
      %2801 = vmatpush1.msra.mxu0 %v2703
      %2802 = vmatprep.subr.mxu0 %v2717
      %2803 = vmatpush1.msra.mxu0 %v2718
      %2804 = vmatprep.subr.mxu0 %v2732
      %2805 = vmatpush1.msra.mxu0 %v2733
      %2806 = vmatprep.subr.mxu0 %v2670
      %2807 = vmatpush1.msra.mxu0 %v2669
      %2808 = vmatprep.subr.mxu0 %v2746
      %2809 = vmatpush1.msra.mxu0 %v2747
      %2810 = vmatprep.subr.mxu0 %v2761
      %2811 = vmatpush1.msra.mxu0 %v2762
      %2812 = vmatprep.subr.mxu0 %v2776
      %2813 = vmatpush1.msra.mxu0 %v2777
      %2814 = vmatprep.subr.mxu0 %v2791
      %2815 = vmatpush1.msra.mxu0 %v2792
      %2816 = vmatprep.subr.mxu0 0.0
      %2817 = vmatpush1.msra.mxu0 0.0
      %2818 = vmatprep.subr.mxu0 0.0
      %2819 = vmatpush1.msra.mxu0 0.0
      %2820 = vmatprep.subr.mxu0 0.0
      %2821 = vmatpush1.msra.mxu0 0.0
      %2822 = vmatprep.subr.mxu0 0.0
      %2823 = vmatpush1.msra.mxu0 0.0
      %2824 = vmatprep.subr.mxu0 0.0
      %2825 = vmatpush1.msra.mxu0 0.0
      %2826 = vmatprep.subr.mxu0 0.0
      %2827 = vmatpush1.msra.mxu0 0.0
      %2828 = vmatprep.subr.mxu0 0.0
      %2829 = vmatpush1.msra.mxu0 0.0
      %2830 = vmatprep.subr.mxu0 0.0
      %2831 = vmatpush1.msra.mxu0 0.0
      %2832 = vmatprep.subr.mxu0 0.0
      %2833 = vmatpush1.msra.mxu0 0.0
      %2834 = vmatprep.subr.mxu0 0.0
      %2835 = vmatpush1.msra.mxu0 0.0
      %2836 = vmatprep.subr.mxu0 0.0
      %2837 = vmatpush1.msra.mxu0 0.0
      %2838 = vmatprep.subr.mxu0 0.0
      %2839 = vmatpush1.msra.mxu0 0.0
      %2840 = vmatprep.subr.mxu0 0.0
      %2841 = vmatpush1.msra.mxu0 0.0
      %2842 = vmatprep.subr.mxu0 0.0
      %2843 = vmatpush1.msra.mxu0 0.0
      %2844 = vmatprep.subr.mxu0 0.0
      %2845 = vmatpush1.msra.mxu0 0.0
      %2846 = vmatprep.subr.mxu0 0.0
      %2847 = vmatpush1.msra.mxu0 0.0
      %2848 = vmatprep.subr.mxu0 0.0
      %2849 = vmatpush1.msra.mxu0 0.0
      %2850 = vmatprep.subr.mxu0 0.0
      %2851 = vmatpush1.msra.mxu0 0.0
      %2852 = vmatprep.subr.mxu0 0.0
      %2853 = vmatpush1.msra.mxu0 0.0
      %2854 = vmatprep.subr.mxu0 0.0
      %2855 = vmatpush1.msra.mxu0 0.0
      %2856 = vmatprep.subr.mxu0 0.0
      %2857 = vmatpush1.msra.mxu0 0.0
      %2858 = vmatprep.subr.mxu0 0.0
      %2859 = vmatpush1.msra.mxu0 0.0
      %2860 = vmatprep.subr.mxu0 0.0
      %2861 = vmatpush1.msra.mxu0 0.0
      %2862 = vmatprep.mubr.f32.mxu0 0.0
      %2863 = vmatmul.mubr.f32.gmra.mrb[0].mxu0 %v2796
      %v2864 = vpop.f32.mrb[0].mxu0
      %v2865 = vadd.f32 0.0, %v2864
      %v2866 = vpop.f32.mrb[0].mxu0
      %v2867 = vadd.f32 0.0, %v2866
      %2868 = vdwg.mxu0
      %2869 = vmatprep.subr.mxu0 %v2685
      %2870 = vmatpush1.msra.mxu0 %v2686
      %2871 = vmatprep.subr.mxu0 %v2700
      %2872 = vmatpush1.msra.mxu0 %v2701
      %2873 = vmatprep.subr.mxu0 %v2715
      %2874 = vmatpush1.msra.mxu0 %v2716
      %2875 = vmatprep.subr.mxu0 %v2730
      %2876 = vmatpush1.msra.mxu0 %v2731
      %2877 = vmatprep.subr.mxu0 %v2672
      %2878 = vmatpush1.msra.mxu0 %v2671
      %2879 = vmatprep.subr.mxu0 %v2744
      %2880 = vmatpush1.msra.mxu0 %v2745
      %2881 = vmatprep.subr.mxu0 %v2759
      %2882 = vmatpush1.msra.mxu0 %v2760
      %2883 = vmatprep.subr.mxu0 %v2774
      %2884 = vmatpush1.msra.mxu0 %v2775
      %2885 = vmatprep.subr.mxu0 %v2789
      %2886 = vmatpush1.msra.mxu0 %v2790
      %2887 = vmatprep.subr.mxu0 0.0
      %2888 = vmatpush1.msra.mxu0 0.0
      %2889 = vmatprep.subr.mxu0 0.0
      %2890 = vmatpush1.msra.mxu0 0.0
      %2891 = vmatprep.subr.mxu0 0.0
      %2892 = vmatpush1.msra.mxu0 0.0
      %2893 = vmatprep.subr.mxu0 0.0
      %2894 = vmatpush1.msra.mxu0 0.0
      %2895 = vmatprep.subr.mxu0 0.0
      %2896 = vmatpush1.msra.mxu0 0.0
      %2897 = vmatprep.subr.mxu0 0.0
      %2898 = vmatpush1.msra.mxu0 0.0
      %2899 = vmatprep.subr.mxu0 0.0
      %2900 = vmatpush1.msra.mxu0 0.0
      %2901 = vmatprep.subr.mxu0 0.0
      %2902 = vmatpush1.msra.mxu0 0.0
      %2903 = vmatprep.subr.mxu0 0.0
      %2904 = vmatpush1.msra.mxu0 0.0
      %2905 = vmatprep.subr.mxu0 0.0
      %2906 = vmatpush1.msra.mxu0 0.0
      %2907 = vmatprep.subr.mxu0 0.0
      %2908 = vmatpush1.msra.mxu0 0.0
      %2909 = vmatprep.subr.mxu0 0.0
      %2910 = vmatpush1.msra.mxu0 0.0
      %2911 = vmatprep.subr.mxu0 0.0
      %2912 = vmatpush1.msra.mxu0 0.0
      %2913 = vmatprep.subr.mxu0 0.0
      %2914 = vmatpush1.msra.mxu0 0.0
      %2915 = vmatprep.subr.mxu0 0.0
      %2916 = vmatpush1.msra.mxu0 0.0
      %2917 = vmatprep.subr.mxu0 0.0
      %2918 = vmatpush1.msra.mxu0 0.0
      %2919 = vmatprep.subr.mxu0 0.0
      %2920 = vmatpush1.msra.mxu0 0.0
      %2921 = vmatprep.subr.mxu0 0.0
      %2922 = vmatpush1.msra.mxu0 0.0
      %2923 = vmatprep.subr.mxu0 0.0
      %2924 = vmatpush1.msra.mxu0 0.0
      %2925 = vmatprep.subr.mxu0 0.0
      %2926 = vmatpush1.msra.mxu0 0.0
      %2927 = vmatprep.subr.mxu0 0.0
      %2928 = vmatpush1.msra.mxu0 0.0
      %2929 = vmatprep.subr.mxu0 0.0
      %2930 = vmatpush1.msra.mxu0 0.0
      %2931 = vmatprep.subr.mxu0 0.0
      %2932 = vmatpush1.msra.mxu0 0.0
      %2933 = vmatprep.mubr.f32.mxu0 0.0
      %2934 = vmatmul.mubr.f32.gmra.mrb[0].mxu0 %v2796
      %v2935 = vpop.f32.mrb[0].mxu0
      %v2936 = vadd.f32 0.0, %v2935
      %v2937 = vpop.f32.mrb[0].mxu0
      %v2938 = vadd.f32 0.0, %v2937
      %2939 = vdwg.mxu0
      %2940 = vmatprep.subr.mxu0 0.0
      %2941 = vmatpush1.msra.mxu0 %v2684
      %2942 = vmatprep.subr.mxu0 0.0
      %2943 = vmatpush1.msra.mxu0 %v2699
      %2944 = vmatprep.subr.mxu0 0.0
      %2945 = vmatpush1.msra.mxu0 %v2714
      %2946 = vmatprep.subr.mxu0 0.0
      %2947 = vmatpush1.msra.mxu0 %v2729
      %2948 = vmatprep.subr.mxu0 0.0
      %2949 = vmatpush1.msra.mxu0 %v2673
      %2950 = vmatprep.subr.mxu0 0.0
      %2951 = vmatpush1.msra.mxu0 %v2748
      %2952 = vmatprep.subr.mxu0 0.0
      %2953 = vmatpush1.msra.mxu0 %v2763
      %2954 = vmatprep.subr.mxu0 0.0
      %2955 = vmatpush1.msra.mxu0 %v2778
      %2956 = vmatprep.subr.mxu0 0.0
      %2957 = vmatpush1.msra.mxu0 %v2793
      %2958 = vmatprep.subr.mxu0 0.0
      %2959 = vmatpush1.msra.mxu0 0.0
      %2960 = vmatprep.subr.mxu0 0.0
      %2961 = vmatpush1.msra.mxu0 0.0
      %2962 = vmatprep.subr.mxu0 0.0
      %2963 = vmatpush1.msra.mxu0 0.0
      %2964 = vmatprep.subr.mxu0 0.0
      %2965 = vmatpush1.msra.mxu0 0.0
      %2966 = vmatprep.subr.mxu0 0.0
      %2967 = vmatpush1.msra.mxu0 0.0
      %2968 = vmatprep.subr.mxu0 0.0
      %2969 = vmatpush1.msra.mxu0 0.0
      %2970 = vmatprep.subr.mxu0 0.0
      %2971 = vmatpush1.msra.mxu0 0.0
      %2972 = vmatprep.subr.mxu0 0.0
      %2973 = vmatpush1.msra.mxu0 0.0
      %2974 = vmatprep.subr.mxu0 0.0
      %2975 = vmatpush1.msra.mxu0 0.0
      %2976 = vmatprep.subr.mxu0 0.0
      %2977 = vmatpush1.msra.mxu0 0.0
      %2978 = vmatprep.subr.mxu0 0.0
      %2979 = vmatpush1.msra.mxu0 0.0
      %2980 = vmatprep.subr.mxu0 0.0
      %2981 = vmatpush1.msra.mxu0 0.0
      %2982 = vmatprep.subr.mxu0 0.0
      %2983 = vmatpush1.msra.mxu0 0.0
      %2984 = vmatprep.subr.mxu0 0.0
      %2985 = vmatpush1.msra.mxu0 0.0
      %2986 = vmatprep.subr.mxu0 0.0
      %2987 = vmatpush1.msra.mxu0 0.0
      %2988 = vmatprep.subr.mxu0 0.0
      %2989 = vmatpush1.msra.mxu0 0.0
      %2990 = vmatprep.subr.mxu0 0.0
      %2991 = vmatpush1.msra.mxu0 0.0
      %2992 = vmatprep.subr.mxu0 0.0
      %2993 = vmatpush1.msra.mxu0 0.0
      %2994 = vmatprep.subr.mxu0 0.0
      %2995 = vmatpush1.msra.mxu0 0.0
      %2996 = vmatprep.subr.mxu0 0.0
      %2997 = vmatpush1.msra.mxu0 0.0
      %2998 = vmatprep.subr.mxu0 0.0
      %2999 = vmatpush1.msra.mxu0 0.0
      %3000 = vmatprep.subr.mxu0 0.0
      %3001 = vmatpush1.msra.mxu0 0.0
      %3002 = vmatprep.subr.mxu0 0.0
      %3003 = vmatpush1.msra.mxu0 0.0
      %3004 = vmatprep.mubr.f32.mxu0 0.0
      %3005 = vmatmul.mubr.f32.gmra.mrb[0].mxu0 %v2796
      %v3006 = vpop.f32.mrb[0].mxu0
      %v3007 = vadd.f32 0.0, %v3006
      %v3008 = vpop.f32.mrb[0].mxu0
      %3009 = vdwg.mxu0
      %v3010 = vmul.f32 %v2865, %v931
      %v3011 = vmul.f32 %v2867, %v935
      %v3012 = vmul.f32 %v2936, %v939
      %v3013 = vmul.f32 %v2938, %v943
      %v3014 = vmul.f32 %v3007, %v947
      %v3015 = vadd.f32 %v3010, %v3011
      %v3016 = vadd.f32 %v3015, %v3012
      %v3017 = vadd.f32 %v3016, %v3013
      %v3018 = vadd.f32 %v3017, %v3014
      %3019 = vadd.xlane.f32.xlu0 %v3018
      %v3020 = vpop.xlane.xlu0 %3019
      %v3021 = vmul.f32 %v3020, 0.00390625
      %v3022 = vsub.f32 %v3010, %v3021
      %v3023 = vsub.f32 %v3011, %v3021
      %v3024 = vsub.f32 %v3012, %v3021
      %v3025 = vsub.f32 %v3013, %v3021
      %v3026 = vsub.f32 %v3014, %v3021
      %v3027 = vmul.f32 %v3022, %v931
      %v3028 = vmul.f32 %v3023, %v935
      %v3029 = vmul.f32 %v3024, %v939
      %v3030 = vmul.f32 %v3025, %v943
      %v3031 = vmul.f32 %v3026, %v947
      %v3032 = vmul.f32 %v3027, %v3027
      %v3033 = vmul.f32 %v3028, %v3028
      %v3034 = vmul.f32 %v3029, %v3029
      %v3035 = vmul.f32 %v3030, %v3030
      %v3036 = vmul.f32 %v3031, %v3031
      %v3037 = vadd.f32 %v3032, %v3033
      %v3038 = vadd.f32 %v3037, %v3034
      %v3039 = vadd.f32 %v3038, %v3035
      %v3040 = vadd.f32 %v3039, %v3036
      %3041 = vadd.xlane.f32.xlu0 %v3040
      %v3042 = vpop.xlane.xlu0 %3041
      %v3043 = vmul.f32 %v3042, 0.00390625
      %v3044 = vadd.f32 %v3043, 1e-05
      %v3045 = vrsqrt.pop %v3044
      %v3046 = vmul.f32 %v3027, %v3045
      %v3047 = vmul.f32 %v3028, %v3045
      %v3048 = vmul.f32 %v3029, %v3045
      %v3049 = vmul.f32 %v3030, %v3045
      %v3050 = vmul.f32 %v3031, %v3045
      %vm3051 = vcmp.gt.f32.partialorder %v3046, 0.0
      %vm3052 = vcmp.gt.f32.partialorder %v3047, 0.0
      %vm3053 = vcmp.gt.f32.partialorder %v3048, 0.0
      %vm3054 = vcmp.gt.f32.partialorder %v3049, 0.0
      %vm3055 = vcmp.gt.f32.partialorder %v3050, 0.0
      %v3056 = vmul.f32 %v3046, 0.4
      %v3057 = vmul.f32 %v3047, 0.4
      %v3058 = vmul.f32 %v3048, 0.4
      %v3059 = vmul.f32 %v3049, 0.4
      %v3060 = vmul.f32 %v3050, 0.4
      %v3061 = vsel %vm3051, %v3046, %v3056
      %v3062 = vsel %vm3052, %v3047, %v3057
      %v3063 = vsel %vm3053, %v3048, %v3058
      %v3064 = vsel %vm3054, %v3049, %v3059
      %v3065 = vsel %vm3055, %v3050, %v3060
      %3066 = vrot.lane.b32.xlu0 %v3061, 33
      %v3067 = vpop.permute.xlu0 %3066
      %3068 = vrot.lane.b32.xlu0 %v3062, 33
      %v3069 = vpop.permute.xlu0 %3068
      %3070 = vrot.lane.b32.xlu0 %v3063, 33
      %v3071 = vpop.permute.xlu0 %3070
      %3072 = vrot.lane.b32.xlu0 %v3064, 33
      %v3073 = vpop.permute.xlu0 %3072
      %3074 = vrot.lane.b32.xlu0 %v3065, 33
      %v3075 = vpop.permute.xlu0 %3074
      %v3076 = vsel %vm592, %v3073, %v3075
      %v3077 = vsel %vm592, %v3071, %v3073
      %v3078 = vsel %vm592, %v3069, %v3071
      %v3079 = vsel %vm592, %v3067, %v3069
      %v3080 = vsel %vm592, %v3075, %v3067
      %3081 = vrot.lane.b32.xlu0 %v3061, 32
      %v3082 = vpop.permute.xlu0 %3081
      %3083 = vrot.lane.b32.xlu0 %v3062, 32
      %v3084 = vpop.permute.xlu0 %3083
      %3085 = vrot.lane.b32.xlu0 %v3063, 32
      %v3086 = vpop.permute.xlu0 %3085
      %3087 = vrot.lane.b32.xlu0 %v3064, 32
      %v3088 = vpop.permute.xlu0 %3087
      %3089 = vrot.lane.b32.xlu0 %v3065, 32
      %v3090 = vpop.permute.xlu0 %3089
      %v3091 = vsel %vm608, %v3088, %v3090
      %v3092 = vsel %vm608, %v3086, %v3088
      %v3093 = vsel %vm608, %v3084, %v3086
      %v3094 = vsel %vm608, %v3082, %v3084
      %v3095 = vsel %vm608, %v3090, %v3082
      %3096 = vrot.lane.b32.xlu0 %v3061, 31
      %v3097 = vpop.permute.xlu0 %3096
      %3098 = vrot.lane.b32.xlu0 %v3062, 31
      %v3099 = vpop.permute.xlu0 %3098
      %3100 = vrot.lane.b32.xlu0 %v3063, 31
      %v3101 = vpop.permute.xlu0 %3100
      %3102 = vrot.lane.b32.xlu0 %v3064, 31
      %v3103 = vpop.permute.xlu0 %3102
      %3104 = vrot.lane.b32.xlu0 %v3065, 31
      %v3105 = vpop.permute.xlu0 %3104
      %v3106 = vsel %vm624, %v3103, %v3105
      %v3107 = vsel %vm624, %v3101, %v3103
      %v3108 = vsel %vm624, %v3099, %v3101
      %v3109 = vsel %vm624, %v3097, %v3099
      %v3110 = vsel %vm624, %v3105, %v3097
      %3111 = vrot.lane.b32.xlu0 %v3061, 1
      %v3112 = vpop.permute.xlu0 %3111
      %3113 = vrot.lane.b32.xlu0 %v3062, 1
      %v3114 = vpop.permute.xlu0 %3113
      %3115 = vrot.lane.b32.xlu0 %v3063, 1
      %v3116 = vpop.permute.xlu0 %3115
      %3117 = vrot.lane.b32.xlu0 %v3064, 1
      %v3118 = vpop.permute.xlu0 %3117
      %3119 = vrot.lane.b32.xlu0 %v3065, 1
      %v3120 = vpop.permute.xlu0 %3119
      %v3121 = vsel %vm640, %v3118, %v3120
      %v3122 = vsel %vm640, %v3116, %v3118
      %v3123 = vsel %vm640, %v3114, %v3116
      %v3124 = vsel %vm640, %v3112, %v3114
      %v3125 = vsel %vm640, %v3120, %v3112
      %3126 = vrot.lane.b32.xlu0 %v3061, 127
      %v3127 = vpop.permute.xlu0 %3126
      %3128 = vrot.lane.b32.xlu0 %v3062, 127
      %v3129 = vpop.permute.xlu0 %3128
      %3130 = vrot.lane.b32.xlu0 %v3063, 127
      %v3131 = vpop.permute.xlu0 %3130
      %3132 = vrot.lane.b32.xlu0 %v3064, 127
      %v3133 = vpop.permute.xlu0 %3132
      %3134 = vrot.lane.b32.xlu0 %v3065, 127
      %v3135 = vpop.permute.xlu0 %3134
      %v3136 = vsel %vm656, %v3133, %v3135
      %v3137 = vsel %vm656, %v3131, %v3133
      %v3138 = vsel %vm656, %v3129, %v3131
      %v3139 = vsel %vm656, %v3127, %v3129
      %v3140 = vsel %vm656, %v3135, %v3127
      %3141 = vrot.lane.b32.xlu0 %v3061, 97
      %v3142 = vpop.permute.xlu0 %3141
      %3143 = vrot.lane.b32.xlu0 %v3062, 97
      %v3144 = vpop.permute.xlu0 %3143
      %3145 = vrot.lane.b32.xlu0 %v3063, 97
      %v3146 = vpop.permute.xlu0 %3145
      %3147 = vrot.lane.b32.xlu0 %v3064, 97
      %v3148 = vpop.permute.xlu0 %3147
      %3149 = vrot.lane.b32.xlu0 %v3065, 97
      %v3150 = vpop.permute.xlu0 %3149
      %v3151 = vsel %vm672, %v3148, %v3150
      %v3152 = vsel %vm672, %v3146, %v3148
      %v3153 = vsel %vm672, %v3144, %v3146
      %v3154 = vsel %vm672, %v3142, %v3144
      %v3155 = vsel %vm672, %v3150, %v3142
      %3156 = vrot.lane.b32.xlu0 %v3061, 96
      %v3157 = vpop.permute.xlu0 %3156
      %3158 = vrot.lane.b32.xlu0 %v3062, 96
      %v3159 = vpop.permute.xlu0 %3158
      %3160 = vrot.lane.b32.xlu0 %v3063, 96
      %v3161 = vpop.permute.xlu0 %3160
      %3162 = vrot.lane.b32.xlu0 %v3064, 96
      %v3163 = vpop.permute.xlu0 %3162
      %3164 = vrot.lane.b32.xlu0 %v3065, 96
      %v3165 = vpop.permute.xlu0 %3164
      %v3166 = vsel %vm688, %v3163, %v3165
      %v3167 = vsel %vm688, %v3161, %v3163
      %v3168 = vsel %vm688, %v3159, %v3161
      %v3169 = vsel %vm688, %v3157, %v3159
      %v3170 = vsel %vm688, %v3165, %v3157
      %3171 = vrot.lane.b32.xlu0 %v3061, 95
      %v3172 = vpop.permute.xlu0 %3171
      %3173 = vrot.lane.b32.xlu0 %v3062, 95
      %v3174 = vpop.permute.xlu0 %3173
      %3175 = vrot.lane.b32.xlu0 %v3063, 95
      %v3176 = vpop.permute.xlu0 %3175
      %3177 = vrot.lane.b32.xlu0 %v3064, 95
      %v3178 = vpop.permute.xlu0 %3177
      %3179 = vrot.lane.b32.xlu0 %v3065, 95
      %v3180 = vpop.permute.xlu0 %3179
      %v3181 = vsel %vm704, %v3178, %v3180
      %v3182 = vsel %vm704, %v3176, %v3178
      %v3183 = vsel %vm704, %v3174, %v3176
      %v3184 = vsel %vm704, %v3172, %v3174
      %v3185 = vsel %vm704, %v3180, %v3172
      %v3186 = vld [vmem:[%s16] sm:$0xff]
      %v3187 = vld [vmem:[%s17] sm:$0xff]
      %3189 = vset.pattern.permute.xlu0 0
      %3190 = vperm.xlu0 %3189, %v3187
      %v3191 = vpop.permute.xlu0 %3190
      %v3194 = vsel %vm711, %v3186, 0
      %3196 = vmatprep.subr.mxu0 %v3079
      %3197 = vmatpush1.msra.mxu0 %v3080
      %3198 = vmatprep.subr.mxu0 %v3094
      %3199 = vmatpush1.msra.mxu0 %v3095
      %3200 = vmatprep.subr.mxu0 %v3109
      %3201 = vmatpush1.msra.mxu0 %v3110
      %3202 = vmatprep.subr.mxu0 %v3124
      %3203 = vmatpush1.msra.mxu0 %v3125
      %3204 = vmatprep.subr.mxu0 %v3062
      %3205 = vmatpush1.msra.mxu0 %v3061
      %3206 = vmatprep.subr.mxu0 %v3138
      %3207 = vmatpush1.msra.mxu0 %v3139
      %3208 = vmatprep.subr.mxu0 %v3153
      %3209 = vmatpush1.msra.mxu0 %v3154
      %3210 = vmatprep.subr.mxu0 %v3168
      %3211 = vmatpush1.msra.mxu0 %v3169
      %3212 = vmatprep.subr.mxu0 %v3183
      %3213 = vmatpush1.msra.mxu0 %v3184
      %3214 = vmatprep.subr.mxu0 0.0
      %3215 = vmatpush1.msra.mxu0 0.0
      %3216 = vmatprep.subr.mxu0 0.0
      %3217 = vmatpush1.msra.mxu0 0.0
      %3218 = vmatprep.subr.mxu0 0.0
      %3219 = vmatpush1.msra.mxu0 0.0
      %3220 = vmatprep.subr.mxu0 0.0
      %3221 = vmatpush1.msra.mxu0 0.0
      %3222 = vmatprep.subr.mxu0 0.0
      %3223 = vmatpush1.msra.mxu0 0.0
      %3224 = vmatprep.subr.mxu0 0.0
      %3225 = vmatpush1.msra.mxu0 0.0
      %3226 = vmatprep.subr.mxu0 0.0
      %3227 = vmatpush1.msra.mxu0 0.0
      %3228 = vmatprep.subr.mxu0 0.0
      %3229 = vmatpush1.msra.mxu0 0.0
      %3230 = vmatprep.subr.mxu0 0.0
      %3231 = vmatpush1.msra.mxu0 0.0
      %3232 = vmatprep.subr.mxu0 0.0
      %3233 = vmatpush1.msra.mxu0 0.0
      %3234 = vmatprep.subr.mxu0 0.0
      %3235 = vmatpush1.msra.mxu0 0.0
      %3236 = vmatprep.subr.mxu0 0.0
      %3237 = vmatpush1.msra.mxu0 0.0
      %3238 = vmatprep.subr.mxu0 0.0
      %3239 = vmatpush1.msra.mxu0 0.0
      %3240 = vmatprep.subr.mxu0 0.0
      %3241 = vmatpush1.msra.mxu0 0.0
      %3242 = vmatprep.subr.mxu0 0.0
      %3243 = vmatpush1.msra.mxu0 0.0
      %3244 = vmatprep.subr.mxu0 0.0
      %3245 = vmatpush1.msra.mxu0 0.0
      %3246 = vmatprep.subr.mxu0 0.0
      %3247 = vmatpush1.msra.mxu0 0.0
      %3248 = vmatprep.subr.mxu0 0.0
      %3249 = vmatpush1.msra.mxu0 0.0
      %3250 = vmatprep.subr.mxu0 0.0
      %3251 = vmatpush1.msra.mxu0 0.0
      %3252 = vmatprep.subr.mxu0 0.0
      %3253 = vmatpush1.msra.mxu0 0.0
      %3254 = vmatprep.subr.mxu0 0.0
      %3255 = vmatpush1.msra.mxu0 0.0
      %3256 = vmatprep.subr.mxu0 0.0
      %3257 = vmatpush1.msra.mxu0 0.0
      %3258 = vmatprep.subr.mxu0 0.0
      %3259 = vmatpush1.msra.mxu0 0.0
      %3260 = vmatprep.mubr.f32.mxu0 0.0
      %3261 = vmatmul.mubr.f32.gmra.mrb[0].mxu0 %v3194
      %v3262 = vpop.f32.mrb[0].mxu0
      %v3263 = vadd.f32 %v3191, %v3262
      %v3264 = vpop.f32.mrb[0].mxu0
      %v3265 = vadd.f32 %v3191, %v3264
      %3266 = vdwg.mxu0
      %3267 = vmatprep.subr.mxu0 %v3077
      %3268 = vmatpush1.msra.mxu0 %v3078
      %3269 = vmatprep.subr.mxu0 %v3092
      %3270 = vmatpush1.msra.mxu0 %v3093
      %3271 = vmatprep.subr.mxu0 %v3107
      %3272 = vmatpush1.msra.mxu0 %v3108
      %3273 = vmatprep.subr.mxu0 %v3122
      %3274 = vmatpush1.msra.mxu0 %v3123
      %3275 = vmatprep.subr.mxu0 %v3064
      %3276 = vmatpush1.msra.mxu0 %v3063
      %3277 = vmatprep.subr.mxu0 %v3136
      %3278 = vmatpush1.msra.mxu0 %v3137
      %3279 = vmatprep.subr.mxu0 %v3151
      %3280 = vmatpush1.msra.mxu0 %v3152
      %3281 = vmatprep.subr.mxu0 %v3166
      %3282 = vmatpush1.msra.mxu0 %v3167
      %3283 = vmatprep.subr.mxu0 %v3181
      %3284 = vmatpush1.msra.mxu0 %v3182
      %3285 = vmatprep.subr.mxu0 0.0
      %3286 = vmatpush1.msra.mxu0 0.0
      %3287 = vmatprep.subr.mxu0 0.0
      %3288 = vmatpush1.msra.mxu0 0.0
      %3289 = vmatprep.subr.mxu0 0.0
      %3290 = vmatpush1.msra.mxu0 0.0
      %3291 = vmatprep.subr.mxu0 0.0
      %3292 = vmatpush1.msra.mxu0 0.0
      %3293 = vmatprep.subr.mxu0 0.0
      %3294 = vmatpush1.msra.mxu0 0.0
      %3295 = vmatprep.subr.mxu0 0.0
      %3296 = vmatpush1.msra.mxu0 0.0
      %3297 = vmatprep.subr.mxu0 0.0
      %3298 = vmatpush1.msra.mxu0 0.0
      %3299 = vmatprep.subr.mxu0 0.0
      %3300 = vmatpush1.msra.mxu0 0.0
      %3301 = vmatprep.subr.mxu0 0.0
      %3302 = vmatpush1.msra.mxu0 0.0
      %3303 = vmatprep.subr.mxu0 0.0
      %3304 = vmatpush1.msra.mxu0 0.0
      %3305 = vmatprep.subr.mxu0 0.0
      %3306 = vmatpush1.msra.mxu0 0.0
      %3307 = vmatprep.subr.mxu0 0.0
      %3308 = vmatpush1.msra.mxu0 0.0
      %3309 = vmatprep.subr.mxu0 0.0
      %3310 = vmatpush1.msra.mxu0 0.0
      %3311 = vmatprep.subr.mxu0 0.0
      %3312 = vmatpush1.msra.mxu0 0.0
      %3313 = vmatprep.subr.mxu0 0.0
      %3314 = vmatpush1.msra.mxu0 0.0
      %3315 = vmatprep.subr.mxu0 0.0
      %3316 = vmatpush1.msra.mxu0 0.0
      %3317 = vmatprep.subr.mxu0 0.0
      %3318 = vmatpush1.msra.mxu0 0.0
      %3319 = vmatprep.subr.mxu0 0.0
      %3320 = vmatpush1.msra.mxu0 0.0
      %3321 = vmatprep.subr.mxu0 0.0
      %3322 = vmatpush1.msra.mxu0 0.0
      %3323 = vmatprep.subr.mxu0 0.0
      %3324 = vmatpush1.msra.mxu0 0.0
      %3325 = vmatprep.subr.mxu0 0.0
      %3326 = vmatpush1.msra.mxu0 0.0
      %3327 = vmatprep.subr.mxu0 0.0
      %3328 = vmatpush1.msra.mxu0 0.0
      %3329 = vmatprep.subr.mxu0 0.0
      %3330 = vmatpush1.msra.mxu0 0.0
      %3331 = vmatprep.mubr.f32.mxu0 0.0
      %3332 = vmatmul.mubr.f32.gmra.mrb[0].mxu0 %v3194
      %v3333 = vpop.f32.mrb[0].mxu0
      %v3334 = vadd.f32 %v3191, %v3333
      %v3335 = vpop.f32.mrb[0].mxu0
      %v3336 = vadd.f32 %v3191, %v3335
      %3337 = vdwg.mxu0
      %3338 = vmatprep.subr.mxu0 0.0
      %3339 = vmatpush1.msra.mxu0 %v3076
      %3340 = vmatprep.subr.mxu0 0.0
      %3341 = vmatpush1.msra.mxu0 %v3091
      %3342 = vmatprep.subr.mxu0 0.0
      %3343 = vmatpush1.msra.mxu0 %v3106
      %3344 = vmatprep.subr.mxu0 0.0
      %3345 = vmatpush1.msra.mxu0 %v3121
      %3346 = vmatprep.subr.mxu0 0.0
      %3347 = vmatpush1.msra.mxu0 %v3065
      %3348 = vmatprep.subr.mxu0 0.0
      %3349 = vmatpush1.msra.mxu0 %v3140
      %3350 = vmatprep.subr.mxu0 0.0
      %3351 = vmatpush1.msra.mxu0 %v3155
      %3352 = vmatprep.subr.mxu0 0.0
      %3353 = vmatpush1.msra.mxu0 %v3170
      %3354 = vmatprep.subr.mxu0 0.0
      %3355 = vmatpush1.msra.mxu0 %v3185
      %3356 = vmatprep.subr.mxu0 0.0
      %3357 = vmatpush1.msra.mxu0 0.0
      %3358 = vmatprep.subr.mxu0 0.0
      %3359 = vmatpush1.msra.mxu0 0.0
      %3360 = vmatprep.subr.mxu0 0.0
      %3361 = vmatpush1.msra.mxu0 0.0
      %3362 = vmatprep.subr.mxu0 0.0
      %3363 = vmatpush1.msra.mxu0 0.0
      %3364 = vmatprep.subr.mxu0 0.0
      %3365 = vmatpush1.msra.mxu0 0.0
      %3366 = vmatprep.subr.mxu0 0.0
      %3367 = vmatpush1.msra.mxu0 0.0
      %3368 = vmatprep.subr.mxu0 0.0
      %3369 = vmatpush1.msra.mxu0 0.0
      %3370 = vmatprep.subr.mxu0 0.0
      %3371 = vmatpush1.msra.mxu0 0.0
      %3372 = vmatprep.subr.mxu0 0.0
      %3373 = vmatpush1.msra.mxu0 0.0
      %3374 = vmatprep.subr.mxu0 0.0
      %3375 = vmatpush1.msra.mxu0 0.0
      %3376 = vmatprep.subr.mxu0 0.0
      %3377 = vmatpush1.msra.mxu0 0.0
      %3378 = vmatprep.subr.mxu0 0.0
      %3379 = vmatpush1.msra.mxu0 0.0
      %3380 = vmatprep.subr.mxu0 0.0
      %3381 = vmatpush1.msra.mxu0 0.0
      %3382 = vmatprep.subr.mxu0 0.0
      %3383 = vmatpush1.msra.mxu0 0.0
      %3384 = vmatprep.subr.mxu0 0.0
      %3385 = vmatpush1.msra.mxu0 0.0
      %3386 = vmatprep.subr.mxu0 0.0
      %3387 = vmatpush1.msra.mxu0 0.0
      %3388 = vmatprep.subr.mxu0 0.0
      %3389 = vmatpush1.msra.mxu0 0.0
      %3390 = vmatprep.subr.mxu0 0.0
      %3391 = vmatpush1.msra.mxu0 0.0
      %3392 = vmatprep.subr.mxu0 0.0
      %3393 = vmatpush1.msra.mxu0 0.0
      %3394 = vmatprep.subr.mxu0 0.0
      %3395 = vmatpush1.msra.mxu0 0.0
      %3396 = vmatprep.subr.mxu0 0.0
      %3397 = vmatpush1.msra.mxu0 0.0
      %3398 = vmatprep.subr.mxu0 0.0
      %3399 = vmatpush1.msra.mxu0 0.0
      %3400 = vmatprep.subr.mxu0 0.0
      %3401 = vmatpush1.msra.mxu0 0.0
      %3402 = vmatprep.mubr.f32.mxu0 0.0
      %3403 = vmatmul.mubr.f32.gmra.mrb[0].mxu0 %v3194
      %v3404 = vpop.f32.mrb[0].mxu0
      %v3405 = vadd.f32 %v3191, %v3404
      %v3406 = vpop.f32.mrb[0].mxu0
      %3407 = vdwg.mxu0
      %v3408 = vmul.f32 %v3263, %v931
      %v3409 = vmul.f32 %v3265, %v935
      %v3410 = vmul.f32 %v3334, %v939
      %v3411 = vmul.f32 %v3336, %v943
      %v3412 = vmul.f32 %v3405, %v947
      %v3418 = vcombine.low %v3408, %v3409
      %v3419 = vcombine.low %v3410, %v3411
      %v3421 = vunpack.c.l.s4 1966171168
      %v3422 = vunpack.c.0.s8 %v3421
      %v3423 = vlaneseq
      %v3424 = vshrl.u32 %v3423, 7
      %v3425 = vsub.s32 %v3422, %v3424
      %v3426 = vrot.slane %v3418, %v3425
      %v3428 = vunpack.c.l.s4 1966171168
      %v3429 = vunpack.c.0.s8 %v3428
      %v3430 = vlaneseq
      %v3431 = vshrl.u32 %v3430, 7
      %v3432 = vsub.s32 %v3429, %v3431
      %v3433 = vrot.slane %v3419, %v3432
      %v3435 = vunpack.c.l.s4 1966171168
      %v3436 = vunpack.c.0.s8 %v3435
      %v3437 = vlaneseq
      %v3438 = vshrl.u32 %v3437, 7
      %v3439 = vsub.s32 %v3436, %v3438
      %v3440 = vrot.slane %v3412, %v3439
      %v3441 = vcombine.low %v3426, %v3433
      %v3443 = vunpack.c.l.s4 1966171168
      %v3444 = vunpack.c.0.s8 %v3443
      %v3445 = vlaneseq
      %v3446 = vshrl.u32 %v3445, 7
      %v3447 = vsub.s32 %v3444, %v3446
      %v3448 = vrot.slane %v3441, %v3447
      %v3450 = vunpack.c.l.s4 1966171168
      %v3451 = vunpack.c.0.s8 %v3450
      %v3452 = vlaneseq
      %v3453 = vshrl.u32 %v3452, 7
      %v3454 = vsub.s32 %v3451, %v3453
      %v3455 = vrot.slane %v3440, %v3454
      %v3456 = vcombine.low %v3448, %v3455
      %v3458 = vlaneseq
      %vm3459 = vcmp.ge.s32.totalorder %v3458, 0
      %vm3460 = vcmp.lt.s32.totalorder %v3458, 640
      %vm3461 = vmand %vm3459, %vm3460
      %3462 = vst.msk [vmem:[%s573] sm:$0x1f] %vm3461, %v3456
      %p3463 = scmp.lt.s32.totalorder %s29, 1
      %s3464 = scalar_select %p3463, %s29, 1
      %s3465 = smul.addr %s3464, 5
      %s3466 = scalar_lea.vmem %s18, %s3465
      // Predicated region
      $region93: #{downnet_forward.1} parent=91 // pred_check
        %p3467 = pneg %p430
      $region94: #{downnet_forward.1} parent=91 // pred_check_branch
        %3469 = sbr.rel (%p3467) target = $region96
      $region95: #{downnet_forward.1} parent=91 // pred_region
        _
      $region96: #{downnet_forward.1} parent=91 // pred_fallthru
        _
    $region92: #{downnet_forward.1} parent=5 // pred_fallthru
      _
    %p3470 = scmp.le.s32.totalorder 2, %s24
    // Predicated region
    $region97: #{downnet_forward.1} parent=5 // pred_check
      %p3471 = pneg %p3470
    $region98: #{downnet_forward.1} parent=5 // pred_check_branch
      %3473 = sbr.rel (%p3471) target = $region100
    $region99: #{downnet_forward.1} parent=5 // pred_region
      %s3474 = ssub.s32 %s24, 2
      // Predicated region
      $region101: #{downnet_forward.1} parent=99 // pred_check
        %p3475 = pneg %p436
      $region102: #{downnet_forward.1} parent=99 // pred_check_branch
        %3477 = sbr.rel (%p3475) target = $region104
      $region103: #{downnet_forward.1} parent=99 // pred_region
        %p3478 = scmp.lt.s32.totalorder %s30, 1
        %s3479 = scalar_select %p3478, %s30, 1
        %s3480 = smul.addr %s3479, 5
        %s3481 = scalar_lea.vmem %s18, %s3480
      $region104: #{downnet_forward.1} parent=99 // pred_fallthru
        _
    $region100: #{downnet_forward.1} parent=5 // pred_fallthru
      _
  $region6: #{downnet_forward.1} parent=0 // loop_footer
    %s28 = sadd.s32 1, %s24
  $region7: #{downnet_forward.1} parent=0 // loop_footer_branch
    %23 = sbr.rel target = $region3
  $region8: #{downnet_forward.1} parent=0 // loop_exit
    _

</llo_original>
